<compile_context>
chip_gen: v6e
topology: v6e:2x2x1
jax: 0.10.0
libtpu: 0.0.40
codegen_flags: <defaults>
</compile_context>

<pallas_src>
import numpy as np
import jax
import jax.numpy as jnp
from jax import lax
from jax.experimental import pallas as pl
from jax.experimental.pallas import tpu as pltpu

# ---- problem sizes (small, consistent with module defaults) ------------------
N1 = 32                 # number of node_1 tokens per graph pair
N2 = 32                 # number of node_2 tokens per graph pair
NT = N1 + N2            # stacked token count per pair
MODEL_DIM = 256         # model_dim (module default)
LN_EPS = 1e-5           # nn.LayerNorm default eps


# ----------------------------- Pallas kernel ----------------------------------
def _crossgraph_kernel(n1_ref, n2_ref, wproj_ref, bproj_ref, wf_ref, bf_ref,
                       gamma_ref, beta_ref, out1_ref, out2_ref):
    C = MODEL_DIM
    G = n1_ref.shape[0]                                   # pairs in this grid step

    # In-VMEM stack of the two node sets per pair, then flatten rows so the
    # big matmuls run with M = G*NT (= 256) rows.
    x = jnp.concatenate([n1_ref[...], n2_ref[...]], axis=1)          # (G, NT, C) f32
    x2d = x.reshape(G * NT, C)

    # Fused linear_edge / linear_node1 projection: ONE bf16 matmul, f32 acc.
    proj = jnp.dot(x2d.astype(jnp.bfloat16), wproj_ref[...],
                   preferred_element_type=jnp.float32) + bproj_ref[...]  # (G*NT, 2C)
    e = proj[:, :C].reshape(G, NT, C).astype(jnp.bfloat16)   # linear_edge(x)
    n = proj[:, C:].reshape(G, NT, C).astype(jnp.bfloat16)   # linear_node1(x)

    # Fused attention: one score slab per pair s[g] = e[g] @ e[g].T with the
    # two same-side diagonal 32x32 blocks masked out.  Rows [0,N1) then attend
    # only to columns [N1,NT)  == softmax(edge1 @ edge2.T) @ n2p, and rows
    # [N1,NT) attend only to columns [0,N1) == softmax(attention.T) @ n1p.
    s = jnp.einsum('gqd,gkd->gqk', e, e,
                   preferred_element_type=jnp.float32)               # (G, NT, NT)
    row = lax.broadcasted_iota(jnp.int32, (NT, NT), 0)
    col = lax.broadcasted_iota(jnp.int32, (NT, NT), 1)
    same_side = (row < N1) == (col < N1)
    s = jnp.where(same_side[None, :, :], -1e30, s)

    s = s - jnp.max(s, axis=-1, keepdims=True)            # stable softmax (f32, lanes)
    p = jnp.exp(s)
    p = p / jnp.sum(p, axis=-1, keepdims=True)            # exact reciprocal

    # Context: one (NT,NT) x (NT,C) matmul per pair (bf16 operands, f32 acc);
    # masked positions carry probability 0 so the wrong-side rows contribute 0.
    ctx = jnp.einsum('gqk,gkd->gqd', p.astype(jnp.bfloat16), n,
                     preferred_element_type=jnp.float32)             # (G, NT, C)

    # linear_final (bf16 weights) + residual + LayerNorm (all f32 elementwise).
    out = jnp.dot(ctx.reshape(G * NT, C).astype(jnp.bfloat16), wf_ref[...],
                  preferred_element_type=jnp.float32) + bf_ref[...]  # (G*NT, C)
    y = x2d + out
    mean = jnp.mean(y, axis=-1, keepdims=True)
    var = jnp.mean(jnp.square(y - mean), axis=-1, keepdims=True)
    y = (y - mean) * lax.rsqrt(var + LN_EPS)
    y = (y * gamma_ref[...] + beta_ref[...]).reshape(G, NT, C)

    out1_ref[...] = y[:, :N1, :]
    out2_ref[...] = y[:, N1:, :]


# ------------------------- one-time parameter packing --------------------------
def pack_crossgraph_params(params):
    """Pack PyTorch-layout (out,in) weights into MXU-ready bf16 slabs ONCE."""
    C = MODEL_DIM
    w_proj = jnp.concatenate([params["we"].T, params["wn1"].T],
                             axis=1).astype(jnp.bfloat16)                 # (C, 2C)
    b_proj = jnp.concatenate([params["be"], params["bn1"]]).reshape(1, 2 * C).astype(jnp.float32)
    return {
        "w_proj": w_proj,
        "b_proj": b_proj,
        "wf_t":   params["wf"].T.astype(jnp.bfloat16),                    # (C, C)
        "bf":     params["bf"].reshape(1, C).astype(jnp.float32),
        "gamma":  params["gamma"].reshape(1, C).astype(jnp.float32),
        "beta":   params["beta"].reshape(1, C).astype(jnp.float32),
    }


# ------------------------------ forward wrapper --------------------------------
def crossgraph_forward(node_1, node_2, packed):
    """node_1: (B, N1, C) f32, node_2: (B, N2, C) f32 -> two (B, Ni, C) arrays.

    Each pair b is processed independently (identical to applying the PyTorch
    module to (node_1[b], node_2[b])).
    """
    C = MODEL_DIM
    B = node_1.shape[0]
    G = next(g for g in (4, 2, 1) if B % g == 0)   # pairs per grid step -> M = G*NT rows
    grid = (B // G,)

    wspec = lambda shape: pl.BlockSpec(shape, lambda b: (0, 0))  # VMEM-resident weights

    flops_per_pair = (2 * NT * C * (2 * C)      # fused projection
                      + 2 * 2 * NT * NT * C     # scores + context
                      + 2 * NT * C * C)         # linear_final
    cost = pl.CostEstimate(
        flops=B * flops_per_pair,
        transcendentals=B * NT * NT,            # softmax exp
        bytes_accessed=int(2 * (node_1.size + node_2.size) * 4
                           + packed["w_proj"].size * 2
                           + packed["wf_t"].size * 2),
    )

    out1, out2 = pl.pallas_call(
        _crossgraph_kernel,
        out_shape=(jax.ShapeDtypeStruct((B, N1, C), jnp.float32),
                   jax.ShapeDtypeStruct((B, N2, C), jnp.float32)),
        grid=grid,
        in_specs=[
            pl.BlockSpec((G, N1, C), lambda b: (b, 0, 0)),   # node_1 blocks
            pl.BlockSpec((G, N2, C), lambda b: (b, 0, 0)),   # node_2 blocks
            wspec((C, 2 * C)),                               # [We.T | Wn1.T] (bf16)
            wspec((1, 2 * C)),                               # [be | bn1]
            wspec((C, C)),                                   # Wf.T (bf16)
            wspec((1, C)),                                   # bf
            wspec((1, C)),                                   # LayerNorm gamma
            wspec((1, C)),                                   # LayerNorm beta
        ],
        out_specs=(pl.BlockSpec((G, N1, C), lambda b: (b, 0, 0)),
                   pl.BlockSpec((G, N2, C), lambda b: (b, 0, 0))),
        compiler_params=pltpu.CompilerParams(dimension_semantics=("parallel",)),
        cost_estimate=cost,
    )(node_1.astype(jnp.float32), node_2.astype(jnp.float32),
      packed["w_proj"], packed["b_proj"], packed["wf_t"],
      packed["bf"], packed["gamma"], packed["beta"])
    return out1, out2


# ----------------------------- numpy reference --------------------------------
def _np_softmax(s, axis=-1):
    s = s - s.max(axis=axis, keepdims=True)
    p = np.exp(s)
    return p / p.sum(axis=axis, keepdims=True)


def reference_forward(node_1, node_2, params):
    x1 = np.asarray(node_1, np.float32)
    x2 = np.asarray(node_2, np.float32)
    we, be = np.asarray(params["we"]), np.asarray(params["be"])
    w1, b1 = np.asarray(params["wn1"]), np.asarray(params["bn1"])
    wf, bf = np.asarray(params["wf"]), np.asarray(params["bf"])
    gamma, beta = np.asarray(params["gamma"]), np.asarray(params["beta"])

    e1 = x1 @ we.T + be
    e2 = x2 @ we.T + be
    n1 = x1 @ w1.T + b1
    n2 = x2 @ w1.T + b1
    A = e1 @ e2.T
    o1 = _np_softmax(A, -1) @ n2
    o2 = _np_softmax(A.T, -1) @ n1
    o1 = o1 @ wf.T + bf
    o2 = o2 @ wf.T + bf

    def ln(y):
        m = y.mean(-1, keepdims=True)
        v = ((y - m) ** 2).mean(-1, keepdims=True)
        return (y - m) / np.sqrt(v + LN_EPS) * gamma + beta

    return ln(x1 + o1), ln(x2 + o2)


# ------------------------------------ main -------------------------------------
if __name__ == "__main__":
    C = MODEL_DIM
    B = 8                                             # batch of graph pairs
    keys = jax.random.split(jax.random.PRNGKey(0), 10)
    params = {
        "we":   0.03 * jax.random.normal(keys[0], (C, C), jnp.float32),   # linear_edge
        "be":   0.03 * jax.random.normal(keys[1], (C,),   jnp.float32),
        "wn1":  0.03 * jax.random.normal(keys[2], (C, C), jnp.float32),   # linear_node1
        "bn1":  0.03 * jax.random.normal(keys[3], (C,),   jnp.float32),
        "wf":   0.03 * jax.random.normal(keys[4], (C, C), jnp.float32),   # linear_final
        "bf":   0.03 * jax.random.normal(keys[5], (C,),   jnp.float32),
        "gamma": 1.0 + 0.05 * jax.random.normal(keys[6], (C,), jnp.float32),
        "beta": 0.05 * jax.random.normal(keys[7], (C,),   jnp.float32),
    }
    packed = pack_crossgraph_params(params)           # one-time packing, reused per call
    packed = jax.block_until_ready(packed)

    node_1 = jax.random.normal(keys[8], (B, N1, C), jnp.float32)
    node_2 = jax.random.normal(keys[9], (B, N2, C), jnp.float32)

    out1, out2 = crossgraph_forward(node_1, node_2, packed)
    out1, out2 = jax.block_until_ready((out1, out2))

    out1_np, out2_np = np.asarray(out1), np.asarray(out2)
    n1_np, n2_np = np.asarray(node_1), np.asarray(node_2)
    ok = True
    max_err = 0.0
    for b in range(B):
        r1, r2 = reference_forward(n1_np[b], n2_np[b], params)
        ok &= np.allclose(out1_np[b], r1, atol=3e-2, rtol=3e-2)
        ok &= np.allclose(out2_np[b], r2, atol=3e-2, rtol=3e-2)
        max_err = max(max_err,
                      float(np.max(np.abs(out1_np[b] - r1))),
                      float(np.max(np.abs(out2_np[b] - r2))))
    if not ok:
        raise AssertionError(f"Pallas output mismatch: max_err={max_err}")
    print("KERNEL_OK")
</pallas_src>

<mosaic_0001>
module attributes {stable_mosaic.version = 11 : i64} {
  func.func @_crossgraph_kernel(%arg0: i32, %arg1: memref<4x32x256xf32, #tpu.memory_space<vmem>>, %arg2: memref<4x32x256xf32, #tpu.memory_space<vmem>>, %arg3: memref<256x512xbf16, #tpu.memory_space<vmem>>, %arg4: memref<1x512xf32, #tpu.memory_space<vmem>>, %arg5: memref<256x256xbf16, #tpu.memory_space<vmem>>, %arg6: memref<1x256xf32, #tpu.memory_space<vmem>>, %arg7: memref<1x256xf32, #tpu.memory_space<vmem>>, %arg8: memref<1x256xf32, #tpu.memory_space<vmem>>, %arg9: memref<4x32x256xf32, #tpu.memory_space<vmem>>, %arg10: memref<4x32x256xf32, #tpu.memory_space<vmem>>) attributes {dimension_semantics = [#tpu.dimension_semantics<parallel>], iteration_bounds = array<i64: 2>, scalar_prefetch = 0 : i64, scratch_operands = 0 : i64, tpu.core_type = #tpu.core_type<tc>, window_params = [{transform_indices = @transform_0, window_bounds = array<i64: 4, 32, 256>}, {transform_indices = @transform_1, window_bounds = array<i64: 4, 32, 256>}, {pipeline_mode = #tpu.pipeline_mode<synchronous>, transform_indices = @transform_2, window_bounds = array<i64: 256, 512>}, {pipeline_mode = #tpu.pipeline_mode<synchronous>, transform_indices = @transform_3, window_bounds = array<i64: 1, 512>}, {pipeline_mode = #tpu.pipeline_mode<synchronous>, transform_indices = @transform_4, window_bounds = array<i64: 256, 256>}, {pipeline_mode = #tpu.pipeline_mode<synchronous>, transform_indices = @transform_5, window_bounds = array<i64: 1, 256>}, {pipeline_mode = #tpu.pipeline_mode<synchronous>, transform_indices = @transform_6, window_bounds = array<i64: 1, 256>}, {pipeline_mode = #tpu.pipeline_mode<synchronous>, transform_indices = @transform_7, window_bounds = array<i64: 1, 256>}, {transform_indices = @transform_8, window_bounds = array<i64: 4, 32, 256>}, {transform_indices = @transform_9, window_bounds = array<i64: 4, 32, 256>}]} {
    %c0 = arith.constant 0 : index
    %c0_0 = arith.constant 0 : index
    %c0_1 = arith.constant 0 : index
    %0 = vector.load %arg1[%c0, %c0_0, %c0_1] : memref<4x32x256xf32, #tpu.memory_space<vmem>>, vector<4x32x256xf32>
    %c0_2 = arith.constant 0 : index
    %c0_3 = arith.constant 0 : index
    %c0_4 = arith.constant 0 : index
    %1 = vector.load %arg2[%c0_2, %c0_3, %c0_4] : memref<4x32x256xf32, #tpu.memory_space<vmem>>, vector<4x32x256xf32>
    %2 = tpu.concatenate %0, %1 in 1 : vector<4x32x256xf32>, vector<4x32x256xf32> -> vector<4x64x256xf32>
    %3 = vector.shape_cast %2 : vector<4x64x256xf32> to vector<256x256xf32>
    %4 = arith.truncf %3 : vector<256x256xf32> to vector<256x256xbf16>
    %c0_5 = arith.constant 0 : index
    %c0_6 = arith.constant 0 : index
    %5 = vector.load %arg3[%c0_5, %c0_6] : memref<256x512xbf16, #tpu.memory_space<vmem>>, vector<256x512xbf16>
    %cst = arith.constant dense<0.000000e+00> : vector<256x512xf32>
    %6 = tpu.matmul %4, %5, %cst {dimension_numbers = #tpu.dot_dimension_numbers<[1], [0], [0], [1], [0, 0, 1, 1], [], []>} : vector<256x256xbf16>, vector<256x512xbf16>, vector<256x512xf32> -> vector<256x512xf32>
    %c0_7 = arith.constant 0 : index
    %c0_8 = arith.constant 0 : index
    %7 = vector.load %arg4[%c0_7, %c0_8] : memref<1x512xf32, #tpu.memory_space<vmem>>, vector<1x512xf32>
    %8 = vector.broadcast %7 : vector<1x512xf32> to vector<256x512xf32>
    %9 = arith.addf %6, %8 : vector<256x512xf32>
    %10 = vector.extract_strided_slice %9 {offsets = [0, 0], sizes = [256, 256], strides = [1, 1]} : vector<256x512xf32> to vector<256x256xf32>
    %11 = vector.shape_cast %10 : vector<256x256xf32> to vector<4x64x256xf32>
    %12 = arith.truncf %11 : vector<4x64x256xf32> to vector<4x64x256xbf16>
    %13 = vector.extract_strided_slice %9 {offsets = [0, 256], sizes = [256, 256], strides = [1, 1]} : vector<256x512xf32> to vector<256x256xf32>
    %14 = vector.shape_cast %13 : vector<256x256xf32> to vector<4x64x256xf32>
    %15 = arith.truncf %14 : vector<4x64x256xf32> to vector<4x64x256xbf16>
    "tpu.trace_start"() <{level = 10 : i32, message = "gqd,gkd->gqk"}> : () -> ()
    %cst_9 = arith.constant dense<0.000000e+00> : vector<4x64x64xf32>
    %16 = tpu.matmul %12, %12, %cst_9 {dimension_numbers = #tpu.dot_dimension_numbers<[2], [2], [1], [1], [0, 0, 0, 1, 1, 1], [0], [0]>} : vector<4x64x256xbf16>, vector<4x64x256xbf16>, vector<4x64x64xf32> -> vector<4x64x64xf32>
    "tpu.trace_stop"() : () -> ()
    %17 = tpu.iota {dimensions = array<i32: 0>} : vector<64x64xi32>
    %18 = tpu.iota {dimensions = array<i32: 1>} : vector<64x64xi32>
    %c32_i32 = arith.constant 32 : i32
    %19 = vector.broadcast %c32_i32 : i32 to vector<64x64xi32>
    %20 = arith.cmpi slt, %17, %19 : vector<64x64xi32>
    %c32_i32_10 = arith.constant 32 : i32
    %21 = vector.broadcast %c32_i32_10 : i32 to vector<64x64xi32>
    %22 = arith.cmpi slt, %18, %21 : vector<64x64xi32>
    %23 = arith.xori %20, %22 : vector<64x64xi1>
    %cst_11 = arith.constant dense<true> : vector<64x64xi1>
    %24 = arith.xori %23, %cst_11 : vector<64x64xi1>
    %25 = vector.shape_cast %24 : vector<64x64xi1> to vector<1x64x64xi1>
    %cst_12 = arith.constant -1.000000e+30 : f32
    %26 = vector.shape_cast %25 : vector<1x64x64xi1> to vector<1x64x64xi1>
    %27 = vector.broadcast %26 : vector<1x64x64xi1> to vector<4x64x64xi1>
    %28 = vector.broadcast %cst_12 : f32 to vector<4x64x64xf32>
    %29 = arith.select %27, %28, %16 : vector<4x64x64xi1>, vector<4x64x64xf32>
    %cst_13 = arith.constant dense<0xFF800000> : vector<4x64xf32>
    %30 = vector.multi_reduction <maximumf>, %29, %cst_13 [2] : vector<4x64x64xf32> to vector<4x64xf32>
    %31 = vector.shape_cast %30 : vector<4x64xf32> to vector<4x64x1xf32>
    %32 = vector.broadcast %31 : vector<4x64x1xf32> to vector<4x64x64xf32>
    %33 = arith.subf %29, %32 : vector<4x64x64xf32>
    %34 = math.exp %33 : vector<4x64x64xf32>
    %cst_14 = arith.constant dense<0.000000e+00> : vector<4x64xf32>
    %35 = vector.multi_reduction <add>, %34, %cst_14 [2] : vector<4x64x64xf32> to vector<4x64xf32>
    %36 = vector.shape_cast %35 : vector<4x64xf32> to vector<4x64x1xf32>
    %37 = vector.broadcast %36 : vector<4x64x1xf32> to vector<4x64x64xf32>
    %38 = arith.divf %34, %37 : vector<4x64x64xf32>
    %39 = arith.truncf %38 : vector<4x64x64xf32> to vector<4x64x64xbf16>
    "tpu.trace_start"() <{level = 10 : i32, message = "gqk,gkd->gqd"}> : () -> ()
    %cst_15 = arith.constant dense<0.000000e+00> : vector<4x64x256xf32>
    %40 = tpu.matmul %39, %15, %cst_15 {dimension_numbers = #tpu.dot_dimension_numbers<[2], [1], [1], [2], [0, 0, 0, 1, 1, 2], [0], [0]>} : vector<4x64x64xbf16>, vector<4x64x256xbf16>, vector<4x64x256xf32> -> vector<4x64x256xf32>
    "tpu.trace_stop"() : () -> ()
    %41 = vector.shape_cast %40 : vector<4x64x256xf32> to vector<256x256xf32>
    %42 = arith.truncf %41 : vector<256x256xf32> to vector<256x256xbf16>
    %c0_16 = arith.constant 0 : index
    %c0_17 = arith.constant 0 : index
    %43 = vector.load %arg5[%c0_16, %c0_17] : memref<256x256xbf16, #tpu.memory_space<vmem>>, vector<256x256xbf16>
    %cst_18 = arith.constant dense<0.000000e+00> : vector<256x256xf32>
    %44 = tpu.matmul %42, %43, %cst_18 {dimension_numbers = #tpu.dot_dimension_numbers<[1], [0], [0], [1], [0, 0, 1, 1], [], []>} : vector<256x256xbf16>, vector<256x256xbf16>, vector<256x256xf32> -> vector<256x256xf32>
    %c0_19 = arith.constant 0 : index
    %c0_20 = arith.constant 0 : index
    %45 = vector.load %arg6[%c0_19, %c0_20] : memref<1x256xf32, #tpu.memory_space<vmem>>, vector<1x256xf32>
    %46 = vector.broadcast %45 : vector<1x256xf32> to vector<256x256xf32>
    %47 = arith.addf %44, %46 : vector<256x256xf32>
    %48 = arith.addf %3, %47 : vector<256x256xf32>
    %cst_21 = arith.constant dense<0.000000e+00> : vector<256xf32>
    %49 = vector.multi_reduction <add>, %48, %cst_21 [1] : vector<256x256xf32> to vector<256xf32>
    %50 = vector.shape_cast %49 : vector<256xf32> to vector<256x1xf32>
    %cst_22 = arith.constant 2.560000e+02 : f32
    %51 = vector.broadcast %cst_22 : f32 to vector<256x1xf32>
    %52 = arith.divf %50, %51 : vector<256x1xf32>
    %53 = vector.broadcast %52 : vector<256x1xf32> to vector<256x256xf32>
    %54 = arith.subf %48, %53 : vector<256x256xf32>
    %55 = arith.mulf %54, %54 : vector<256x256xf32>
    %cst_23 = arith.constant dense<0.000000e+00> : vector<256xf32>
    %56 = vector.multi_reduction <add>, %55, %cst_23 [1] : vector<256x256xf32> to vector<256xf32>
    %57 = vector.shape_cast %56 : vector<256xf32> to vector<256x1xf32>
    %cst_24 = arith.constant 2.560000e+02 : f32
    %58 = vector.broadcast %cst_24 : f32 to vector<256x1xf32>
    %59 = arith.divf %57, %58 : vector<256x1xf32>
    %60 = vector.broadcast %52 : vector<256x1xf32> to vector<256x256xf32>
    %61 = arith.subf %48, %60 : vector<256x256xf32>
    %cst_25 = arith.constant 9.99999974E-6 : f32
    %62 = vector.broadcast %cst_25 : f32 to vector<256x1xf32>
    %63 = arith.addf %59, %62 : vector<256x1xf32>
    %64 = math.rsqrt %63 : vector<256x1xf32>
    %65 = vector.broadcast %64 : vector<256x1xf32> to vector<256x256xf32>
    %66 = arith.mulf %61, %65 : vector<256x256xf32>
    %c0_26 = arith.constant 0 : index
    %c0_27 = arith.constant 0 : index
    %67 = vector.load %arg7[%c0_26, %c0_27] : memref<1x256xf32, #tpu.memory_space<vmem>>, vector<1x256xf32>
    %68 = vector.broadcast %67 : vector<1x256xf32> to vector<256x256xf32>
    %69 = arith.mulf %66, %68 : vector<256x256xf32>
    %c0_28 = arith.constant 0 : index
    %c0_29 = arith.constant 0 : index
    %70 = vector.load %arg8[%c0_28, %c0_29] : memref<1x256xf32, #tpu.memory_space<vmem>>, vector<1x256xf32>
    %71 = vector.broadcast %70 : vector<1x256xf32> to vector<256x256xf32>
    %72 = arith.addf %69, %71 : vector<256x256xf32>
    %73 = vector.shape_cast %72 : vector<256x256xf32> to vector<4x64x256xf32>
    %74 = vector.extract_strided_slice %73 {offsets = [0, 0, 0], sizes = [4, 32, 256], strides = [1, 1, 1]} : vector<4x64x256xf32> to vector<4x32x256xf32>
    %c0_30 = arith.constant 0 : index
    %c0_31 = arith.constant 0 : index
    %c0_32 = arith.constant 0 : index
    %75 = vector.load %arg9[%c0_30, %c0_31, %c0_32] : memref<4x32x256xf32, #tpu.memory_space<vmem>>, vector<4x32x256xf32>
    tpu.vector_store %arg9[%c0_30, %c0_31, %c0_32], %74 {strides = array<i32>} : memref<4x32x256xf32, #tpu.memory_space<vmem>>, vector<4x32x256xf32>,
    %76 = vector.extract_strided_slice %73 {offsets = [0, 32, 0], sizes = [4, 32, 256], strides = [1, 1, 1]} : vector<4x64x256xf32> to vector<4x32x256xf32>
    %c0_33 = arith.constant 0 : index
    %c0_34 = arith.constant 0 : index
    %c0_35 = arith.constant 0 : index
    %77 = vector.load %arg10[%c0_33, %c0_34, %c0_35] : memref<4x32x256xf32, #tpu.memory_space<vmem>>, vector<4x32x256xf32>
    tpu.vector_store %arg10[%c0_33, %c0_34, %c0_35], %76 {strides = array<i32>} : memref<4x32x256xf32, #tpu.memory_space<vmem>>, vector<4x32x256xf32>,
    return
  }
  func.func @transform_0(%arg0: i32) -> (i32, i32, i32) {
    %c0_i32 = arith.constant 0 : i32
    %c0_i32_0 = arith.constant 0 : i32
    %c0_i32_1 = arith.constant 0 : i32
    return %arg0, %c0_i32, %c0_i32_0 : i32, i32, i32
  }
  func.func @transform_1(%arg0: i32) -> (i32, i32, i32) {
    %c0_i32 = arith.constant 0 : i32
    %c0_i32_0 = arith.constant 0 : i32
    %c0_i32_1 = arith.constant 0 : i32
    return %arg0, %c0_i32, %c0_i32_0 : i32, i32, i32
  }
  func.func @transform_2(%arg0: i32) -> (i32, i32) {
    %c0_i32 = arith.constant 0 : i32
    %c0_i32_0 = arith.constant 0 : i32
    %c0_i32_1 = arith.constant 0 : i32
    return %c0_i32, %c0_i32_0 : i32, i32
  }
  func.func @transform_3(%arg0: i32) -> (i32, i32) {
    %c0_i32 = arith.constant 0 : i32
    %c0_i32_0 = arith.constant 0 : i32
    %c0_i32_1 = arith.constant 0 : i32
    return %c0_i32, %c0_i32_0 : i32, i32
  }
  func.func @transform_4(%arg0: i32) -> (i32, i32) {
    %c0_i32 = arith.constant 0 : i32
    %c0_i32_0 = arith.constant 0 : i32
    %c0_i32_1 = arith.constant 0 : i32
    return %c0_i32, %c0_i32_0 : i32, i32
  }
  func.func @transform_5(%arg0: i32) -> (i32, i32) {
    %c0_i32 = arith.constant 0 : i32
    %c0_i32_0 = arith.constant 0 : i32
    %c0_i32_1 = arith.constant 0 : i32
    return %c0_i32, %c0_i32_0 : i32, i32
  }
  func.func @transform_6(%arg0: i32) -> (i32, i32) {
    %c0_i32 = arith.constant 0 : i32
    %c0_i32_0 = arith.constant 0 : i32
    %c0_i32_1 = arith.constant 0 : i32
    return %c0_i32, %c0_i32_0 : i32, i32
  }
  func.func @transform_7(%arg0: i32) -> (i32, i32) {
    %c0_i32 = arith.constant 0 : i32
    %c0_i32_0 = arith.constant 0 : i32
    %c0_i32_1 = arith.constant 0 : i32
    return %c0_i32, %c0_i32_0 : i32, i32
  }
  func.func @transform_8(%arg0: i32) -> (i32, i32, i32) {
    %c0_i32 = arith.constant 0 : i32
    %c0_i32_0 = arith.constant 0 : i32
    %c0_i32_1 = arith.constant 0 : i32
    return %arg0, %c0_i32, %c0_i32_0 : i32, i32, i32
  }
  func.func @transform_9(%arg0: i32) -> (i32, i32, i32) {
    %c0_i32 = arith.constant 0 : i32
    %c0_i32_0 = arith.constant 0 : i32
    %c0_i32_1 = arith.constant 0 : i32
    return %arg0, %c0_i32, %c0_i32_0 : i32, i32, i32
  }
}

</mosaic_0001>

<llo_original>
// kernel: tpu_custom_call.1
$region0: #{tpu_custom_call.1}
  #allocation0 [shape = 'u32[]', space=smem, size = 0x4, offset = 0x4, fixed_abs, tag = 'smem constant byte address 0x4 - core index']
  #allocation1 [shape = 'u32[144,128]{1,0:T(1,128)}', space=vmem, size = 0x12000, scoped, tag = 'internal scratch']
  %s0 = inlined_call_operand.hbm [shape: f32[8,32,256], index: 0, kind: input, shape index: {}]
  %s1 = inlined_call_operand.hbm [shape: f32[8,32,256], index: 1, kind: input, shape index: {}]
  %s2 = inlined_call_operand.hbm [shape: bf16[256,512], index: 2, kind: input, shape index: {}]
  %s3 = inlined_call_operand.vmem [shape: f32[1,512], index: 3, kind: input, shape index: {}]
  %s4 = inlined_call_operand.hbm [shape: bf16[256,256], index: 4, kind: input, shape index: {}]
  %s5 = inlined_call_operand.vmem [shape: f32[1,256], index: 5, kind: input, shape index: {}]
  %s6 = inlined_call_operand.vmem [shape: f32[1,256], index: 6, kind: input, shape index: {}]
  %s7 = inlined_call_operand.vmem [shape: f32[1,256], index: 7, kind: input, shape index: {}]
  %s8 = inlined_call_operand.hbm [shape: f32[8,32,256], index: 8, kind: output, shape index: {0}]
  %s9 = inlined_call_operand.hbm [shape: f32[8,32,256], index: 9, kind: output, shape index: {1}]
  %10 = xla_tuple %s8, %s9
  %s11 = sld [smem:[#allocation0]]
  $region89: #{tpu_custom_call.1} parent=0
    _
  %s13 = ssub.s32 1, %s11
  %s14 = scalar_select 0, %s13, %s11
  $region1: #{tpu_custom_call.1} parent=0
    #allocation2 [shape = 'u8[262144]{0}', space=vmem, size = 0x40000, scoped, tag = 'input window, operand 0']
    #allocation3 [shape = 's32[2]{0}', space=sflag, size = 0x8, scoped, tag = 'scoped memory for tpu_custom_call.1']
    #allocation4 [shape = 's32[2]{0}', space=sflag, size = 0x8, scoped, tag = 'scoped memory for tpu_custom_call.1']
    #allocation5 [shape = 'u8[262144]{0}', space=vmem, size = 0x40000, scoped, tag = 'input window, operand 1']
    #allocation6 [shape = 's32[2]{0}', space=sflag, size = 0x8, scoped, tag = 'scoped memory for tpu_custom_call.1']
    #allocation7 [shape = 'u8[262144]{0}', space=vmem, size = 0x40000, scoped, tag = 'input window, operand 2, single buffered']
    #allocation8 [shape = 'u8[131072]{0}', space=vmem, size = 0x20000, scoped, tag = 'input window, operand 4, single buffered']
    #allocation9 [shape = 's32[1]{0}', space=sflag, size = 0x4, scoped, tag = 'scoped memory for tpu_custom_call.1']
    #allocation10 [shape = 'u8[262144]{0}', space=vmem, size = 0x40000, scoped, tag = 'output window, operand 0']
    #allocation11 [shape = 'u8[262144]{0}', space=vmem, size = 0x40000, scoped, tag = 'output window, operand 1']
    #allocation12 [shape = 's32[2]{0}', space=sflag, size = 0x8, scoped, tag = 'scoped memory for tpu_custom_call.1']
    %15 = vsyncpa [#allocation3], 0
    %s16 = scalar_lea.sflag [#allocation3], 1
    %17 = vsyncpa %s16, 0
    %18 = vsyncpa [#allocation6], 0
    %s19 = scalar_lea.sflag [#allocation6], 1
    %20 = vsyncpa %s19, 0
    %21 = vsyncpa [#allocation9], 0
    %22 = vsyncpa [#allocation4], 0
    %s23 = scalar_lea.sflag [#allocation4], 1
    %24 = vsyncpa %s23, 0
    %25 = vsyncpa [#allocation12], 0
    %s26 = scalar_lea.sflag [#allocation12], 1
    %27 = vsyncpa %s26, 0
    loop: start=0, step=1, limit=4
    $region2: #{tpu_custom_call.1} parent=1 // loop_pre_header
      _
    $region3: #{tpu_custom_call.1} parent=1 // loop_header
      %s29 = sphi 0, %s33
      %p30 = scmp.ge.s32.totalorder %s29, 4
      %s39 = sphi 0, %s41
      %s42 = sphi 0, %s39
      %s43 = sphi 0, %s42
      %s59 = sphi 0, %s43
      %s65 = sphi 0, %s67
      %s68 = sphi 0, %s65
      %s69 = sphi 0, %s68
      %s85 = sphi 0, %s69
      %s89 = sphi 0, %s89
      %s91 = sphi 0, %s89
      %s92 = sphi 0, %s91
      %s106 = sphi 0, %s92
      %s110 = sphi 0, %s110
      %s112 = sphi 0, %s110
      %s113 = sphi 0, %s112
      %s127 = sphi 0, %s113
      %s131 = sphi 0, %s131
      %s133 = sphi 0, %s131
      %s134 = sphi 0, %s133
      %s148 = sphi 0, %s134
      %s152 = sphi 0, %s152
      %s154 = sphi 0, %s152
      %s155 = sphi 0, %s154
      %s169 = sphi 0, %s155
      %s173 = sphi 0, %s173
      %s175 = sphi 0, %s173
      %s176 = sphi 0, %s175
      %s190 = sphi 0, %s176
      %s194 = sphi 0, %s194
      %s196 = sphi 0, %s194
      %s197 = sphi 0, %s196
      %s211 = sphi 0, %s197
      %s217 = sphi 0, %s219
      %s220 = sphi 0, %s217
      %s221 = sphi 0, %s220
      %s237 = sphi 0, %s221
      %s243 = sphi 0, %s245
      %s246 = sphi 0, %s243
      %s247 = sphi 0, %s246
      %s263 = sphi 0, %s247
    $region4: #{tpu_custom_call.1} parent=1 // loop_header_branch
      %32 = sbr.rel (%p30) target = $region8
    $region5: #{tpu_custom_call.1} parent=1 // loop_body
      %s34 = ssub.s32 %s29, 1
      %s35 = ssub.s32 %s29, 2
      %s36 = sadd.s32 %s29, 1
      %s37 = ssub.s32 %s29, %s36
      %p38 = scmp.eq.s32.totalorder %s37, 0
      %s40 = sadd.s32 %s39, 1
      %s41 = scalar_select %p38, %s39, %s40
      %p44 = pneg %p38
      %p45 = scmp.eq.s32.totalorder %s29, 1
      %p46 = por %p44, %p45
      %p47 = scmp.ne.s32.totalorder %s39, %s42
      %p48 = scmp.eq.s32.totalorder %s29, 0
      %p49 = por %p47, %p48
      %p50 = scmp.ne.s32.totalorder %s39, %s42
      %p51 = scmp.eq.s32.totalorder %s34, 1
      %p52 = por %p50, %p51
      %p53 = scmp.ne.s32.totalorder %s42, %s43
      %p54 = scmp.eq.s32.totalorder %s34, 0
      %p55 = por %p53, %p54
      %p56 = scmp.ne.s32.totalorder %s42, %s43
      %p57 = scmp.eq.s32.totalorder %s35, 1
      %p58 = por %p56, %p57
      %p60 = scmp.ne.s32.totalorder %s43, %s59
      %p61 = scmp.eq.s32.totalorder %s35, 0
      %p62 = por %p60, %p61
      %s63 = ssub.s32 %s29, %s36
      %p64 = scmp.eq.s32.totalorder %s63, 0
      %s66 = sadd.s32 %s65, 1
      %s67 = scalar_select %p64, %s65, %s66
      %p70 = pneg %p64
      %p71 = scmp.eq.s32.totalorder %s29, 1
      %p72 = por %p70, %p71
      %p73 = scmp.ne.s32.totalorder %s65, %s68
      %p74 = scmp.eq.s32.totalorder %s29, 0
      %p75 = por %p73, %p74
      %p76 = scmp.ne.s32.totalorder %s65, %s68
      %p77 = scmp.eq.s32.totalorder %s34, 1
      %p78 = por %p76, %p77
      %p79 = scmp.ne.s32.totalorder %s68, %s69
      %p80 = scmp.eq.s32.totalorder %s34, 0
      %p81 = por %p79, %p80
      %p82 = scmp.ne.s32.totalorder %s68, %s69
      %p83 = scmp.eq.s32.totalorder %s35, 1
      %p84 = por %p82, %p83
      %p86 = scmp.ne.s32.totalorder %s69, %s85
      %p87 = scmp.eq.s32.totalorder %s35, 0
      %p88 = por %p86, %p87
      %s90 = sadd.s32 %s89, 1
      %p93 = scmp.eq.s32.totalorder %s29, 1
      %p94 = scmp.ne.s32.totalorder %s89, %s91
      %p95 = scmp.eq.s32.totalorder %s29, 0
      %p96 = por %p94, %p95
      %p97 = scmp.ne.s32.totalorder %s89, %s91
      %p98 = scmp.eq.s32.totalorder %s34, 1
      %p99 = por %p97, %p98
      %p100 = scmp.ne.s32.totalorder %s91, %s92
      %p101 = scmp.eq.s32.totalorder %s34, 0
      %p102 = por %p100, %p101
      %p103 = scmp.ne.s32.totalorder %s91, %s92
      %p104 = scmp.eq.s32.totalorder %s35, 1
      %p105 = por %p103, %p104
      %p107 = scmp.ne.s32.totalorder %s92, %s106
      %p108 = scmp.eq.s32.totalorder %s35, 0
      %p109 = por %p107, %p108
      %s111 = sadd.s32 %s110, 1
      %p114 = scmp.eq.s32.totalorder %s29, 1
      %p115 = scmp.ne.s32.totalorder %s110, %s112
      %p116 = scmp.eq.s32.totalorder %s29, 0
      %p117 = por %p115, %p116
      %p118 = scmp.ne.s32.totalorder %s110, %s112
      %p119 = scmp.eq.s32.totalorder %s34, 1
      %p120 = por %p118, %p119
      %p121 = scmp.ne.s32.totalorder %s112, %s113
      %p122 = scmp.eq.s32.totalorder %s34, 0
      %p123 = por %p121, %p122
      %p124 = scmp.ne.s32.totalorder %s112, %s113
      %p125 = scmp.eq.s32.totalorder %s35, 1
      %p126 = por %p124, %p125
      %p128 = scmp.ne.s32.totalorder %s113, %s127
      %p129 = scmp.eq.s32.totalorder %s35, 0
      %p130 = por %p128, %p129
      %s132 = sadd.s32 %s131, 1
      %p135 = scmp.eq.s32.totalorder %s29, 1
      %p136 = scmp.ne.s32.totalorder %s131, %s133
      %p137 = scmp.eq.s32.totalorder %s29, 0
      %p138 = por %p136, %p137
      %p139 = scmp.ne.s32.totalorder %s131, %s133
      %p140 = scmp.eq.s32.totalorder %s34, 1
      %p141 = por %p139, %p140
      %p142 = scmp.ne.s32.totalorder %s133, %s134
      %p143 = scmp.eq.s32.totalorder %s34, 0
      %p144 = por %p142, %p143
      %p145 = scmp.ne.s32.totalorder %s133, %s134
      %p146 = scmp.eq.s32.totalorder %s35, 1
      %p147 = por %p145, %p146
      %p149 = scmp.ne.s32.totalorder %s134, %s148
      %p150 = scmp.eq.s32.totalorder %s35, 0
      %p151 = por %p149, %p150
      %s153 = sadd.s32 %s152, 1
      %p156 = scmp.eq.s32.totalorder %s29, 1
      %p157 = scmp.ne.s32.totalorder %s152, %s154
      %p158 = scmp.eq.s32.totalorder %s29, 0
      %p159 = por %p157, %p158
      %p160 = scmp.ne.s32.totalorder %s152, %s154
      %p161 = scmp.eq.s32.totalorder %s34, 1
      %p162 = por %p160, %p161
      %p163 = scmp.ne.s32.totalorder %s154, %s155
      %p164 = scmp.eq.s32.totalorder %s34, 0
      %p165 = por %p163, %p164
      %p166 = scmp.ne.s32.totalorder %s154, %s155
      %p167 = scmp.eq.s32.totalorder %s35, 1
      %p168 = por %p166, %p167
      %p170 = scmp.ne.s32.totalorder %s155, %s169
      %p171 = scmp.eq.s32.totalorder %s35, 0
      %p172 = por %p170, %p171
      %s174 = sadd.s32 %s173, 1
      %p177 = scmp.eq.s32.totalorder %s29, 1
      %p178 = scmp.ne.s32.totalorder %s173, %s175
      %p179 = scmp.eq.s32.totalorder %s29, 0
      %p180 = por %p178, %p179
      %p181 = scmp.ne.s32.totalorder %s173, %s175
      %p182 = scmp.eq.s32.totalorder %s34, 1
      %p183 = por %p181, %p182
      %p184 = scmp.ne.s32.totalorder %s175, %s176
      %p185 = scmp.eq.s32.totalorder %s34, 0
      %p186 = por %p184, %p185
      %p187 = scmp.ne.s32.totalorder %s175, %s176
      %p188 = scmp.eq.s32.totalorder %s35, 1
      %p189 = por %p187, %p188
      %p191 = scmp.ne.s32.totalorder %s176, %s190
      %p192 = scmp.eq.s32.totalorder %s35, 0
      %p193 = por %p191, %p192
      %s195 = sadd.s32 %s194, 1
      %p198 = scmp.eq.s32.totalorder %s29, 1
      %p199 = scmp.ne.s32.totalorder %s194, %s196
      %p200 = scmp.eq.s32.totalorder %s29, 0
      %p201 = por %p199, %p200
      %p202 = scmp.ne.s32.totalorder %s194, %s196
      %p203 = scmp.eq.s32.totalorder %s34, 1
      %p204 = por %p202, %p203
      %p205 = scmp.ne.s32.totalorder %s196, %s197
      %p206 = scmp.eq.s32.totalorder %s34, 0
      %p207 = por %p205, %p206
      %p208 = scmp.ne.s32.totalorder %s196, %s197
      %p209 = scmp.eq.s32.totalorder %s35, 1
      %p210 = por %p208, %p209
      %p212 = scmp.ne.s32.totalorder %s197, %s211
      %p213 = scmp.eq.s32.totalorder %s35, 0
      %p214 = por %p212, %p213
      %s215 = ssub.s32 %s29, %s36
      %p216 = scmp.eq.s32.totalorder %s215, 0
      %s218 = sadd.s32 %s217, 1
      %s219 = scalar_select %p216, %s217, %s218
      %p222 = pneg %p216
      %p223 = scmp.eq.s32.totalorder %s29, 1
      %p224 = por %p222, %p223
      %p225 = scmp.ne.s32.totalorder %s217, %s220
      %p226 = scmp.eq.s32.totalorder %s29, 0
      %p227 = por %p225, %p226
      %p228 = scmp.ne.s32.totalorder %s217, %s220
      %p229 = scmp.eq.s32.totalorder %s34, 1
      %p230 = por %p228, %p229
      %p231 = scmp.ne.s32.totalorder %s220, %s221
      %p232 = scmp.eq.s32.totalorder %s34, 0
      %p233 = por %p231, %p232
      %p234 = scmp.ne.s32.totalorder %s220, %s221
      %p235 = scmp.eq.s32.totalorder %s35, 1
      %p236 = por %p234, %p235
      %p238 = scmp.ne.s32.totalorder %s221, %s237
      %p239 = scmp.eq.s32.totalorder %s35, 0
      %p240 = por %p238, %p239
      %s241 = ssub.s32 %s29, %s36
      %p242 = scmp.eq.s32.totalorder %s241, 0
      %s244 = sadd.s32 %s243, 1
      %s245 = scalar_select %p242, %s243, %s244
      %p248 = pneg %p242
      %p249 = scmp.eq.s32.totalorder %s29, 1
      %p250 = por %p248, %p249
      %p251 = scmp.ne.s32.totalorder %s243, %s246
      %p252 = scmp.eq.s32.totalorder %s29, 0
      %p253 = por %p251, %p252
      %p254 = scmp.ne.s32.totalorder %s243, %s246
      %p255 = scmp.eq.s32.totalorder %s34, 1
      %p256 = por %p254, %p255
      %p257 = scmp.ne.s32.totalorder %s246, %s247
      %p258 = scmp.eq.s32.totalorder %s34, 0
      %p259 = por %p257, %p258
      %p260 = scmp.ne.s32.totalorder %s246, %s247
      %p261 = scmp.eq.s32.totalorder %s35, 1
      %p262 = por %p260, %p261
      %p264 = scmp.ne.s32.totalorder %s247, %s263
      %p265 = scmp.eq.s32.totalorder %s35, 0
      %p266 = por %p264, %p265
      %p267 = scmp.le.s32.totalorder 1, %s29
      %p268 = scmp.lt.s32.totalorder %s29, 3
      %p269 = pnand %p267, %p268
      %p270 = pneg %p269
      // Predicated region
      $region9: #{tpu_custom_call.1} parent=5 // pred_check
        _
      $region10: #{tpu_custom_call.1} parent=5 // pred_check_branch
        %272 = sbr.rel (%p269) target = $region12
      $region11: #{tpu_custom_call.1} parent=5 // pred_region
        %s273 = ssub.s32 %s29, 1
        // Predicated region
        $region13: #{tpu_custom_call.1} parent=11 // pred_check
          %p274 = pneg %p102
        $region14: #{tpu_custom_call.1} parent=11 // pred_check_branch
          %276 = sbr.rel (%p274) target = $region16
        $region15: #{tpu_custom_call.1} parent=11 // pred_region
          %s278 = ssub.s32 8192, 8192
          %279 = vsyncadd [#allocation6], %s278
          %s280 = sshll.u32 [#allocation7], 4
          %s281 = int_to_ptr.vmem [resolvable:$true] %s280
          %286 = dma.hbm_to_vmem [thread:$0]  %s2, 8192, %s281, [#allocation6], 256, 256, 16
        $region16: #{tpu_custom_call.1} parent=11 // pred_fallthru
          _
        // Predicated region
        $region17: #{tpu_custom_call.1} parent=11 // pred_check
          %p287 = pneg %p123
        $region18: #{tpu_custom_call.1} parent=11 // pred_check_branch
          %289 = sbr.rel (%p287) target = $region20
        $region19: #{tpu_custom_call.1} parent=11 // pred_region
          _
        $region20: #{tpu_custom_call.1} parent=11 // pred_fallthru
          _
        // Predicated region
        $region21: #{tpu_custom_call.1} parent=11 // pred_check
          %p290 = pneg %p144
        $region22: #{tpu_custom_call.1} parent=11 // pred_check_branch
          %292 = sbr.rel (%p290) target = $region24
        $region23: #{tpu_custom_call.1} parent=11 // pred_region
          %s294 = ssub.s32 4096, 4096
          %295 = vsyncadd [#allocation9], %s294
          %s296 = sshll.u32 [#allocation8], 4
          %s297 = int_to_ptr.vmem [resolvable:$true] %s296
          %302 = dma.hbm_to_vmem [thread:$0]  %s4, 4096, %s297, [#allocation9], 128, 128, 8
        $region24: #{tpu_custom_call.1} parent=11 // pred_fallthru
          _
        // Predicated region
        $region25: #{tpu_custom_call.1} parent=11 // pred_check
          %p303 = pneg %p165
        $region26: #{tpu_custom_call.1} parent=11 // pred_check_branch
          %305 = sbr.rel (%p303) target = $region28
        $region27: #{tpu_custom_call.1} parent=11 // pred_region
          _
        $region28: #{tpu_custom_call.1} parent=11 // pred_fallthru
          _
        // Predicated region
        $region29: #{tpu_custom_call.1} parent=11 // pred_check
          %p306 = pneg %p186
        $region30: #{tpu_custom_call.1} parent=11 // pred_check_branch
          %308 = sbr.rel (%p306) target = $region32
        $region31: #{tpu_custom_call.1} parent=11 // pred_region
          _
        $region32: #{tpu_custom_call.1} parent=11 // pred_fallthru
          _
        // Predicated region
        $region33: #{tpu_custom_call.1} parent=11 // pred_check
          %p309 = pneg %p207
        $region34: #{tpu_custom_call.1} parent=11 // pred_check_branch
          %311 = sbr.rel (%p309) target = $region36
        $region35: #{tpu_custom_call.1} parent=11 // pred_region
          _
        $region36: #{tpu_custom_call.1} parent=11 // pred_fallthru
          _
      $region12: #{tpu_custom_call.1} parent=5 // pred_fallthru
        _
      %p312 = scmp.lt.s32.totalorder %s29, 2
      // Predicated region
      $region37: #{tpu_custom_call.1} parent=5 // pred_check
        %p313 = pneg %p312
      $region38: #{tpu_custom_call.1} parent=5 // pred_check_branch
        %315 = sbr.rel (%p313) target = $region40
      $region39: #{tpu_custom_call.1} parent=5 // pred_region
        // Predicated region
        $region41: #{tpu_custom_call.1} parent=39 // pred_check
          %p316 = pneg %p49
        $region42: #{tpu_custom_call.1} parent=39 // pred_check_branch
          %318 = sbr.rel (%p316) target = $region44
        $region43: #{tpu_custom_call.1} parent=39 // pred_region
          %s319 = sand.u32 %s39, 1
          %s320 = scalar_lea.sflag [#allocation3], %s319
          %s321 = sand.u32 %s39, 1
          %s322 = smul.addr %s321, 256
          %s323 = scalar_lea.vmem [#allocation2], %s322
          %s324 = smul.u32 4, %s29
          %s326 = ssub.s32 4096, 4096
          %327 = vsyncadd %s320, %s326
          %s328 = smul.addr %s324, 8
          %s329 = smul.addr %s328, 128
          %s330 = scalar_lea.hbm %s0, %s329
          %s331 = sshll.u32 %s323, 4
          %s332 = int_to_ptr.vmem [resolvable:$true] %s331
          %337 = dma.hbm_to_vmem [thread:$0]  %s330, 4096, %s332, %s320, 256, 256, 16
        $region44: #{tpu_custom_call.1} parent=39 // pred_fallthru
          _
        // Predicated region
        $region45: #{tpu_custom_call.1} parent=39 // pred_check
          %p338 = pneg %p75
        $region46: #{tpu_custom_call.1} parent=39 // pred_check_branch
          %340 = sbr.rel (%p338) target = $region48
        $region47: #{tpu_custom_call.1} parent=39 // pred_region
          %s341 = sand.u32 %s29, 1
          %s342 = scalar_lea.sflag [#allocation6], %s341
          %s343 = sand.u32 %s65, 1
          %s344 = smul.addr %s343, 256
          %s345 = scalar_lea.vmem [#allocation5], %s344
          %s346 = smul.u32 4, %s29
          %s348 = ssub.s32 4096, 4096
          %349 = vsyncadd %s342, %s348
          %s350 = smul.addr %s346, 8
          %s351 = smul.addr %s350, 128
          %s352 = scalar_lea.hbm %s1, %s351
          %s353 = sshll.u32 %s345, 4
          %s354 = int_to_ptr.vmem [resolvable:$true] %s353
          %359 = dma.hbm_to_vmem [thread:$0]  %s352, 4096, %s354, %s342, 256, 256, 16
        $region48: #{tpu_custom_call.1} parent=39 // pred_fallthru
          _
      $region40: #{tpu_custom_call.1} parent=5 // pred_fallthru
        _
      %p360 = scmp.le.s32.totalorder 1, %s29
      %p361 = scmp.lt.s32.totalorder %s29, 3
      %p362 = pnand %p360, %p361
      %p363 = pneg %p362
      // Predicated region
      $region49: #{tpu_custom_call.1} parent=5 // pred_check
        _
      $region50: #{tpu_custom_call.1} parent=5 // pred_check_branch
        %365 = sbr.rel (%p362) target = $region52
      $region51: #{tpu_custom_call.1} parent=5 // pred_region
        %s366 = ssub.s32 %s29, 1
        %s367 = sand.u32 %s42, 1
        %s368 = scalar_lea.sflag [#allocation3], %s367
        %s369 = sand.u32 %s42, 1
        %s370 = smul.addr %s369, 256
        %s371 = scalar_lea.vmem [#allocation2], %s370
        // Predicated region
        $region53: #{tpu_custom_call.1} parent=51 // pred_check
          %p372 = pneg %p55
        $region54: #{tpu_custom_call.1} parent=51 // pred_check_branch
          %374 = sbr.rel (%p372) target = $region56
        $region55: #{tpu_custom_call.1} parent=51 // pred_region
          %375 = dma.done %s368, 4096
        $region56: #{tpu_custom_call.1} parent=51 // pred_fallthru
          _
        %s376 = sand.u32 %s34, 1
        %s377 = scalar_lea.sflag [#allocation6], %s376
        %s378 = sand.u32 %s68, 1
        %s379 = smul.addr %s378, 256
        %s380 = scalar_lea.vmem [#allocation5], %s379
        // Predicated region
        $region57: #{tpu_custom_call.1} parent=51 // pred_check
          %p381 = pneg %p81
        $region58: #{tpu_custom_call.1} parent=51 // pred_check_branch
          %383 = sbr.rel (%p381) target = $region60
        $region59: #{tpu_custom_call.1} parent=51 // pred_region
          %384 = dma.done %s377, 4096
        $region60: #{tpu_custom_call.1} parent=51 // pred_fallthru
          _
        // Predicated region
        $region61: #{tpu_custom_call.1} parent=51 // pred_check
          %p385 = pneg %p102
        $region62: #{tpu_custom_call.1} parent=51 // pred_check_branch
          %387 = sbr.rel (%p385) target = $region64
        $region63: #{tpu_custom_call.1} parent=51 // pred_region
          %388 = dma.done [#allocation6], 8192
        $region64: #{tpu_custom_call.1} parent=51 // pred_fallthru
          _
        // Predicated region
        $region65: #{tpu_custom_call.1} parent=51 // pred_check
          %p389 = pneg %p144
        $region66: #{tpu_custom_call.1} parent=51 // pred_check_branch
          %391 = sbr.rel (%p389) target = $region68
        $region67: #{tpu_custom_call.1} parent=51 // pred_region
          %392 = dma.done [#allocation9], 4096
        $region68: #{tpu_custom_call.1} parent=51 // pred_fallthru
          _
        %s393 = sand.u32 %s42, 1
        %s394 = scalar_lea.sflag [#allocation3], %s393
        %s395 = sand.u32 %s42, 1
        %s396 = smul.addr %s395, 256
        %s397 = scalar_lea.vmem [#allocation2], %s396
        %p398 = pneg %p55
        %p399 = pneg %p52
        %s400 = sand.u32 %s34, 1
        %s401 = scalar_lea.sflag [#allocation6], %s400
        %s402 = sand.u32 %s68, 1
        %s403 = smul.addr %s402, 256
        %s404 = scalar_lea.vmem [#allocation5], %s403
        %p405 = pneg %p81
        %p406 = pneg %p78
        %p407 = pneg %p102
        %p408 = pneg %p99
        %p409 = pneg %p123
        %p410 = pneg %p120
        %p411 = pneg %p144
        %p412 = pneg %p141
        %p413 = pneg %p165
        %p414 = pneg %p162
        %p415 = pneg %p186
        %p416 = pneg %p183
        %p417 = pneg %p207
        %p418 = pneg %p204
        %p419 = pneg %p233
        %p420 = pneg %p230
        %s421 = sand.u32 %s220, 1
        %s422 = scalar_lea.sflag [#allocation4], %s421
        %s423 = sand.u32 %s220, 1
        %s424 = smul.addr %s423, 256
        %s425 = scalar_lea.vmem [#allocation10], %s424
        %p426 = pneg %p259
        %p427 = pneg %p256
        %s428 = sand.u32 %s246, 1
        %s429 = scalar_lea.sflag [#allocation12], %s428
        %s430 = sand.u32 %s246, 1
        %s431 = smul.addr %s430, 256
        %s432 = scalar_lea.vmem [#allocation11], %s431
        %s433 = smul.u32 4, %s34
        %s434 = smul.u32 4, %s34
        %s435 = smul.u32 4, %s34
        %s436 = smul.u32 4, %s34
        %v438 = vld [vmem:[%s371] sm:$0xff]
        %v439 = vld [vmem:[%s371 + $0x8] sm:$0xff]
        %v440 = vld [vmem:[%s371 + $0x10] sm:$0xff]
        %v441 = vld [vmem:[%s371 + $0x18] sm:$0xff]
        %v442 = vld [vmem:[%s371 + $0x20] sm:$0xff]
        %v443 = vld [vmem:[%s371 + $0x28] sm:$0xff]
        %v444 = vld [vmem:[%s371 + $0x30] sm:$0xff]
        %v445 = vld [vmem:[%s371 + $0x38] sm:$0xff]
        %v446 = vld [vmem:[%s371 + $0x40] sm:$0xff]
        %v447 = vld [vmem:[%s371 + $0x48] sm:$0xff]
        %v448 = vld [vmem:[%s371 + $0x50] sm:$0xff]
        %v449 = vld [vmem:[%s371 + $0x58] sm:$0xff]
        %v450 = vld [vmem:[%s371 + $0x60] sm:$0xff]
        %v451 = vld [vmem:[%s371 + $0x68] sm:$0xff]
        %v452 = vld [vmem:[%s371 + $0x70] sm:$0xff]
        %v453 = vld [vmem:[%s371 + $0x78] sm:$0xff]
        %v454 = vld [vmem:[%s371 + $0x80] sm:$0xff]
        %v455 = vld [vmem:[%s371 + $0x88] sm:$0xff]
        %v456 = vld [vmem:[%s371 + $0x90] sm:$0xff]
        %v457 = vld [vmem:[%s371 + $0x98] sm:$0xff]
        %v458 = vld [vmem:[%s371 + $0xa0] sm:$0xff]
        %v459 = vld [vmem:[%s371 + $0xa8] sm:$0xff]
        %v460 = vld [vmem:[%s371 + $0xb0] sm:$0xff]
        %v461 = vld [vmem:[%s371 + $0xb8] sm:$0xff]
        %v462 = vld [vmem:[%s371 + $0xc0] sm:$0xff]
        %v463 = vld [vmem:[%s371 + $0xc8] sm:$0xff]
        %v464 = vld [vmem:[%s371 + $0xd0] sm:$0xff]
        %v465 = vld [vmem:[%s371 + $0xd8] sm:$0xff]
        %v466 = vld [vmem:[%s371 + $0xe0] sm:$0xff]
        %v467 = vld [vmem:[%s371 + $0xe8] sm:$0xff]
        %v468 = vld [vmem:[%s371 + $0xf0] sm:$0xff]
        %v469 = vld [vmem:[%s371 + $0xf8] sm:$0xff]
        %v470 = vld [vmem:[%s380] sm:$0xff]
        %v471 = vld [vmem:[%s380 + $0x8] sm:$0xff]
        %v472 = vld [vmem:[%s380 + $0x10] sm:$0xff]
        %v473 = vld [vmem:[%s380 + $0x18] sm:$0xff]
        %v474 = vld [vmem:[%s380 + $0x20] sm:$0xff]
        %v475 = vld [vmem:[%s380 + $0x28] sm:$0xff]
        %v476 = vld [vmem:[%s380 + $0x30] sm:$0xff]
        %v477 = vld [vmem:[%s380 + $0x38] sm:$0xff]
        %v478 = vld [vmem:[%s380 + $0x40] sm:$0xff]
        %v479 = vld [vmem:[%s380 + $0x48] sm:$0xff]
        %v480 = vld [vmem:[%s380 + $0x50] sm:$0xff]
        %v481 = vld [vmem:[%s380 + $0x58] sm:$0xff]
        %v482 = vld [vmem:[%s380 + $0x60] sm:$0xff]
        %v483 = vld [vmem:[%s380 + $0x68] sm:$0xff]
        %v484 = vld [vmem:[%s380 + $0x70] sm:$0xff]
        %v485 = vld [vmem:[%s380 + $0x78] sm:$0xff]
        %v486 = vld [vmem:[%s380 + $0x80] sm:$0xff]
        %v487 = vld [vmem:[%s380 + $0x88] sm:$0xff]
        %v488 = vld [vmem:[%s380 + $0x90] sm:$0xff]
        %v489 = vld [vmem:[%s380 + $0x98] sm:$0xff]
        %v490 = vld [vmem:[%s380 + $0xa0] sm:$0xff]
        %v491 = vld [vmem:[%s380 + $0xa8] sm:$0xff]
        %v492 = vld [vmem:[%s380 + $0xb0] sm:$0xff]
        %v493 = vld [vmem:[%s380 + $0xb8] sm:$0xff]
        %v494 = vld [vmem:[%s380 + $0xc0] sm:$0xff]
        %v495 = vld [vmem:[%s380 + $0xc8] sm:$0xff]
        %v496 = vld [vmem:[%s380 + $0xd0] sm:$0xff]
        %v497 = vld [vmem:[%s380 + $0xd8] sm:$0xff]
        %v498 = vld [vmem:[%s380 + $0xe0] sm:$0xff]
        %v499 = vld [vmem:[%s380 + $0xe8] sm:$0xff]
        %v500 = vld [vmem:[%s380 + $0xf0] sm:$0xff]
        %v501 = vld [vmem:[%s380 + $0xf8] sm:$0xff]
        %v502 = vpack.c.bf16 %v440, %v438
        %v503 = vpack.c.bf16 %v441, %v439
        %v504 = vpack.c.bf16 %v444, %v442
        %v505 = vpack.c.bf16 %v445, %v443
        %v506 = vpack.c.bf16 %v472, %v470
        %v507 = vpack.c.bf16 %v473, %v471
        %v508 = vpack.c.bf16 %v476, %v474
        %v509 = vpack.c.bf16 %v477, %v475
        %v510 = vpack.c.bf16 %v448, %v446
        %v511 = vpack.c.bf16 %v449, %v447
        %v512 = vpack.c.bf16 %v452, %v450
        %v513 = vpack.c.bf16 %v453, %v451
        %v514 = vpack.c.bf16 %v480, %v478
        %v515 = vpack.c.bf16 %v481, %v479
        %v516 = vpack.c.bf16 %v484, %v482
        %v517 = vpack.c.bf16 %v485, %v483
        %v518 = vpack.c.bf16 %v456, %v454
        %v519 = vpack.c.bf16 %v457, %v455
        %v520 = vpack.c.bf16 %v460, %v458
        %v521 = vpack.c.bf16 %v461, %v459
        %v522 = vpack.c.bf16 %v488, %v486
        %v523 = vpack.c.bf16 %v489, %v487
        %v524 = vpack.c.bf16 %v492, %v490
        %v525 = vpack.c.bf16 %v493, %v491
        %v526 = vpack.c.bf16 %v464, %v462
        %v527 = vpack.c.bf16 %v465, %v463
        %v528 = vpack.c.bf16 %v468, %v466
        %v529 = vpack.c.bf16 %v469, %v467
        %v530 = vpack.c.bf16 %v496, %v494
        %v531 = vpack.c.bf16 %v497, %v495
        %v532 = vpack.c.bf16 %v500, %v498
        %v533 = vpack.c.bf16 %v501, %v499
        %v534 = vld [vmem:[#allocation7] sm:$0xff]
        %v535 = vld [vmem:[#allocation7 + $0x8] sm:$0xff]
        %v536 = vld [vmem:[#allocation7 + $0x10] sm:$0xff]
        %v537 = vld [vmem:[#allocation7 + $0x18] sm:$0xff]
        %v538 = vld [vmem:[#allocation7 + $0x20] sm:$0xff]
        %v539 = vld [vmem:[#allocation7 + $0x28] sm:$0xff]
        %v540 = vld [vmem:[#allocation7 + $0x30] sm:$0xff]
        %v541 = vld [vmem:[#allocation7 + $0x38] sm:$0xff]
        %v542 = vld [vmem:[#allocation7 + $0x40] sm:$0xff]
        %v543 = vld [vmem:[#allocation7 + $0x48] sm:$0xff]
        %v544 = vld [vmem:[#allocation7 + $0x50] sm:$0xff]
        %v545 = vld [vmem:[#allocation7 + $0x58] sm:$0xff]
        %v546 = vld [vmem:[#allocation7 + $0x60] sm:$0xff]
        %v547 = vld [vmem:[#allocation7 + $0x68] sm:$0xff]
        %v548 = vld [vmem:[#allocation7 + $0x70] sm:$0xff]
        %v549 = vld [vmem:[#allocation7 + $0x78] sm:$0xff]
        %v550 = vld [vmem:[#allocation7 + $0x80] sm:$0xff]
        %v551 = vld [vmem:[#allocation7 + $0x88] sm:$0xff]
        %v552 = vld [vmem:[#allocation7 + $0x90] sm:$0xff]
        %v553 = vld [vmem:[#allocation7 + $0x98] sm:$0xff]
        %v554 = vld [vmem:[#allocation7 + $0xa0] sm:$0xff]
        %v555 = vld [vmem:[#allocation7 + $0xa8] sm:$0xff]
        %v556 = vld [vmem:[#allocation7 + $0xb0] sm:$0xff]
        %v557 = vld [vmem:[#allocation7 + $0xb8] sm:$0xff]
        %v558 = vld [vmem:[#allocation7 + $0xc0] sm:$0xff]
        %v559 = vld [vmem:[#allocation7 + $0xc8] sm:$0xff]
        %v560 = vld [vmem:[#allocation7 + $0xd0] sm:$0xff]
        %v561 = vld [vmem:[#allocation7 + $0xd8] sm:$0xff]
        %v562 = vld [vmem:[#allocation7 + $0xe0] sm:$0xff]
        %v563 = vld [vmem:[#allocation7 + $0xe8] sm:$0xff]
        %v564 = vld [vmem:[#allocation7 + $0xf0] sm:$0xff]
        %v565 = vld [vmem:[#allocation7 + $0xf8] sm:$0xff]
        %v566 = vld [vmem:[#allocation7 + $0x100] sm:$0xff]
        %v567 = vld [vmem:[#allocation7 + $0x108] sm:$0xff]
        %v568 = vld [vmem:[#allocation7 + $0x110] sm:$0xff]
        %v569 = vld [vmem:[#allocation7 + $0x118] sm:$0xff]
        %v570 = vld [vmem:[#allocation7 + $0x120] sm:$0xff]
        %v571 = vld [vmem:[#allocation7 + $0x128] sm:$0xff]
        %v572 = vld [vmem:[#allocation7 + $0x130] sm:$0xff]
        %v573 = vld [vmem:[#allocation7 + $0x138] sm:$0xff]
        %v574 = vld [vmem:[#allocation7 + $0x140] sm:$0xff]
        %v575 = vld [vmem:[#allocation7 + $0x148] sm:$0xff]
        %v576 = vld [vmem:[#allocation7 + $0x150] sm:$0xff]
        %v577 = vld [vmem:[#allocation7 + $0x158] sm:$0xff]
        %v578 = vld [vmem:[#allocation7 + $0x160] sm:$0xff]
        %v579 = vld [vmem:[#allocation7 + $0x168] sm:$0xff]
        %v580 = vld [vmem:[#allocation7 + $0x170] sm:$0xff]
        %v581 = vld [vmem:[#allocation7 + $0x178] sm:$0xff]
        %v582 = vld [vmem:[#allocation7 + $0x180] sm:$0xff]
        %v583 = vld [vmem:[#allocation7 + $0x188] sm:$0xff]
        %v584 = vld [vmem:[#allocation7 + $0x190] sm:$0xff]
        %v585 = vld [vmem:[#allocation7 + $0x198] sm:$0xff]
        %v586 = vld [vmem:[#allocation7 + $0x1a0] sm:$0xff]
        %v587 = vld [vmem:[#allocation7 + $0x1a8] sm:$0xff]
        %v588 = vld [vmem:[#allocation7 + $0x1b0] sm:$0xff]
        %v589 = vld [vmem:[#allocation7 + $0x1b8] sm:$0xff]
        %v590 = vld [vmem:[#allocation7 + $0x1c0] sm:$0xff]
        %v591 = vld [vmem:[#allocation7 + $0x1c8] sm:$0xff]
        %v592 = vld [vmem:[#allocation7 + $0x1d0] sm:$0xff]
        %v593 = vld [vmem:[#allocation7 + $0x1d8] sm:$0xff]
        %v594 = vld [vmem:[#allocation7 + $0x1e0] sm:$0xff]
        %v595 = vld [vmem:[#allocation7 + $0x1e8] sm:$0xff]
        %v596 = vld [vmem:[#allocation7 + $0x1f0] sm:$0xff]
        %v597 = vld [vmem:[#allocation7 + $0x1f8] sm:$0xff]
        %v598 = vld [vmem:[%s3] sm:$0xf]
        %v600 = vlaneseq
        %v601 = vshrl.u32 %v600, 7
        %v602 = vsub.s32 0, %v601
        %v603 = vrot.slane %v598, %v602
        %v604 = vlaneseq
        %v605 = vshrl.u32 %v604, 7
        %v606 = vsub.s32 1, %v605
        %v607 = vrot.slane %v598, %v606
        %v608 = vlaneseq
        %v609 = vshrl.u32 %v608, 7
        %v610 = vsub.s32 2, %v609
        %v611 = vrot.slane %v598, %v610
        %v612 = vlaneseq
        %v613 = vshrl.u32 %v612, 7
        %v614 = vsub.s32 3, %v613
        %v615 = vrot.slane %v598, %v614
        %v684 = vunpack.c.l.b16 %v534
        %v685 = vunpack.c.h.b16 %v534
        %v686 = vunpack.c.l.b16 %v535
        %v687 = vunpack.c.h.b16 %v535
        %v688 = vunpack.c.l.b16 %v536
        %v689 = vunpack.c.h.b16 %v536
        %v690 = vunpack.c.l.b16 %v537
        %v691 = vunpack.c.h.b16 %v537
        %v692 = vunpack.c.l.b16 %v538
        %v693 = vunpack.c.h.b16 %v538
        %v694 = vunpack.c.l.b16 %v539
        %v695 = vunpack.c.h.b16 %v539
        %v696 = vunpack.c.l.b16 %v540
        %v697 = vunpack.c.h.b16 %v540
        %v698 = vunpack.c.l.b16 %v541
        %v699 = vunpack.c.h.b16 %v541
        %v700 = vunpack.c.l.b16 %v542
        %v701 = vunpack.c.h.b16 %v542
        %v702 = vunpack.c.l.b16 %v543
        %v703 = vunpack.c.h.b16 %v543
        %v704 = vunpack.c.l.b16 %v544
        %v705 = vunpack.c.h.b16 %v544
        %v706 = vunpack.c.l.b16 %v545
        %v707 = vunpack.c.h.b16 %v545
        %v708 = vunpack.c.l.b16 %v546
        %v709 = vunpack.c.h.b16 %v546
        %v710 = vunpack.c.l.b16 %v547
        %v711 = vunpack.c.h.b16 %v547
        %v712 = vunpack.c.l.b16 %v548
        %v713 = vunpack.c.h.b16 %v548
        %v714 = vunpack.c.l.b16 %v549
        %v715 = vunpack.c.h.b16 %v549
        %v716 = vunpack.c.l.b16 %v550
        %v717 = vunpack.c.h.b16 %v550
        %v718 = vunpack.c.l.b16 %v551
        %v719 = vunpack.c.h.b16 %v551
        %v720 = vunpack.c.l.b16 %v552
        %v721 = vunpack.c.h.b16 %v552
        %v722 = vunpack.c.l.b16 %v553
        %v723 = vunpack.c.h.b16 %v553
        %v724 = vunpack.c.l.b16 %v554
        %v725 = vunpack.c.h.b16 %v554
        %v726 = vunpack.c.l.b16 %v555
        %v727 = vunpack.c.h.b16 %v555
        %v728 = vunpack.c.l.b16 %v556
        %v729 = vunpack.c.h.b16 %v556
        %v730 = vunpack.c.l.b16 %v557
        %v731 = vunpack.c.h.b16 %v557
        %v732 = vunpack.c.l.b16 %v558
        %v733 = vunpack.c.h.b16 %v558
        %v734 = vunpack.c.l.b16 %v559
        %v735 = vunpack.c.h.b16 %v559
        %v736 = vunpack.c.l.b16 %v560
        %v737 = vunpack.c.h.b16 %v560
        %v738 = vunpack.c.l.b16 %v561
        %v739 = vunpack.c.h.b16 %v561
        %v740 = vunpack.c.l.b16 %v562
        %v741 = vunpack.c.h.b16 %v562
        %v742 = vunpack.c.l.b16 %v563
        %v743 = vunpack.c.h.b16 %v563
        %v744 = vunpack.c.l.b16 %v564
        %v745 = vunpack.c.h.b16 %v564
        %v746 = vunpack.c.l.b16 %v565
        %v747 = vunpack.c.h.b16 %v565
        %v748 = vunpack.c.l.b16 %v566
        %v749 = vunpack.c.h.b16 %v566
        %v750 = vunpack.c.l.b16 %v567
        %v751 = vunpack.c.h.b16 %v567
        %v752 = vunpack.c.l.b16 %v568
        %v753 = vunpack.c.h.b16 %v568
        %v754 = vunpack.c.l.b16 %v569
        %v755 = vunpack.c.h.b16 %v569
        %v756 = vunpack.c.l.b16 %v570
        %v757 = vunpack.c.h.b16 %v570
        %v758 = vunpack.c.l.b16 %v571
        %v759 = vunpack.c.h.b16 %v571
        %v760 = vunpack.c.l.b16 %v572
        %v761 = vunpack.c.h.b16 %v572
        %v762 = vunpack.c.l.b16 %v573
        %v763 = vunpack.c.h.b16 %v573
        %v764 = vunpack.c.l.b16 %v574
        %v765 = vunpack.c.h.b16 %v574
        %v766 = vunpack.c.l.b16 %v575
        %v767 = vunpack.c.h.b16 %v575
        %v768 = vunpack.c.l.b16 %v576
        %v769 = vunpack.c.h.b16 %v576
        %v770 = vunpack.c.l.b16 %v577
        %v771 = vunpack.c.h.b16 %v577
        %v772 = vunpack.c.l.b16 %v578
        %v773 = vunpack.c.h.b16 %v578
        %v774 = vunpack.c.l.b16 %v579
        %v775 = vunpack.c.h.b16 %v579
        %v776 = vunpack.c.l.b16 %v580
        %v777 = vunpack.c.h.b16 %v580
        %v778 = vunpack.c.l.b16 %v581
        %v779 = vunpack.c.h.b16 %v581
        %v780 = vunpack.c.l.b16 %v582
        %v781 = vunpack.c.h.b16 %v582
        %v782 = vunpack.c.l.b16 %v583
        %v783 = vunpack.c.h.b16 %v583
        %v784 = vunpack.c.l.b16 %v584
        %v785 = vunpack.c.h.b16 %v584
        %v786 = vunpack.c.l.b16 %v585
        %v787 = vunpack.c.h.b16 %v585
        %v788 = vunpack.c.l.b16 %v586
        %v789 = vunpack.c.h.b16 %v586
        %v790 = vunpack.c.l.b16 %v587
        %v791 = vunpack.c.h.b16 %v587
        %v792 = vunpack.c.l.b16 %v588
        %v793 = vunpack.c.h.b16 %v588
        %v794 = vunpack.c.l.b16 %v589
        %v795 = vunpack.c.h.b16 %v589
        %v796 = vunpack.c.l.b16 %v590
        %v797 = vunpack.c.h.b16 %v590
        %v798 = vunpack.c.l.b16 %v591
        %v799 = vunpack.c.h.b16 %v591
        %v800 = vunpack.c.l.b16 %v592
        %v801 = vunpack.c.h.b16 %v592
        %v802 = vunpack.c.l.b16 %v593
        %v803 = vunpack.c.h.b16 %v593
        %v804 = vunpack.c.l.b16 %v594
        %v805 = vunpack.c.h.b16 %v594
        %v806 = vunpack.c.l.b16 %v595
        %v807 = vunpack.c.h.b16 %v595
        %v808 = vunpack.c.l.b16 %v596
        %v809 = vunpack.c.h.b16 %v596
        %v810 = vunpack.c.l.b16 %v597
        %v811 = vunpack.c.h.b16 %v597
        %v812 = vpack.c.b16 %v688, %v684
        %v813 = vpack.c.b16 %v689, %v685
        %v814 = vpack.c.b16 %v690, %v686
        %v815 = vpack.c.b16 %v691, %v687
        %v816 = vpack.c.b16 %v696, %v692
        %v817 = vpack.c.b16 %v697, %v693
        %v818 = vpack.c.b16 %v698, %v694
        %v819 = vpack.c.b16 %v699, %v695
        %v820 = vpack.c.b16 %v704, %v700
        %v821 = vpack.c.b16 %v705, %v701
        %v822 = vpack.c.b16 %v706, %v702
        %v823 = vpack.c.b16 %v707, %v703
        %v824 = vpack.c.b16 %v712, %v708
        %v825 = vpack.c.b16 %v713, %v709
        %v826 = vpack.c.b16 %v714, %v710
        %v827 = vpack.c.b16 %v715, %v711
        %v828 = vpack.c.b16 %v720, %v716
        %v829 = vpack.c.b16 %v721, %v717
        %v830 = vpack.c.b16 %v722, %v718
        %v831 = vpack.c.b16 %v723, %v719
        %v832 = vpack.c.b16 %v728, %v724
        %v833 = vpack.c.b16 %v729, %v725
        %v834 = vpack.c.b16 %v730, %v726
        %v835 = vpack.c.b16 %v731, %v727
        %v836 = vpack.c.b16 %v736, %v732
        %v837 = vpack.c.b16 %v737, %v733
        %v838 = vpack.c.b16 %v738, %v734
        %v839 = vpack.c.b16 %v739, %v735
        %v840 = vpack.c.b16 %v744, %v740
        %v841 = vpack.c.b16 %v745, %v741
        %v842 = vpack.c.b16 %v746, %v742
        %v843 = vpack.c.b16 %v747, %v743
        %v844 = vpack.c.b16 %v752, %v748
        %v845 = vpack.c.b16 %v753, %v749
        %v846 = vpack.c.b16 %v754, %v750
        %v847 = vpack.c.b16 %v755, %v751
        %v848 = vpack.c.b16 %v760, %v756
        %v849 = vpack.c.b16 %v761, %v757
        %v850 = vpack.c.b16 %v762, %v758
        %v851 = vpack.c.b16 %v763, %v759
        %v852 = vpack.c.b16 %v768, %v764
        %v853 = vpack.c.b16 %v769, %v765
        %v854 = vpack.c.b16 %v770, %v766
        %v855 = vpack.c.b16 %v771, %v767
        %v856 = vpack.c.b16 %v776, %v772
        %v857 = vpack.c.b16 %v777, %v773
        %v858 = vpack.c.b16 %v778, %v774
        %v859 = vpack.c.b16 %v779, %v775
        %v860 = vpack.c.b16 %v784, %v780
        %v861 = vpack.c.b16 %v785, %v781
        %v862 = vpack.c.b16 %v786, %v782
        %v863 = vpack.c.b16 %v787, %v783
        %v864 = vpack.c.b16 %v792, %v788
        %v865 = vpack.c.b16 %v793, %v789
        %v866 = vpack.c.b16 %v794, %v790
        %v867 = vpack.c.b16 %v795, %v791
        %v868 = vpack.c.b16 %v800, %v796
        %v869 = vpack.c.b16 %v801, %v797
        %v870 = vpack.c.b16 %v802, %v798
        %v871 = vpack.c.b16 %v803, %v799
        %v872 = vpack.c.b16 %v808, %v804
        %v873 = vpack.c.b16 %v809, %v805
        %v874 = vpack.c.b16 %v810, %v806
        %v875 = vpack.c.b16 %v811, %v807
        %940 = vmatprep.subr.bf16.mxu0 %v841
        %941 = vmatpush1.bf16.msra.mxu0 %v840
        %942 = vmatprep.subr.bf16.mxu0 %v837
        %943 = vmatpush1.bf16.msra.mxu0 %v836
        %944 = vmatprep.subr.bf16.mxu0 %v833
        %945 = vmatpush1.bf16.msra.mxu0 %v832
        %946 = vmatprep.subr.bf16.mxu0 %v829
        %947 = vmatpush1.bf16.msra.mxu0 %v828
        %948 = vmatprep.subr.bf16.mxu0 %v825
        %949 = vmatpush1.bf16.msra.mxu0 %v824
        %950 = vmatprep.subr.bf16.mxu0 %v821
        %951 = vmatpush1.bf16.msra.mxu0 %v820
        %952 = vmatprep.subr.bf16.mxu0 %v817
        %953 = vmatpush1.bf16.msra.mxu0 %v816
        %954 = vmatprep.subr.bf16.mxu0 %v813
        %955 = vmatpush1.bf16.msra.mxu0 %v812
        %956 = vmatprep.subr.bf16.mxu0 %v873
        %957 = vmatpush2.bf16.msra.mxu0 %v872
        %958 = vmatprep.subr.bf16.mxu0 %v869
        %959 = vmatpush2.bf16.msra.mxu0 %v868
        %960 = vmatprep.subr.bf16.mxu0 %v865
        %961 = vmatpush2.bf16.msra.mxu0 %v864
        %962 = vmatprep.subr.bf16.mxu0 %v861
        %963 = vmatpush2.bf16.msra.mxu0 %v860
        %964 = vmatprep.subr.bf16.mxu0 %v857
        %965 = vmatpush2.bf16.msra.mxu0 %v856
        %966 = vmatprep.subr.bf16.mxu0 %v853
        %967 = vmatpush2.bf16.msra.mxu0 %v852
        %968 = vmatprep.subr.bf16.mxu0 %v849
        %969 = vmatpush2.bf16.msra.mxu0 %v848
        %970 = vmatprep.subr.bf16.mxu0 %v845
        %971 = vmatpush2.bf16.msra.mxu0 %v844
        %972 = vmatprep.mubr.bf16.mxu0 %v503
        %973 = vmatmul.mubr.bf16.gmra.mxu0 %v502
        %v974 = vpop.f32.mrf.mxu0
        %v975 = vadd.f32 %v603, %v974
        %v976 = vpop.f32.mrf.mxu0
        %v977 = vadd.f32 %v607, %v976
        %v978 = vpop.f32.mrf.mxu0
        %v979 = vadd.f32 %v603, %v978
        %v980 = vpop.f32.mrf.mxu0
        %v981 = vadd.f32 %v607, %v980
        %982 = vmatprep.mubr.bf16.mxu0 %v505
        %983 = vmatmul.mubr.bf16.gmra.mxu0 %v504
        %v984 = vpop.f32.mrf.mxu0
        %v985 = vadd.f32 %v603, %v984
        %v986 = vpop.f32.mrf.mxu0
        %v987 = vadd.f32 %v607, %v986
        %v988 = vpop.f32.mrf.mxu0
        %v989 = vadd.f32 %v603, %v988
        %v990 = vpop.f32.mrf.mxu0
        %v991 = vadd.f32 %v607, %v990
        %992 = vmatprep.mubr.bf16.mxu0 %v507
        %993 = vmatmul.mubr.bf16.gmra.mxu0 %v506
        %v994 = vpop.f32.mrf.mxu0
        %v995 = vadd.f32 %v603, %v994
        %v996 = vpop.f32.mrf.mxu0
        %v997 = vadd.f32 %v607, %v996
        %v998 = vpop.f32.mrf.mxu0
        %v999 = vadd.f32 %v603, %v998
        %v1000 = vpop.f32.mrf.mxu0
        %v1001 = vadd.f32 %v607, %v1000
        %1002 = vmatprep.mubr.bf16.mxu0 %v509
        %1003 = vmatmul.mubr.bf16.gmra.mxu0 %v508
        %v1004 = vpop.f32.mrf.mxu0
        %v1005 = vadd.f32 %v603, %v1004
        %v1006 = vpop.f32.mrf.mxu0
        %v1007 = vadd.f32 %v607, %v1006
        %v1008 = vpop.f32.mrf.mxu0
        %v1009 = vadd.f32 %v603, %v1008
        %v1010 = vpop.f32.mrf.mxu0
        %v1011 = vadd.f32 %v607, %v1010
        %1012 = vmatprep.mubr.bf16.mxu0 %v511
        %1013 = vmatmul.mubr.bf16.gmra.mxu0 %v510
        %v1014 = vpop.f32.mrf.mxu0
        %v1015 = vadd.f32 %v603, %v1014
        %v1016 = vpop.f32.mrf.mxu0
        %v1017 = vadd.f32 %v607, %v1016
        %v1018 = vpop.f32.mrf.mxu0
        %v1019 = vadd.f32 %v603, %v1018
        %v1020 = vpop.f32.mrf.mxu0
        %v1021 = vadd.f32 %v607, %v1020
        %1022 = vmatprep.mubr.bf16.mxu0 %v513
        %1023 = vmatmul.mubr.bf16.gmra.mxu0 %v512
        %v1024 = vpop.f32.mrf.mxu0
        %v1025 = vadd.f32 %v603, %v1024
        %v1026 = vpop.f32.mrf.mxu0
        %v1027 = vadd.f32 %v607, %v1026
        %v1028 = vpop.f32.mrf.mxu0
        %v1029 = vadd.f32 %v603, %v1028
        %v1030 = vpop.f32.mrf.mxu0
        %v1031 = vadd.f32 %v607, %v1030
        %1032 = vmatprep.mubr.bf16.mxu0 %v515
        %1033 = vmatmul.mubr.bf16.gmra.mxu0 %v514
        %v1034 = vpop.f32.mrf.mxu0
        %v1035 = vadd.f32 %v603, %v1034
        %v1036 = vpop.f32.mrf.mxu0
        %v1037 = vadd.f32 %v607, %v1036
        %v1038 = vpop.f32.mrf.mxu0
        %v1039 = vadd.f32 %v603, %v1038
        %v1040 = vpop.f32.mrf.mxu0
        %v1041 = vadd.f32 %v607, %v1040
        %1042 = vmatprep.mubr.bf16.mxu0 %v517
        %1043 = vmatmul.mubr.bf16.gmra.mxu0 %v516
        %v1044 = vpop.f32.mrf.mxu0
        %v1045 = vadd.f32 %v603, %v1044
        %v1046 = vpop.f32.mrf.mxu0
        %v1047 = vadd.f32 %v607, %v1046
        %v1048 = vpop.f32.mrf.mxu0
        %v1049 = vadd.f32 %v603, %v1048
        %v1050 = vpop.f32.mrf.mxu0
        %v1051 = vadd.f32 %v607, %v1050
        %1052 = vmatprep.mubr.bf16.mxu0 %v519
        %1053 = vmatmul.mubr.bf16.gmra.mxu0 %v518
        %v1054 = vpop.f32.mrf.mxu0
        %v1055 = vadd.f32 %v603, %v1054
        %v1056 = vpop.f32.mrf.mxu0
        %v1057 = vadd.f32 %v607, %v1056
        %v1058 = vpop.f32.mrf.mxu0
        %v1059 = vadd.f32 %v603, %v1058
        %v1060 = vpop.f32.mrf.mxu0
        %v1061 = vadd.f32 %v607, %v1060
        %1062 = vmatprep.mubr.bf16.mxu0 %v521
        %1063 = vmatmul.mubr.bf16.gmra.mxu0 %v520
        %v1064 = vpop.f32.mrf.mxu0
        %v1065 = vadd.f32 %v603, %v1064
        %v1066 = vpop.f32.mrf.mxu0
        %v1067 = vadd.f32 %v607, %v1066
        %v1068 = vpop.f32.mrf.mxu0
        %v1069 = vadd.f32 %v603, %v1068
        %v1070 = vpop.f32.mrf.mxu0
        %v1071 = vadd.f32 %v607, %v1070
        %1072 = vmatprep.mubr.bf16.mxu0 %v523
        %1073 = vmatmul.mubr.bf16.gmra.mxu0 %v522
        %v1074 = vpop.f32.mrf.mxu0
        %v1075 = vadd.f32 %v603, %v1074
        %v1076 = vpop.f32.mrf.mxu0
        %v1077 = vadd.f32 %v607, %v1076
        %v1078 = vpop.f32.mrf.mxu0
        %v1079 = vadd.f32 %v603, %v1078
        %v1080 = vpop.f32.mrf.mxu0
        %v1081 = vadd.f32 %v607, %v1080
        %1082 = vmatprep.mubr.bf16.mxu0 %v525
        %1083 = vmatmul.mubr.bf16.gmra.mxu0 %v524
        %v1084 = vpop.f32.mrf.mxu0
        %v1085 = vadd.f32 %v603, %v1084
        %v1086 = vpop.f32.mrf.mxu0
        %v1087 = vadd.f32 %v607, %v1086
        %v1088 = vpop.f32.mrf.mxu0
        %v1089 = vadd.f32 %v603, %v1088
        %v1090 = vpop.f32.mrf.mxu0
        %v1091 = vadd.f32 %v607, %v1090
        %1092 = vmatprep.mubr.bf16.mxu0 %v527
        %1093 = vmatmul.mubr.bf16.gmra.mxu0 %v526
        %v1094 = vpop.f32.mrf.mxu0
        %v1095 = vadd.f32 %v603, %v1094
        %v1096 = vpop.f32.mrf.mxu0
        %v1097 = vadd.f32 %v607, %v1096
        %v1098 = vpop.f32.mrf.mxu0
        %v1099 = vadd.f32 %v603, %v1098
        %v1100 = vpop.f32.mrf.mxu0
        %v1101 = vadd.f32 %v607, %v1100
        %1102 = vmatprep.mubr.bf16.mxu0 %v529
        %1103 = vmatmul.mubr.bf16.gmra.mxu0 %v528
        %v1104 = vpop.f32.mrf.mxu0
        %v1105 = vadd.f32 %v603, %v1104
        %v1106 = vpop.f32.mrf.mxu0
        %v1107 = vadd.f32 %v607, %v1106
        %v1108 = vpop.f32.mrf.mxu0
        %v1109 = vadd.f32 %v603, %v1108
        %v1110 = vpop.f32.mrf.mxu0
        %v1111 = vadd.f32 %v607, %v1110
        %1112 = vmatprep.mubr.bf16.mxu0 %v531
        %1113 = vmatmul.mubr.bf16.gmra.mxu0 %v530
        %v1114 = vpop.f32.mrf.mxu0
        %v1115 = vadd.f32 %v603, %v1114
        %v1116 = vpop.f32.mrf.mxu0
        %v1117 = vadd.f32 %v607, %v1116
        %v1118 = vpop.f32.mrf.mxu0
        %v1119 = vadd.f32 %v603, %v1118
        %v1120 = vpop.f32.mrf.mxu0
        %v1121 = vadd.f32 %v607, %v1120
        %1122 = vmatprep.mubr.bf16.mxu0 %v533
        %1123 = vmatmul.mubr.bf16.gmra.mxu0 %v532
        %v1124 = vpop.f32.mrf.mxu0
        %v1125 = vadd.f32 %v603, %v1124
        %v1126 = vpop.f32.mrf.mxu0
        %v1127 = vadd.f32 %v607, %v1126
        %v1128 = vpop.f32.mrf.mxu0
        %v1129 = vadd.f32 %v603, %v1128
        %v1130 = vpop.f32.mrf.mxu0
        %v1131 = vadd.f32 %v607, %v1130
        %1132 = vdwg.mxu0
        %1133 = vmatprep.subr.bf16.mxu0 %v843
        %1134 = vmatpush1.bf16.msra.mxu0 %v842
        %1135 = vmatprep.subr.bf16.mxu0 %v839
        %1136 = vmatpush1.bf16.msra.mxu0 %v838
        %1137 = vmatprep.subr.bf16.mxu0 %v835
        %1138 = vmatpush1.bf16.msra.mxu0 %v834
        %1139 = vmatprep.subr.bf16.mxu0 %v831
        %1140 = vmatpush1.bf16.msra.mxu0 %v830
        %1141 = vmatprep.subr.bf16.mxu0 %v827
        %1142 = vmatpush1.bf16.msra.mxu0 %v826
        %1143 = vmatprep.subr.bf16.mxu0 %v823
        %1144 = vmatpush1.bf16.msra.mxu0 %v822
        %1145 = vmatprep.subr.bf16.mxu0 %v819
        %1146 = vmatpush1.bf16.msra.mxu0 %v818
        %1147 = vmatprep.subr.bf16.mxu0 %v815
        %1148 = vmatpush1.bf16.msra.mxu0 %v814
        %1149 = vmatprep.subr.bf16.mxu0 %v875
        %1150 = vmatpush2.bf16.msra.mxu0 %v874
        %1151 = vmatprep.subr.bf16.mxu0 %v871
        %1152 = vmatpush2.bf16.msra.mxu0 %v870
        %1153 = vmatprep.subr.bf16.mxu0 %v867
        %1154 = vmatpush2.bf16.msra.mxu0 %v866
        %1155 = vmatprep.subr.bf16.mxu0 %v863
        %1156 = vmatpush2.bf16.msra.mxu0 %v862
        %1157 = vmatprep.subr.bf16.mxu0 %v859
        %1158 = vmatpush2.bf16.msra.mxu0 %v858
        %1159 = vmatprep.subr.bf16.mxu0 %v855
        %1160 = vmatpush2.bf16.msra.mxu0 %v854
        %1161 = vmatprep.subr.bf16.mxu0 %v851
        %1162 = vmatpush2.bf16.msra.mxu0 %v850
        %1163 = vmatprep.subr.bf16.mxu0 %v847
        %1164 = vmatpush2.bf16.msra.mxu0 %v846
        %1165 = vmatprep.mubr.bf16.mxu0 %v503
        %1166 = vmatmul.mubr.bf16.gmra.mxu0 %v502
        %v1167 = vpop.f32.mrf.mxu0
        %v1168 = vadd.f32 %v611, %v1167
        %v1169 = vpop.f32.mrf.mxu0
        %v1170 = vadd.f32 %v615, %v1169
        %v1171 = vpop.f32.mrf.mxu0
        %v1172 = vadd.f32 %v611, %v1171
        %v1173 = vpop.f32.mrf.mxu0
        %v1174 = vadd.f32 %v615, %v1173
        %1175 = vmatprep.mubr.bf16.mxu0 %v505
        %1176 = vmatmul.mubr.bf16.gmra.mxu0 %v504
        %v1177 = vpop.f32.mrf.mxu0
        %v1178 = vadd.f32 %v611, %v1177
        %v1179 = vpop.f32.mrf.mxu0
        %v1180 = vadd.f32 %v615, %v1179
        %v1181 = vpop.f32.mrf.mxu0
        %v1182 = vadd.f32 %v611, %v1181
        %v1183 = vpop.f32.mrf.mxu0
        %v1184 = vadd.f32 %v615, %v1183
        %1185 = vmatprep.mubr.bf16.mxu0 %v507
        %1186 = vmatmul.mubr.bf16.gmra.mxu0 %v506
        %v1187 = vpop.f32.mrf.mxu0
        %v1188 = vadd.f32 %v611, %v1187
        %v1189 = vpop.f32.mrf.mxu0
        %v1190 = vadd.f32 %v615, %v1189
        %v1191 = vpop.f32.mrf.mxu0
        %v1192 = vadd.f32 %v611, %v1191
        %v1193 = vpop.f32.mrf.mxu0
        %v1194 = vadd.f32 %v615, %v1193
        %1195 = vmatprep.mubr.bf16.mxu0 %v509
        %1196 = vmatmul.mubr.bf16.gmra.mxu0 %v508
        %v1197 = vpop.f32.mrf.mxu0
        %v1198 = vadd.f32 %v611, %v1197
        %v1199 = vpop.f32.mrf.mxu0
        %v1200 = vadd.f32 %v615, %v1199
        %v1201 = vpop.f32.mrf.mxu0
        %v1202 = vadd.f32 %v611, %v1201
        %v1203 = vpop.f32.mrf.mxu0
        %v1204 = vadd.f32 %v615, %v1203
        %1205 = vmatprep.mubr.bf16.mxu0 %v511
        %1206 = vmatmul.mubr.bf16.gmra.mxu0 %v510
        %v1207 = vpop.f32.mrf.mxu0
        %v1208 = vadd.f32 %v611, %v1207
        %v1209 = vpop.f32.mrf.mxu0
        %v1210 = vadd.f32 %v615, %v1209
        %v1211 = vpop.f32.mrf.mxu0
        %v1212 = vadd.f32 %v611, %v1211
        %v1213 = vpop.f32.mrf.mxu0
        %v1214 = vadd.f32 %v615, %v1213
        %1215 = vmatprep.mubr.bf16.mxu0 %v513
        %1216 = vmatmul.mubr.bf16.gmra.mxu0 %v512
        %v1217 = vpop.f32.mrf.mxu0
        %v1218 = vadd.f32 %v611, %v1217
        %v1219 = vpop.f32.mrf.mxu0
        %v1220 = vadd.f32 %v615, %v1219
        %v1221 = vpop.f32.mrf.mxu0
        %v1222 = vadd.f32 %v611, %v1221
        %v1223 = vpop.f32.mrf.mxu0
        %v1224 = vadd.f32 %v615, %v1223
        %1225 = vmatprep.mubr.bf16.mxu0 %v515
        %1226 = vmatmul.mubr.bf16.gmra.mxu0 %v514
        %v1227 = vpop.f32.mrf.mxu0
        %v1228 = vadd.f32 %v611, %v1227
        %v1229 = vpop.f32.mrf.mxu0
        %v1230 = vadd.f32 %v615, %v1229
        %v1231 = vpop.f32.mrf.mxu0
        %v1232 = vadd.f32 %v611, %v1231
        %v1233 = vpop.f32.mrf.mxu0
        %v1234 = vadd.f32 %v615, %v1233
        %1235 = vmatprep.mubr.bf16.mxu0 %v517
        %1236 = vmatmul.mubr.bf16.gmra.mxu0 %v516
        %v1237 = vpop.f32.mrf.mxu0
        %v1238 = vadd.f32 %v611, %v1237
        %v1239 = vpop.f32.mrf.mxu0
        %v1240 = vadd.f32 %v615, %v1239
        %v1241 = vpop.f32.mrf.mxu0
        %v1242 = vadd.f32 %v611, %v1241
        %v1243 = vpop.f32.mrf.mxu0
        %v1244 = vadd.f32 %v615, %v1243
        %1245 = vmatprep.mubr.bf16.mxu0 %v519
        %1246 = vmatmul.mubr.bf16.gmra.mxu0 %v518
        %v1247 = vpop.f32.mrf.mxu0
        %v1248 = vadd.f32 %v611, %v1247
        %v1249 = vpop.f32.mrf.mxu0
        %v1250 = vadd.f32 %v615, %v1249
        %v1251 = vpop.f32.mrf.mxu0
        %v1252 = vadd.f32 %v611, %v1251
        %v1253 = vpop.f32.mrf.mxu0
        %v1254 = vadd.f32 %v615, %v1253
        %1255 = vmatprep.mubr.bf16.mxu0 %v521
        %1256 = vmatmul.mubr.bf16.gmra.mxu0 %v520
        %v1257 = vpop.f32.mrf.mxu0
        %v1258 = vadd.f32 %v611, %v1257
        %v1259 = vpop.f32.mrf.mxu0
        %v1260 = vadd.f32 %v615, %v1259
        %v1261 = vpop.f32.mrf.mxu0
        %v1262 = vadd.f32 %v611, %v1261
        %v1263 = vpop.f32.mrf.mxu0
        %v1264 = vadd.f32 %v615, %v1263
        %1265 = vmatprep.mubr.bf16.mxu0 %v523
        %1266 = vmatmul.mubr.bf16.gmra.mxu0 %v522
        %v1267 = vpop.f32.mrf.mxu0
        %v1268 = vadd.f32 %v611, %v1267
        %v1269 = vpop.f32.mrf.mxu0
        %v1270 = vadd.f32 %v615, %v1269
        %v1271 = vpop.f32.mrf.mxu0
        %v1272 = vadd.f32 %v611, %v1271
        %v1273 = vpop.f32.mrf.mxu0
        %v1274 = vadd.f32 %v615, %v1273
        %1275 = vmatprep.mubr.bf16.mxu0 %v525
        %1276 = vmatmul.mubr.bf16.gmra.mxu0 %v524
        %v1277 = vpop.f32.mrf.mxu0
        %v1278 = vadd.f32 %v611, %v1277
        %v1279 = vpop.f32.mrf.mxu0
        %v1280 = vadd.f32 %v615, %v1279
        %v1281 = vpop.f32.mrf.mxu0
        %v1282 = vadd.f32 %v611, %v1281
        %v1283 = vpop.f32.mrf.mxu0
        %v1284 = vadd.f32 %v615, %v1283
        %1285 = vmatprep.mubr.bf16.mxu0 %v527
        %1286 = vmatmul.mubr.bf16.gmra.mxu0 %v526
        %v1287 = vpop.f32.mrf.mxu0
        %v1288 = vadd.f32 %v611, %v1287
        %v1289 = vpop.f32.mrf.mxu0
        %v1290 = vadd.f32 %v615, %v1289
        %v1291 = vpop.f32.mrf.mxu0
        %v1292 = vadd.f32 %v611, %v1291
        %v1293 = vpop.f32.mrf.mxu0
        %v1294 = vadd.f32 %v615, %v1293
        %1295 = vmatprep.mubr.bf16.mxu0 %v529
        %1296 = vmatmul.mubr.bf16.gmra.mxu0 %v528
        %v1297 = vpop.f32.mrf.mxu0
        %v1298 = vadd.f32 %v611, %v1297
        %v1299 = vpop.f32.mrf.mxu0
        %v1300 = vadd.f32 %v615, %v1299
        %v1301 = vpop.f32.mrf.mxu0
        %v1302 = vadd.f32 %v611, %v1301
        %v1303 = vpop.f32.mrf.mxu0
        %v1304 = vadd.f32 %v615, %v1303
        %1305 = vmatprep.mubr.bf16.mxu0 %v531
        %1306 = vmatmul.mubr.bf16.gmra.mxu0 %v530
        %v1307 = vpop.f32.mrf.mxu0
        %v1308 = vadd.f32 %v611, %v1307
        %v1309 = vpop.f32.mrf.mxu0
        %v1310 = vadd.f32 %v615, %v1309
        %v1311 = vpop.f32.mrf.mxu0
        %v1312 = vadd.f32 %v611, %v1311
        %v1313 = vpop.f32.mrf.mxu0
        %v1314 = vadd.f32 %v615, %v1313
        %1315 = vmatprep.mubr.bf16.mxu0 %v533
        %1316 = vmatmul.mubr.bf16.gmra.mxu0 %v532
        %v1317 = vpop.f32.mrf.mxu0
        %v1318 = vadd.f32 %v611, %v1317
        %v1319 = vpop.f32.mrf.mxu0
        %v1320 = vadd.f32 %v615, %v1319
        %v1321 = vpop.f32.mrf.mxu0
        %v1322 = vadd.f32 %v611, %v1321
        %v1323 = vpop.f32.mrf.mxu0
        %v1324 = vadd.f32 %v615, %v1323
        %1325 = vdwg.mxu0
        %v1326 = vpack.c.bf16 %v979, %v975
        %v1327 = vpack.c.bf16 %v981, %v977
        %v1328 = vpack.c.bf16 %v989, %v985
        %v1329 = vpack.c.bf16 %v991, %v987
        %v1330 = vpack.c.bf16 %v999, %v995
        %v1331 = vpack.c.bf16 %v1001, %v997
        %v1332 = vpack.c.bf16 %v1009, %v1005
        %v1333 = vpack.c.bf16 %v1011, %v1007
        %v1334 = vpack.c.bf16 %v1019, %v1015
        %v1335 = vpack.c.bf16 %v1021, %v1017
        %v1336 = vpack.c.bf16 %v1029, %v1025
        %v1337 = vpack.c.bf16 %v1031, %v1027
        %v1338 = vpack.c.bf16 %v1039, %v1035
        %v1339 = vpack.c.bf16 %v1041, %v1037
        %v1340 = vpack.c.bf16 %v1049, %v1045
        %v1341 = vpack.c.bf16 %v1051, %v1047
        %v1342 = vpack.c.bf16 %v1059, %v1055
        %v1343 = vpack.c.bf16 %v1061, %v1057
        %v1344 = vpack.c.bf16 %v1069, %v1065
        %v1345 = vpack.c.bf16 %v1071, %v1067
        %v1346 = vpack.c.bf16 %v1079, %v1075
        %v1347 = vpack.c.bf16 %v1081, %v1077
        %v1348 = vpack.c.bf16 %v1089, %v1085
        %v1349 = vpack.c.bf16 %v1091, %v1087
        %v1350 = vpack.c.bf16 %v1099, %v1095
        %v1351 = vpack.c.bf16 %v1101, %v1097
        %v1352 = vpack.c.bf16 %v1109, %v1105
        %v1353 = vpack.c.bf16 %v1111, %v1107
        %v1354 = vpack.c.bf16 %v1119, %v1115
        %v1355 = vpack.c.bf16 %v1121, %v1117
        %v1356 = vpack.c.bf16 %v1129, %v1125
        %v1357 = vpack.c.bf16 %v1131, %v1127
        %v1358 = vpack.c.bf16 %v1172, %v1168
        %v1359 = vpack.c.bf16 %v1174, %v1170
        %v1360 = vpack.c.bf16 %v1182, %v1178
        %v1361 = vpack.c.bf16 %v1184, %v1180
        %v1362 = vpack.c.bf16 %v1192, %v1188
        %v1363 = vpack.c.bf16 %v1194, %v1190
        %v1364 = vpack.c.bf16 %v1202, %v1198
        %v1365 = vpack.c.bf16 %v1204, %v1200
        %v1366 = vpack.c.bf16 %v1212, %v1208
        %v1367 = vpack.c.bf16 %v1214, %v1210
        %v1368 = vpack.c.bf16 %v1222, %v1218
        %v1369 = vpack.c.bf16 %v1224, %v1220
        %v1370 = vpack.c.bf16 %v1232, %v1228
        %v1371 = vpack.c.bf16 %v1234, %v1230
        %v1372 = vpack.c.bf16 %v1242, %v1238
        %v1373 = vpack.c.bf16 %v1244, %v1240
        %v1374 = vpack.c.bf16 %v1252, %v1248
        %v1375 = vpack.c.bf16 %v1254, %v1250
        %v1376 = vpack.c.bf16 %v1262, %v1258
        %v1377 = vpack.c.bf16 %v1264, %v1260
        %v1378 = vpack.c.bf16 %v1272, %v1268
        %v1379 = vpack.c.bf16 %v1274, %v1270
        %v1380 = vpack.c.bf16 %v1282, %v1278
        %v1381 = vpack.c.bf16 %v1284, %v1280
        %v1382 = vpack.c.bf16 %v1292, %v1288
        %v1383 = vpack.c.bf16 %v1294, %v1290
        %v1384 = vpack.c.bf16 %v1302, %v1298
        %v1385 = vpack.c.bf16 %v1304, %v1300
        %v1386 = vpack.c.bf16 %v1312, %v1308
        %v1387 = vpack.c.bf16 %v1314, %v1310
        %v1388 = vpack.c.bf16 %v1322, %v1318
        %v1389 = vpack.c.bf16 %v1324, %v1320
        %1390 = vmatprep.subr.bf16.mxu0 0
        %1391 = vmatpush1.bf16.xpose.msra.mxu0 0
        %1392 = vmatprep.subr.bf16.mxu0 0
        %1393 = vmatpush1.bf16.xpose.msra.mxu0 0
        %1394 = vmatprep.subr.bf16.mxu0 0
        %1395 = vmatpush1.bf16.xpose.msra.mxu0 0
        %1396 = vmatprep.subr.bf16.mxu0 0
        %1397 = vmatpush1.bf16.xpose.msra.mxu0 0
        %1398 = vmatprep.subr.bf16.mxu0 %v1333
        %1399 = vmatpush1.bf16.xpose.msra.mxu0 %v1332
        %1400 = vmatprep.subr.bf16.mxu0 %v1331
        %1401 = vmatpush1.bf16.xpose.msra.mxu0 %v1330
        %1402 = vmatprep.subr.bf16.mxu0 %v1329
        %1403 = vmatpush1.bf16.xpose.msra.mxu0 %v1328
        %1404 = vmatprep.subr.bf16.mxu0 %v1327
        %1405 = vmatpush1.bf16.xpose.msra.mxu0 %v1326
        %1406 = vmatprep.subr.bf16.mxu0 0
        %1407 = vmatpush2.bf16.xpose.msra.mxu0 0
        %1408 = vmatprep.subr.bf16.mxu0 0
        %1409 = vmatpush2.bf16.xpose.msra.mxu0 0
        %1410 = vmatprep.subr.bf16.mxu0 0
        %1411 = vmatpush2.bf16.xpose.msra.mxu0 0
        %1412 = vmatprep.subr.bf16.mxu0 0
        %1413 = vmatpush2.bf16.xpose.msra.mxu0 0
        %1414 = vmatprep.subr.bf16.mxu0 0
        %1415 = vmatpush2.bf16.xpose.msra.mxu0 0
        %1416 = vmatprep.subr.bf16.mxu0 0
        %1417 = vmatpush2.bf16.xpose.msra.mxu0 0
        %1418 = vmatprep.subr.bf16.mxu0 0
        %1419 = vmatpush2.bf16.xpose.msra.mxu0 0
        %1420 = vmatprep.subr.bf16.mxu0 0
        %1421 = vmatpush2.bf16.xpose.msra.mxu0 0
        %1422 = vmatprep.mubr.bf16.mxu0 %v1327
        %1423 = vmatmul.mubr.bf16.gmra.mxu0 %v1326
        %v1424 = vpop.f32.mrf.mxu0
        %v1425 = vadd.f32 0.0, %v1424
        %v1426 = vpop.f32.mrf.mxu0
        %v1427 = vpop.f32.mrf.mxu0
        %v1428 = vadd.f32 0.0, %v1427
        %v1429 = vpop.f32.mrf.mxu0
        %1430 = vmatprep.mubr.bf16.mxu0 %v1329
        %1431 = vmatmul.mubr.bf16.gmra.mxu0 %v1328
        %v1432 = vpop.f32.mrf.mxu0
        %v1433 = vadd.f32 0.0, %v1432
        %v1434 = vpop.f32.mrf.mxu0
        %v1435 = vpop.f32.mrf.mxu0
        %v1436 = vadd.f32 0.0, %v1435
        %v1437 = vpop.f32.mrf.mxu0
        %1438 = vmatprep.mubr.bf16.mxu0 %v1331
        %1439 = vmatmul.mubr.bf16.gmra.mxu0 %v1330
        %v1440 = vpop.f32.mrf.mxu0
        %v1441 = vadd.f32 0.0, %v1440
        %v1442 = vpop.f32.mrf.mxu0
        %v1443 = vpop.f32.mrf.mxu0
        %v1444 = vadd.f32 0.0, %v1443
        %v1445 = vpop.f32.mrf.mxu0
        %1446 = vmatprep.mubr.bf16.mxu0 %v1333
        %1447 = vmatmul.mubr.bf16.gmra.mxu0 %v1332
        %v1448 = vpop.f32.mrf.mxu0
        %v1449 = vadd.f32 0.0, %v1448
        %v1450 = vpop.f32.mrf.mxu0
        %v1451 = vpop.f32.mrf.mxu0
        %v1452 = vadd.f32 0.0, %v1451
        %v1453 = vpop.f32.mrf.mxu0
        %1454 = vdwg.mxu0
        %1455 = vmatprep.subr.bf16.mxu0 0
        %1456 = vmatpush1.bf16.xpose.msra.mxu0 0
        %1457 = vmatprep.subr.bf16.mxu0 0
        %1458 = vmatpush1.bf16.xpose.msra.mxu0 0
        %1459 = vmatprep.subr.bf16.mxu0 0
        %1460 = vmatpush1.bf16.xpose.msra.mxu0 0
        %1461 = vmatprep.subr.bf16.mxu0 0
        %1462 = vmatpush1.bf16.xpose.msra.mxu0 0
        %1463 = vmatprep.subr.bf16.mxu0 %v1341
        %1464 = vmatpush1.bf16.xpose.msra.mxu0 %v1340
        %1465 = vmatprep.subr.bf16.mxu0 %v1339
        %1466 = vmatpush1.bf16.xpose.msra.mxu0 %v1338
        %1467 = vmatprep.subr.bf16.mxu0 %v1337
        %1468 = vmatpush1.bf16.xpose.msra.mxu0 %v1336
        %1469 = vmatprep.subr.bf16.mxu0 %v1335
        %1470 = vmatpush1.bf16.xpose.msra.mxu0 %v1334
        %1471 = vmatprep.subr.bf16.mxu0 0
        %1472 = vmatpush2.bf16.xpose.msra.mxu0 0
        %1473 = vmatprep.subr.bf16.mxu0 0
        %1474 = vmatpush2.bf16.xpose.msra.mxu0 0
        %1475 = vmatprep.subr.bf16.mxu0 0
        %1476 = vmatpush2.bf16.xpose.msra.mxu0 0
        %1477 = vmatprep.subr.bf16.mxu0 0
        %1478 = vmatpush2.bf16.xpose.msra.mxu0 0
        %1479 = vmatprep.subr.bf16.mxu0 0
        %1480 = vmatpush2.bf16.xpose.msra.mxu0 0
        %1481 = vmatprep.subr.bf16.mxu0 0
        %1482 = vmatpush2.bf16.xpose.msra.mxu0 0
        %1483 = vmatprep.subr.bf16.mxu0 0
        %1484 = vmatpush2.bf16.xpose.msra.mxu0 0
        %1485 = vmatprep.subr.bf16.mxu0 0
        %1486 = vmatpush2.bf16.xpose.msra.mxu0 0
        %1487 = vmatprep.mubr.bf16.mxu0 %v1335
        %1488 = vmatmul.mubr.bf16.gmra.mxu0 %v1334
        %v1489 = vpop.f32.mrf.mxu0
        %v1490 = vadd.f32 0.0, %v1489
        %v1491 = vpop.f32.mrf.mxu0
        %v1492 = vpop.f32.mrf.mxu0
        %v1493 = vadd.f32 0.0, %v1492
        %v1494 = vpop.f32.mrf.mxu0
        %1495 = vmatprep.mubr.bf16.mxu0 %v1337
        %1496 = vmatmul.mubr.bf16.gmra.mxu0 %v1336
        %v1497 = vpop.f32.mrf.mxu0
        %v1498 = vadd.f32 0.0, %v1497
        %v1499 = vpop.f32.mrf.mxu0
        %v1500 = vpop.f32.mrf.mxu0
        %v1501 = vadd.f32 0.0, %v1500
        %v1502 = vpop.f32.mrf.mxu0
        %1503 = vmatprep.mubr.bf16.mxu0 %v1339
        %1504 = vmatmul.mubr.bf16.gmra.mxu0 %v1338
        %v1505 = vpop.f32.mrf.mxu0
        %v1506 = vadd.f32 0.0, %v1505
        %v1507 = vpop.f32.mrf.mxu0
        %v1508 = vpop.f32.mrf.mxu0
        %v1509 = vadd.f32 0.0, %v1508
        %v1510 = vpop.f32.mrf.mxu0
        %1511 = vmatprep.mubr.bf16.mxu0 %v1341
        %1512 = vmatmul.mubr.bf16.gmra.mxu0 %v1340
        %v1513 = vpop.f32.mrf.mxu0
        %v1514 = vadd.f32 0.0, %v1513
        %v1515 = vpop.f32.mrf.mxu0
        %v1516 = vpop.f32.mrf.mxu0
        %v1517 = vadd.f32 0.0, %v1516
        %v1518 = vpop.f32.mrf.mxu0
        %1519 = vdwg.mxu0
        %1520 = vmatprep.subr.bf16.mxu0 0
        %1521 = vmatpush1.bf16.xpose.msra.mxu0 0
        %1522 = vmatprep.subr.bf16.mxu0 0
        %1523 = vmatpush1.bf16.xpose.msra.mxu0 0
        %1524 = vmatprep.subr.bf16.mxu0 0
        %1525 = vmatpush1.bf16.xpose.msra.mxu0 0
        %1526 = vmatprep.subr.bf16.mxu0 0
        %1527 = vmatpush1.bf16.xpose.msra.mxu0 0
        %1528 = vmatprep.subr.bf16.mxu0 %v1349
        %1529 = vmatpush1.bf16.xpose.msra.mxu0 %v1348
        %1530 = vmatprep.subr.bf16.mxu0 %v1347
        %1531 = vmatpush1.bf16.xpose.msra.mxu0 %v1346
        %1532 = vmatprep.subr.bf16.mxu0 %v1345
        %1533 = vmatpush1.bf16.xpose.msra.mxu0 %v1344
        %1534 = vmatprep.subr.bf16.mxu0 %v1343
        %1535 = vmatpush1.bf16.xpose.msra.mxu0 %v1342
        %1536 = vmatprep.subr.bf16.mxu0 0
        %1537 = vmatpush2.bf16.xpose.msra.mxu0 0
        %1538 = vmatprep.subr.bf16.mxu0 0
        %1539 = vmatpush2.bf16.xpose.msra.mxu0 0
        %1540 = vmatprep.subr.bf16.mxu0 0
        %1541 = vmatpush2.bf16.xpose.msra.mxu0 0
        %1542 = vmatprep.subr.bf16.mxu0 0
        %1543 = vmatpush2.bf16.xpose.msra.mxu0 0
        %1544 = vmatprep.subr.bf16.mxu0 0
        %1545 = vmatpush2.bf16.xpose.msra.mxu0 0
        %1546 = vmatprep.subr.bf16.mxu0 0
        %1547 = vmatpush2.bf16.xpose.msra.mxu0 0
        %1548 = vmatprep.subr.bf16.mxu0 0
        %1549 = vmatpush2.bf16.xpose.msra.mxu0 0
        %1550 = vmatprep.subr.bf16.mxu0 0
        %1551 = vmatpush2.bf16.xpose.msra.mxu0 0
        %1552 = vmatprep.mubr.bf16.mxu0 %v1343
        %1553 = vmatmul.mubr.bf16.gmra.mxu0 %v1342
        %v1554 = vpop.f32.mrf.mxu0
        %v1555 = vadd.f32 0.0, %v1554
        %v1556 = vpop.f32.mrf.mxu0
        %v1557 = vpop.f32.mrf.mxu0
        %v1558 = vadd.f32 0.0, %v1557
        %v1559 = vpop.f32.mrf.mxu0
        %1560 = vmatprep.mubr.bf16.mxu0 %v1345
        %1561 = vmatmul.mubr.bf16.gmra.mxu0 %v1344
        %v1562 = vpop.f32.mrf.mxu0
        %v1563 = vadd.f32 0.0, %v1562
        %v1564 = vpop.f32.mrf.mxu0
        %v1565 = vpop.f32.mrf.mxu0
        %v1566 = vadd.f32 0.0, %v1565
        %v1567 = vpop.f32.mrf.mxu0
        %1568 = vmatprep.mubr.bf16.mxu0 %v1347
        %1569 = vmatmul.mubr.bf16.gmra.mxu0 %v1346
        %v1570 = vpop.f32.mrf.mxu0
        %v1571 = vadd.f32 0.0, %v1570
        %v1572 = vpop.f32.mrf.mxu0
        %v1573 = vpop.f32.mrf.mxu0
        %v1574 = vadd.f32 0.0, %v1573
        %v1575 = vpop.f32.mrf.mxu0
        %1576 = vmatprep.mubr.bf16.mxu0 %v1349
        %1577 = vmatmul.mubr.bf16.gmra.mxu0 %v1348
        %v1578 = vpop.f32.mrf.mxu0
        %v1579 = vadd.f32 0.0, %v1578
        %v1580 = vpop.f32.mrf.mxu0
        %v1581 = vpop.f32.mrf.mxu0
        %v1582 = vadd.f32 0.0, %v1581
        %v1583 = vpop.f32.mrf.mxu0
        %1584 = vdwg.mxu0
        %1585 = vmatprep.subr.bf16.mxu0 0
        %1586 = vmatpush1.bf16.xpose.msra.mxu0 0
        %1587 = vmatprep.subr.bf16.mxu0 0
        %1588 = vmatpush1.bf16.xpose.msra.mxu0 0
        %1589 = vmatprep.subr.bf16.mxu0 0
        %1590 = vmatpush1.bf16.xpose.msra.mxu0 0
        %1591 = vmatprep.subr.bf16.mxu0 0
        %1592 = vmatpush1.bf16.xpose.msra.mxu0 0
        %1593 = vmatprep.subr.bf16.mxu0 %v1357
        %1594 = vmatpush1.bf16.xpose.msra.mxu0 %v1356
        %1595 = vmatprep.subr.bf16.mxu0 %v1355
        %1596 = vmatpush1.bf16.xpose.msra.mxu0 %v1354
        %1597 = vmatprep.subr.bf16.mxu0 %v1353
        %1598 = vmatpush1.bf16.xpose.msra.mxu0 %v1352
        %1599 = vmatprep.subr.bf16.mxu0 %v1351
        %1600 = vmatpush1.bf16.xpose.msra.mxu0 %v1350
        %1601 = vmatprep.subr.bf16.mxu0 0
        %1602 = vmatpush2.bf16.xpose.msra.mxu0 0
        %1603 = vmatprep.subr.bf16.mxu0 0
        %1604 = vmatpush2.bf16.xpose.msra.mxu0 0
        %1605 = vmatprep.subr.bf16.mxu0 0
        %1606 = vmatpush2.bf16.xpose.msra.mxu0 0
        %1607 = vmatprep.subr.bf16.mxu0 0
        %1608 = vmatpush2.bf16.xpose.msra.mxu0 0
        %1609 = vmatprep.subr.bf16.mxu0 0
        %1610 = vmatpush2.bf16.xpose.msra.mxu0 0
        %1611 = vmatprep.subr.bf16.mxu0 0
        %1612 = vmatpush2.bf16.xpose.msra.mxu0 0
        %1613 = vmatprep.subr.bf16.mxu0 0
        %1614 = vmatpush2.bf16.xpose.msra.mxu0 0
        %1615 = vmatprep.subr.bf16.mxu0 0
        %1616 = vmatpush2.bf16.xpose.msra.mxu0 0
        %1617 = vmatprep.mubr.bf16.mxu0 %v1351
        %1618 = vmatmul.mubr.bf16.gmra.mxu0 %v1350
        %v1619 = vpop.f32.mrf.mxu0
        %v1620 = vadd.f32 0.0, %v1619
        %v1621 = vpop.f32.mrf.mxu0
        %v1622 = vpop.f32.mrf.mxu0
        %v1623 = vadd.f32 0.0, %v1622
        %v1624 = vpop.f32.mrf.mxu0
        %1625 = vmatprep.mubr.bf16.mxu0 %v1353
        %1626 = vmatmul.mubr.bf16.gmra.mxu0 %v1352
        %v1627 = vpop.f32.mrf.mxu0
        %v1628 = vadd.f32 0.0, %v1627
        %v1629 = vpop.f32.mrf.mxu0
        %v1630 = vpop.f32.mrf.mxu0
        %v1631 = vadd.f32 0.0, %v1630
        %v1632 = vpop.f32.mrf.mxu0
        %1633 = vmatprep.mubr.bf16.mxu0 %v1355
        %1634 = vmatmul.mubr.bf16.gmra.mxu0 %v1354
        %v1635 = vpop.f32.mrf.mxu0
        %v1636 = vadd.f32 0.0, %v1635
        %v1637 = vpop.f32.mrf.mxu0
        %v1638 = vpop.f32.mrf.mxu0
        %v1639 = vadd.f32 0.0, %v1638
        %v1640 = vpop.f32.mrf.mxu0
        %1641 = vmatprep.mubr.bf16.mxu0 %v1357
        %1642 = vmatmul.mubr.bf16.gmra.mxu0 %v1356
        %v1643 = vpop.f32.mrf.mxu0
        %v1644 = vadd.f32 0.0, %v1643
        %v1645 = vpop.f32.mrf.mxu0
        %v1646 = vpop.f32.mrf.mxu0
        %v1647 = vadd.f32 0.0, %v1646
        %v1648 = vpop.f32.mrf.mxu0
        %1649 = vdwg.mxu0
        %v1650 = vlaneseq
        %v1651 = vshrl.u32 %v1650, 7
        %v1652 = vadd.s32 %v1651, 8
        %v1653 = vadd.s32 %v1651, 16
        %v1654 = vadd.s32 %v1651, 24
        %v1655 = vadd.s32 %v1651, 32
        %v1656 = vadd.s32 %v1651, 40
        %v1657 = vadd.s32 %v1651, 48
        %v1658 = vadd.s32 %v1651, 56
        %v1659 = vlaneseq
        %v1660 = vand.u32 %v1659, 127
        %vm1661 = vcmp.lt.s32.totalorder %v1651, 32
        %vm1662 = vcmp.lt.s32.totalorder %v1652, 32
        %vm1663 = vcmp.lt.s32.totalorder %v1653, 32
        %vm1664 = vcmp.lt.s32.totalorder %v1654, 32
        %vm1665 = vcmp.lt.s32.totalorder %v1655, 32
        %vm1666 = vcmp.lt.s32.totalorder %v1656, 32
        %vm1667 = vcmp.lt.s32.totalorder %v1657, 32
        %vm1668 = vcmp.lt.s32.totalorder %v1658, 32
        %vm1669 = vcmp.lt.s32.totalorder %v1660, 32
        %vm1670 = vmxor %vm1661, %vm1669
        %vm1671 = vmxor %vm1662, %vm1669
        %vm1672 = vmxor %vm1663, %vm1669
        %vm1673 = vmxor %vm1664, %vm1669
        %vm1674 = vmxor %vm1665, %vm1669
        %vm1675 = vmxor %vm1666, %vm1669
        %vm1676 = vmxor %vm1667, %vm1669
        %vm1677 = vmxor %vm1668, %vm1669
        %vm1678 = vmxor %vm1670, 1
        %vm1679 = vmxor %vm1671, 1
        %vm1680 = vmxor %vm1672, 1
        %vm1681 = vmxor %vm1673, 1
        %vm1682 = vmxor %vm1674, 1
        %vm1683 = vmxor %vm1675, 1
        %vm1684 = vmxor %vm1676, 1
        %vm1685 = vmxor %vm1677, 1
        %v1686 = vsel %vm1678, 1, 0
        %v1687 = vsel %vm1679, 1, 0
        %v1688 = vsel %vm1680, 1, 0
        %v1689 = vsel %vm1681, 1, 0
        %v1690 = vsel %vm1682, 1, 0
        %v1691 = vsel %vm1683, 1, 0
        %v1692 = vsel %vm1684, 1, 0
        %v1693 = vsel %vm1685, 1, 0
        %vm1694 = vcmp.eq.s32.totalorder %v1686, 1
        %vm1695 = vcmp.eq.s32.totalorder %v1687, 1
        %vm1696 = vcmp.eq.s32.totalorder %v1688, 1
        %vm1697 = vcmp.eq.s32.totalorder %v1689, 1
        %vm1698 = vcmp.eq.s32.totalorder %v1690, 1
        %vm1699 = vcmp.eq.s32.totalorder %v1691, 1
        %vm1700 = vcmp.eq.s32.totalorder %v1692, 1
        %vm1701 = vcmp.eq.s32.totalorder %v1693, 1
        %v1702 = vsel %vm1694, -1e+30, %v1425
        %v1703 = vsel %vm1695, -1e+30, %v1428
        %v1704 = vsel %vm1696, -1e+30, %v1433
        %v1705 = vsel %vm1697, -1e+30, %v1436
        %v1706 = vsel %vm1698, -1e+30, %v1441
        %v1707 = vsel %vm1699, -1e+30, %v1444
        %v1708 = vsel %vm1700, -1e+30, %v1449
        %v1709 = vsel %vm1701, -1e+30, %v1452
        %v1710 = vsel %vm1694, -1e+30, %v1490
        %v1711 = vsel %vm1695, -1e+30, %v1493
        %v1712 = vsel %vm1696, -1e+30, %v1498
        %v1713 = vsel %vm1697, -1e+30, %v1501
        %v1714 = vsel %vm1698, -1e+30, %v1506
        %v1715 = vsel %vm1699, -1e+30, %v1509
        %v1716 = vsel %vm1700, -1e+30, %v1514
        %v1717 = vsel %vm1701, -1e+30, %v1517
        %v1718 = vsel %vm1694, -1e+30, %v1555
        %v1719 = vsel %vm1695, -1e+30, %v1558
        %v1720 = vsel %vm1696, -1e+30, %v1563
        %v1721 = vsel %vm1697, -1e+30, %v1566
        %v1722 = vsel %vm1698, -1e+30, %v1571
        %v1723 = vsel %vm1699, -1e+30, %v1574
        %v1724 = vsel %vm1700, -1e+30, %v1579
        %v1725 = vsel %vm1701, -1e+30, %v1582
        %v1726 = vsel %vm1694, -1e+30, %v1620
        %v1727 = vsel %vm1695, -1e+30, %v1623
        %v1728 = vsel %vm1696, -1e+30, %v1628
        %v1729 = vsel %vm1697, -1e+30, %v1631
        %v1730 = vsel %vm1698, -1e+30, %v1636
        %v1731 = vsel %vm1699, -1e+30, %v1639
        %v1732 = vsel %vm1700, -1e+30, %v1644
        %v1733 = vsel %vm1701, -1e+30, %v1647
        %vm1734 = vcmask 523264
        %v1735 = vsel %vm1734, %v1702, -inf
        %1736 = vmax.xlane.f32.xlu0 %v1735
        %v1737 = vpop.xlane.xlu0 %1736
        %v1738 = vsel %vm1734, %v1703, -inf
        %1739 = vmax.xlane.f32.xlu0 %v1738
        %v1740 = vpop.xlane.xlu0 %1739
        %v1741 = vsel %vm1734, %v1704, -inf
        %1742 = vmax.xlane.f32.xlu0 %v1741
        %v1743 = vpop.xlane.xlu0 %1742
        %v1744 = vsel %vm1734, %v1705, -inf
        %1745 = vmax.xlane.f32.xlu0 %v1744
        %v1746 = vpop.xlane.xlu0 %1745
        %v1747 = vsel %vm1734, %v1706, -inf
        %1748 = vmax.xlane.f32.xlu0 %v1747
        %v1749 = vpop.xlane.xlu0 %1748
        %v1750 = vsel %vm1734, %v1707, -inf
        %1751 = vmax.xlane.f32.xlu0 %v1750
        %v1752 = vpop.xlane.xlu0 %1751
        %v1753 = vsel %vm1734, %v1708, -inf
        %1754 = vmax.xlane.f32.xlu0 %v1753
        %v1755 = vpop.xlane.xlu0 %1754
        %v1756 = vsel %vm1734, %v1709, -inf
        %1757 = vmax.xlane.f32.xlu0 %v1756
        %v1758 = vpop.xlane.xlu0 %1757
        %v1759 = vsel %vm1734, %v1710, -inf
        %1760 = vmax.xlane.f32.xlu0 %v1759
        %v1761 = vpop.xlane.xlu0 %1760
        %v1762 = vsel %vm1734, %v1711, -inf
        %1763 = vmax.xlane.f32.xlu0 %v1762
        %v1764 = vpop.xlane.xlu0 %1763
        %v1765 = vsel %vm1734, %v1712, -inf
        %1766 = vmax.xlane.f32.xlu0 %v1765
        %v1767 = vpop.xlane.xlu0 %1766
        %v1768 = vsel %vm1734, %v1713, -inf
        %1769 = vmax.xlane.f32.xlu0 %v1768
        %v1770 = vpop.xlane.xlu0 %1769
        %v1771 = vsel %vm1734, %v1714, -inf
        %1772 = vmax.xlane.f32.xlu0 %v1771
        %v1773 = vpop.xlane.xlu0 %1772
        %v1774 = vsel %vm1734, %v1715, -inf
        %1775 = vmax.xlane.f32.xlu0 %v1774
        %v1776 = vpop.xlane.xlu0 %1775
        %v1777 = vsel %vm1734, %v1716, -inf
        %1778 = vmax.xlane.f32.xlu0 %v1777
        %v1779 = vpop.xlane.xlu0 %1778
        %v1780 = vsel %vm1734, %v1717, -inf
        %1781 = vmax.xlane.f32.xlu0 %v1780
        %v1782 = vpop.xlane.xlu0 %1781
        %v1783 = vsel %vm1734, %v1718, -inf
        %1784 = vmax.xlane.f32.xlu0 %v1783
        %v1785 = vpop.xlane.xlu0 %1784
        %v1786 = vsel %vm1734, %v1719, -inf
        %1787 = vmax.xlane.f32.xlu0 %v1786
        %v1788 = vpop.xlane.xlu0 %1787
        %v1789 = vsel %vm1734, %v1720, -inf
        %1790 = vmax.xlane.f32.xlu0 %v1789
        %v1791 = vpop.xlane.xlu0 %1790
        %v1792 = vsel %vm1734, %v1721, -inf
        %1793 = vmax.xlane.f32.xlu0 %v1792
        %v1794 = vpop.xlane.xlu0 %1793
        %v1795 = vsel %vm1734, %v1722, -inf
        %1796 = vmax.xlane.f32.xlu0 %v1795
        %v1797 = vpop.xlane.xlu0 %1796
        %v1798 = vsel %vm1734, %v1723, -inf
        %1799 = vmax.xlane.f32.xlu0 %v1798
        %v1800 = vpop.xlane.xlu0 %1799
        %v1801 = vsel %vm1734, %v1724, -inf
        %1802 = vmax.xlane.f32.xlu0 %v1801
        %v1803 = vpop.xlane.xlu0 %1802
        %v1804 = vsel %vm1734, %v1725, -inf
        %1805 = vmax.xlane.f32.xlu0 %v1804
        %v1806 = vpop.xlane.xlu0 %1805
        %v1807 = vsel %vm1734, %v1726, -inf
        %1808 = vmax.xlane.f32.xlu0 %v1807
        %v1809 = vpop.xlane.xlu0 %1808
        %v1810 = vsel %vm1734, %v1727, -inf
        %1811 = vmax.xlane.f32.xlu0 %v1810
        %v1812 = vpop.xlane.xlu0 %1811
        %v1813 = vsel %vm1734, %v1728, -inf
        %1814 = vmax.xlane.f32.xlu0 %v1813
        %v1815 = vpop.xlane.xlu0 %1814
        %v1816 = vsel %vm1734, %v1729, -inf
        %1817 = vmax.xlane.f32.xlu0 %v1816
        %v1818 = vpop.xlane.xlu0 %1817
        %v1819 = vsel %vm1734, %v1730, -inf
        %1820 = vmax.xlane.f32.xlu0 %v1819
        %v1821 = vpop.xlane.xlu0 %1820
        %v1822 = vsel %vm1734, %v1731, -inf
        %1823 = vmax.xlane.f32.xlu0 %v1822
        %v1824 = vpop.xlane.xlu0 %1823
        %v1825 = vsel %vm1734, %v1732, -inf
        %1826 = vmax.xlane.f32.xlu0 %v1825
        %v1827 = vpop.xlane.xlu0 %1826
        %v1828 = vsel %vm1734, %v1733, -inf
        %1829 = vmax.xlane.f32.xlu0 %v1828
        %v1830 = vpop.xlane.xlu0 %1829
        %v1831 = vsub.f32 %v1702, %v1737
        %v1832 = vsub.f32 %v1703, %v1740
        %v1833 = vsub.f32 %v1704, %v1743
        %v1834 = vsub.f32 %v1705, %v1746
        %v1835 = vsub.f32 %v1706, %v1749
        %v1836 = vsub.f32 %v1707, %v1752
        %v1837 = vsub.f32 %v1708, %v1755
        %v1838 = vsub.f32 %v1709, %v1758
        %v1839 = vsub.f32 %v1710, %v1761
        %v1840 = vsub.f32 %v1711, %v1764
        %v1841 = vsub.f32 %v1712, %v1767
        %v1842 = vsub.f32 %v1713, %v1770
        %v1843 = vsub.f32 %v1714, %v1773
        %v1844 = vsub.f32 %v1715, %v1776
        %v1845 = vsub.f32 %v1716, %v1779
        %v1846 = vsub.f32 %v1717, %v1782
        %v1847 = vsub.f32 %v1718, %v1785
        %v1848 = vsub.f32 %v1719, %v1788
        %v1849 = vsub.f32 %v1720, %v1791
        %v1850 = vsub.f32 %v1721, %v1794
        %v1851 = vsub.f32 %v1722, %v1797
        %v1852 = vsub.f32 %v1723, %v1800
        %v1853 = vsub.f32 %v1724, %v1803
        %v1854 = vsub.f32 %v1725, %v1806
        %v1855 = vsub.f32 %v1726, %v1809
        %v1856 = vsub.f32 %v1727, %v1812
        %v1857 = vsub.f32 %v1728, %v1815
        %v1858 = vsub.f32 %v1729, %v1818
        %v1859 = vsub.f32 %v1730, %v1821
        %v1860 = vsub.f32 %v1731, %v1824
        %v1861 = vsub.f32 %v1732, %v1827
        %v1862 = vsub.f32 %v1733, %v1830
        %v1863 = vmul.f32 %v1831, 1.442695
        %v1864 = vpow.pop %v1863
        %v1865 = vmul.f32 %v1832, 1.442695
        %v1866 = vpow.pop %v1865
        %v1867 = vmul.f32 %v1833, 1.442695
        %v1868 = vpow.pop %v1867
        %v1869 = vmul.f32 %v1834, 1.442695
        %v1870 = vpow.pop %v1869
        %v1871 = vmul.f32 %v1835, 1.442695
        %v1872 = vpow.pop %v1871
        %v1873 = vmul.f32 %v1836, 1.442695
        %v1874 = vpow.pop %v1873
        %v1875 = vmul.f32 %v1837, 1.442695
        %v1876 = vpow.pop %v1875
        %v1877 = vmul.f32 %v1838, 1.442695
        %v1878 = vpow.pop %v1877
        %v1879 = vmul.f32 %v1839, 1.442695
        %v1880 = vpow.pop %v1879
        %v1881 = vmul.f32 %v1840, 1.442695
        %v1882 = vpow.pop %v1881
        %v1883 = vmul.f32 %v1841, 1.442695
        %v1884 = vpow.pop %v1883
        %v1885 = vmul.f32 %v1842, 1.442695
        %v1886 = vpow.pop %v1885
        %v1887 = vmul.f32 %v1843, 1.442695
        %v1888 = vpow.pop %v1887
        %v1889 = vmul.f32 %v1844, 1.442695
        %v1890 = vpow.pop %v1889
        %v1891 = vmul.f32 %v1845, 1.442695
        %v1892 = vpow.pop %v1891
        %v1893 = vmul.f32 %v1846, 1.442695
        %v1894 = vpow.pop %v1893
        %v1895 = vmul.f32 %v1847, 1.442695
        %v1896 = vpow.pop %v1895
        %v1897 = vmul.f32 %v1848, 1.442695
        %v1898 = vpow.pop %v1897
        %v1899 = vmul.f32 %v1849, 1.442695
        %v1900 = vpow.pop %v1899
        %v1901 = vmul.f32 %v1850, 1.442695
        %v1902 = vpow.pop %v1901
        %v1903 = vmul.f32 %v1851, 1.442695
        %v1904 = vpow.pop %v1903
        %v1905 = vmul.f32 %v1852, 1.442695
        %v1906 = vpow.pop %v1905
        %v1907 = vmul.f32 %v1853, 1.442695
        %v1908 = vpow.pop %v1907
        %v1909 = vmul.f32 %v1854, 1.442695
        %v1910 = vpow.pop %v1909
        %v1911 = vmul.f32 %v1855, 1.442695
        %v1912 = vpow.pop %v1911
        %v1913 = vmul.f32 %v1856, 1.442695
        %v1914 = vpow.pop %v1913
        %v1915 = vmul.f32 %v1857, 1.442695
        %v1916 = vpow.pop %v1915
        %v1917 = vmul.f32 %v1858, 1.442695
        %v1918 = vpow.pop %v1917
        %v1919 = vmul.f32 %v1859, 1.442695
        %v1920 = vpow.pop %v1919
        %v1921 = vmul.f32 %v1860, 1.442695
        %v1922 = vpow.pop %v1921
        %v1923 = vmul.f32 %v1861, 1.442695
        %v1924 = vpow.pop %v1923
        %v1925 = vmul.f32 %v1862, 1.442695
        %v1926 = vpow.pop %v1925
        %v1927 = vsel %vm1734, %v1864, 0.0
        %1928 = vadd.xlane.f32.xlu0 %v1927
        %v1929 = vpop.xlane.xlu0 %1928
        %v1930 = vsel %vm1734, %v1866, 0.0
        %1931 = vadd.xlane.f32.xlu0 %v1930
        %v1932 = vpop.xlane.xlu0 %1931
        %v1933 = vsel %vm1734, %v1868, 0.0
        %1934 = vadd.xlane.f32.xlu0 %v1933
        %v1935 = vpop.xlane.xlu0 %1934
        %v1936 = vsel %vm1734, %v1870, 0.0
        %1937 = vadd.xlane.f32.xlu0 %v1936
        %v1938 = vpop.xlane.xlu0 %1937
        %v1939 = vsel %vm1734, %v1872, 0.0
        %1940 = vadd.xlane.f32.xlu0 %v1939
        %v1941 = vpop.xlane.xlu0 %1940
        %v1942 = vsel %vm1734, %v1874, 0.0
        %1943 = vadd.xlane.f32.xlu0 %v1942
        %v1944 = vpop.xlane.xlu0 %1943
        %v1945 = vsel %vm1734, %v1876, 0.0
        %1946 = vadd.xlane.f32.xlu0 %v1945
        %v1947 = vpop.xlane.xlu0 %1946
        %v1948 = vsel %vm1734, %v1878, 0.0
        %1949 = vadd.xlane.f32.xlu0 %v1948
        %v1950 = vpop.xlane.xlu0 %1949
        %v1951 = vsel %vm1734, %v1880, 0.0
        %1952 = vadd.xlane.f32.xlu0 %v1951
        %v1953 = vpop.xlane.xlu0 %1952
        %v1954 = vsel %vm1734, %v1882, 0.0
        %1955 = vadd.xlane.f32.xlu0 %v1954
        %v1956 = vpop.xlane.xlu0 %1955
        %v1957 = vsel %vm1734, %v1884, 0.0
        %1958 = vadd.xlane.f32.xlu0 %v1957
        %v1959 = vpop.xlane.xlu0 %1958
        %v1960 = vsel %vm1734, %v1886, 0.0
        %1961 = vadd.xlane.f32.xlu0 %v1960
        %v1962 = vpop.xlane.xlu0 %1961
        %v1963 = vsel %vm1734, %v1888, 0.0
        %1964 = vadd.xlane.f32.xlu0 %v1963
        %v1965 = vpop.xlane.xlu0 %1964
        %v1966 = vsel %vm1734, %v1890, 0.0
        %1967 = vadd.xlane.f32.xlu0 %v1966
        %v1968 = vpop.xlane.xlu0 %1967
        %v1969 = vsel %vm1734, %v1892, 0.0
        %1970 = vadd.xlane.f32.xlu0 %v1969
        %v1971 = vpop.xlane.xlu0 %1970
        %v1972 = vsel %vm1734, %v1894, 0.0
        %1973 = vadd.xlane.f32.xlu0 %v1972
        %v1974 = vpop.xlane.xlu0 %1973
        %v1975 = vsel %vm1734, %v1896, 0.0
        %1976 = vadd.xlane.f32.xlu0 %v1975
        %v1977 = vpop.xlane.xlu0 %1976
        %v1978 = vsel %vm1734, %v1898, 0.0
        %1979 = vadd.xlane.f32.xlu0 %v1978
        %v1980 = vpop.xlane.xlu0 %1979
        %v1981 = vsel %vm1734, %v1900, 0.0
        %1982 = vadd.xlane.f32.xlu0 %v1981
        %v1983 = vpop.xlane.xlu0 %1982
        %v1984 = vsel %vm1734, %v1902, 0.0
        %1985 = vadd.xlane.f32.xlu0 %v1984
        %v1986 = vpop.xlane.xlu0 %1985
        %v1987 = vsel %vm1734, %v1904, 0.0
        %1988 = vadd.xlane.f32.xlu0 %v1987
        %v1989 = vpop.xlane.xlu0 %1988
        %v1990 = vsel %vm1734, %v1906, 0.0
        %1991 = vadd.xlane.f32.xlu0 %v1990
        %v1992 = vpop.xlane.xlu0 %1991
        %v1993 = vsel %vm1734, %v1908, 0.0
        %1994 = vadd.xlane.f32.xlu0 %v1993
        %v1995 = vpop.xlane.xlu0 %1994
        %v1996 = vsel %vm1734, %v1910, 0.0
        %1997 = vadd.xlane.f32.xlu0 %v1996
        %v1998 = vpop.xlane.xlu0 %1997
        %v1999 = vsel %vm1734, %v1912, 0.0
        %2000 = vadd.xlane.f32.xlu0 %v1999
        %v2001 = vpop.xlane.xlu0 %2000
        %v2002 = vsel %vm1734, %v1914, 0.0
        %2003 = vadd.xlane.f32.xlu0 %v2002
        %v2004 = vpop.xlane.xlu0 %2003
        %v2005 = vsel %vm1734, %v1916, 0.0
        %2006 = vadd.xlane.f32.xlu0 %v2005
        %v2007 = vpop.xlane.xlu0 %2006
        %v2008 = vsel %vm1734, %v1918, 0.0
        %2009 = vadd.xlane.f32.xlu0 %v2008
        %v2010 = vpop.xlane.xlu0 %2009
        %v2011 = vsel %vm1734, %v1920, 0.0
        %2012 = vadd.xlane.f32.xlu0 %v2011
        %v2013 = vpop.xlane.xlu0 %2012
        %v2014 = vsel %vm1734, %v1922, 0.0
        %2015 = vadd.xlane.f32.xlu0 %v2014
        %v2016 = vpop.xlane.xlu0 %2015
        %v2017 = vsel %vm1734, %v1924, 0.0
        %2018 = vadd.xlane.f32.xlu0 %v2017
        %v2019 = vpop.xlane.xlu0 %2018
        %v2020 = vsel %vm1734, %v1926, 0.0
        %2021 = vadd.xlane.f32.xlu0 %v2020
        %v2022 = vpop.xlane.xlu0 %2021
        %v2023 = vrcp.pop %v1929
        %v2024 = vmul.f32 %v1864, %v2023
        %v2025 = vrcp.pop %v1932
        %v2026 = vmul.f32 %v1866, %v2025
        %v2027 = vrcp.pop %v1935
        %v2028 = vmul.f32 %v1868, %v2027
        %v2029 = vrcp.pop %v1938
        %v2030 = vmul.f32 %v1870, %v2029
        %v2031 = vrcp.pop %v1941
        %v2032 = vmul.f32 %v1872, %v2031
        %v2033 = vrcp.pop %v1944
        %v2034 = vmul.f32 %v1874, %v2033
        %v2035 = vrcp.pop %v1947
        %v2036 = vmul.f32 %v1876, %v2035
        %v2037 = vrcp.pop %v1950
        %v2038 = vmul.f32 %v1878, %v2037
        %v2039 = vrcp.pop %v1953
        %v2040 = vmul.f32 %v1880, %v2039
        %v2041 = vrcp.pop %v1956
        %v2042 = vmul.f32 %v1882, %v2041
        %v2043 = vrcp.pop %v1959
        %v2044 = vmul.f32 %v1884, %v2043
        %v2045 = vrcp.pop %v1962
        %v2046 = vmul.f32 %v1886, %v2045
        %v2047 = vrcp.pop %v1965
        %v2048 = vmul.f32 %v1888, %v2047
        %v2049 = vrcp.pop %v1968
        %v2050 = vmul.f32 %v1890, %v2049
        %v2051 = vrcp.pop %v1971
        %v2052 = vmul.f32 %v1892, %v2051
        %v2053 = vrcp.pop %v1974
        %v2054 = vmul.f32 %v1894, %v2053
        %v2055 = vrcp.pop %v1977
        %v2056 = vmul.f32 %v1896, %v2055
        %v2057 = vrcp.pop %v1980
        %v2058 = vmul.f32 %v1898, %v2057
        %v2059 = vrcp.pop %v1983
        %v2060 = vmul.f32 %v1900, %v2059
        %v2061 = vrcp.pop %v1986
        %v2062 = vmul.f32 %v1902, %v2061
        %v2063 = vrcp.pop %v1989
        %v2064 = vmul.f32 %v1904, %v2063
        %v2065 = vrcp.pop %v1992
        %v2066 = vmul.f32 %v1906, %v2065
        %v2067 = vrcp.pop %v1995
        %v2068 = vmul.f32 %v1908, %v2067
        %v2069 = vrcp.pop %v1998
        %v2070 = vmul.f32 %v1910, %v2069
        %v2071 = vrcp.pop %v2001
        %v2072 = vmul.f32 %v1912, %v2071
        %v2073 = vrcp.pop %v2004
        %v2074 = vmul.f32 %v1914, %v2073
        %v2075 = vrcp.pop %v2007
        %v2076 = vmul.f32 %v1916, %v2075
        %v2077 = vrcp.pop %v2010
        %v2078 = vmul.f32 %v1918, %v2077
        %v2079 = vrcp.pop %v2013
        %v2080 = vmul.f32 %v1920, %v2079
        %v2081 = vrcp.pop %v2016
        %v2082 = vmul.f32 %v1922, %v2081
        %v2083 = vrcp.pop %v2019
        %v2084 = vmul.f32 %v1924, %v2083
        %v2085 = vrcp.pop %v2022
        %v2086 = vmul.f32 %v1926, %v2085
        %v2087 = vpack.c.bf16 %v2026, %v2024
        %v2088 = vpack.c.bf16 %v2030, %v2028
        %v2089 = vpack.c.bf16 %v2034, %v2032
        %v2090 = vpack.c.bf16 %v2038, %v2036
        %v2091 = vpack.c.bf16 %v2042, %v2040
        %v2092 = vpack.c.bf16 %v2046, %v2044
        %v2093 = vpack.c.bf16 %v2050, %v2048
        %v2094 = vpack.c.bf16 %v2054, %v2052
        %v2095 = vpack.c.bf16 %v2058, %v2056
        %v2096 = vpack.c.bf16 %v2062, %v2060
        %v2097 = vpack.c.bf16 %v2066, %v2064
        %v2098 = vpack.c.bf16 %v2070, %v2068
        %v2099 = vpack.c.bf16 %v2074, %v2072
        %v2100 = vpack.c.bf16 %v2078, %v2076
        %v2101 = vpack.c.bf16 %v2082, %v2080
        %v2102 = vpack.c.bf16 %v2086, %v2084
        %v2104 = vsel %vm1734, %v2087, 0
        %v2107 = vsel %vm1734, %v2088, 0
        %v2110 = vsel %vm1734, %v2089, 0
        %v2113 = vsel %vm1734, %v2090, 0
        %2115 = vmatprep.subr.bf16.mxu0 0
        %2116 = vmatpush1.bf16.msra.mxu0 0
        %2117 = vmatprep.subr.bf16.mxu0 0
        %2118 = vmatpush1.bf16.msra.mxu0 0
        %2119 = vmatprep.subr.bf16.mxu0 0
        %2120 = vmatpush1.bf16.msra.mxu0 0
        %2121 = vmatprep.subr.bf16.mxu0 0
        %2122 = vmatpush1.bf16.msra.mxu0 0
        %2123 = vmatprep.subr.bf16.mxu0 %v1365
        %2124 = vmatpush1.bf16.msra.mxu0 %v1364
        %2125 = vmatprep.subr.bf16.mxu0 %v1363
        %2126 = vmatpush1.bf16.msra.mxu0 %v1362
        %2127 = vmatprep.subr.bf16.mxu0 %v1361
        %2128 = vmatpush1.bf16.msra.mxu0 %v1360
        %2129 = vmatprep.subr.bf16.mxu0 %v1359
        %2130 = vmatpush1.bf16.msra.mxu0 %v1358
        %2131 = vmatprep.subr.bf16.mxu0 0
        %2132 = vmatpush2.bf16.msra.mxu0 0
        %2133 = vmatprep.subr.bf16.mxu0 0
        %2134 = vmatpush2.bf16.msra.mxu0 0
        %2135 = vmatprep.subr.bf16.mxu0 0
        %2136 = vmatpush2.bf16.msra.mxu0 0
        %2137 = vmatprep.subr.bf16.mxu0 0
        %2138 = vmatpush2.bf16.msra.mxu0 0
        %2139 = vmatprep.subr.bf16.mxu0 0
        %2140 = vmatpush2.bf16.msra.mxu0 0
        %2141 = vmatprep.subr.bf16.mxu0 0
        %2142 = vmatpush2.bf16.msra.mxu0 0
        %2143 = vmatprep.subr.bf16.mxu0 0
        %2144 = vmatpush2.bf16.msra.mxu0 0
        %2145 = vmatprep.subr.bf16.mxu0 0
        %2146 = vmatpush2.bf16.msra.mxu0 0
        %2147 = vmatprep.mubr.bf16.mxu0 0
        %2148 = vmatmul.mubr.bf16.gmra.mxu0 %v2104
        %v2149 = vpop.f32.mrf.mxu0
        %v2150 = vadd.f32 0.0, %v2149
        %v2151 = vpop.f32.mrf.mxu0
        %v2152 = vadd.f32 0.0, %v2151
        %v2153 = vpop.f32.mrf.mxu0
        %v2154 = vadd.f32 0.0, %v2153
        %v2155 = vpop.f32.mrf.mxu0
        %v2156 = vadd.f32 0.0, %v2155
        %2157 = vmatprep.mubr.bf16.mxu0 0
        %2158 = vmatmul.mubr.bf16.gmra.mxu0 %v2107
        %v2159 = vpop.f32.mrf.mxu0
        %v2160 = vadd.f32 0.0, %v2159
        %v2161 = vpop.f32.mrf.mxu0
        %v2162 = vadd.f32 0.0, %v2161
        %v2163 = vpop.f32.mrf.mxu0
        %v2164 = vadd.f32 0.0, %v2163
        %v2165 = vpop.f32.mrf.mxu0
        %v2166 = vadd.f32 0.0, %v2165
        %2167 = vmatprep.mubr.bf16.mxu0 0
        %2168 = vmatmul.mubr.bf16.gmra.mxu0 %v2110
        %v2169 = vpop.f32.mrf.mxu0
        %v2170 = vadd.f32 0.0, %v2169
        %v2171 = vpop.f32.mrf.mxu0
        %v2172 = vadd.f32 0.0, %v2171
        %v2173 = vpop.f32.mrf.mxu0
        %v2174 = vadd.f32 0.0, %v2173
        %v2175 = vpop.f32.mrf.mxu0
        %v2176 = vadd.f32 0.0, %v2175
        %2177 = vmatprep.mubr.bf16.mxu0 0
        %2178 = vmatmul.mubr.bf16.gmra.mxu0 %v2113
        %v2179 = vpop.f32.mrf.mxu0
        %v2180 = vadd.f32 0.0, %v2179
        %v2181 = vpop.f32.mrf.mxu0
        %v2182 = vadd.f32 0.0, %v2181
        %v2183 = vpop.f32.mrf.mxu0
        %v2184 = vadd.f32 0.0, %v2183
        %v2185 = vpop.f32.mrf.mxu0
        %v2186 = vadd.f32 0.0, %v2185
        %2187 = vdwg.mxu0
        %v2189 = vsel %vm1734, %v2091, 0
        %v2192 = vsel %vm1734, %v2092, 0
        %v2195 = vsel %vm1734, %v2093, 0
        %v2198 = vsel %vm1734, %v2094, 0
        %2200 = vmatprep.subr.bf16.mxu0 0
        %2201 = vmatpush1.bf16.msra.mxu0 0
        %2202 = vmatprep.subr.bf16.mxu0 0
        %2203 = vmatpush1.bf16.msra.mxu0 0
        %2204 = vmatprep.subr.bf16.mxu0 0
        %2205 = vmatpush1.bf16.msra.mxu0 0
        %2206 = vmatprep.subr.bf16.mxu0 0
        %2207 = vmatpush1.bf16.msra.mxu0 0
        %2208 = vmatprep.subr.bf16.mxu0 %v1373
        %2209 = vmatpush1.bf16.msra.mxu0 %v1372
        %2210 = vmatprep.subr.bf16.mxu0 %v1371
        %2211 = vmatpush1.bf16.msra.mxu0 %v1370
        %2212 = vmatprep.subr.bf16.mxu0 %v1369
        %2213 = vmatpush1.bf16.msra.mxu0 %v1368
        %2214 = vmatprep.subr.bf16.mxu0 %v1367
        %2215 = vmatpush1.bf16.msra.mxu0 %v1366
        %2216 = vmatprep.subr.bf16.mxu0 0
        %2217 = vmatpush2.bf16.msra.mxu0 0
        %2218 = vmatprep.subr.bf16.mxu0 0
        %2219 = vmatpush2.bf16.msra.mxu0 0
        %2220 = vmatprep.subr.bf16.mxu0 0
        %2221 = vmatpush2.bf16.msra.mxu0 0
        %2222 = vmatprep.subr.bf16.mxu0 0
        %2223 = vmatpush2.bf16.msra.mxu0 0
        %2224 = vmatprep.subr.bf16.mxu0 0
        %2225 = vmatpush2.bf16.msra.mxu0 0
        %2226 = vmatprep.subr.bf16.mxu0 0
        %2227 = vmatpush2.bf16.msra.mxu0 0
        %2228 = vmatprep.subr.bf16.mxu0 0
        %2229 = vmatpush2.bf16.msra.mxu0 0
        %2230 = vmatprep.subr.bf16.mxu0 0
        %2231 = vmatpush2.bf16.msra.mxu0 0
        %2232 = vmatprep.mubr.bf16.mxu0 0
        %2233 = vmatmul.mubr.bf16.gmra.mxu0 %v2189
        %v2234 = vpop.f32.mrf.mxu0
        %v2235 = vadd.f32 0.0, %v2234
        %v2236 = vpop.f32.mrf.mxu0
        %v2237 = vadd.f32 0.0, %v2236
        %v2238 = vpop.f32.mrf.mxu0
        %v2239 = vadd.f32 0.0, %v2238
        %v2240 = vpop.f32.mrf.mxu0
        %v2241 = vadd.f32 0.0, %v2240
        %2242 = vmatprep.mubr.bf16.mxu0 0
        %2243 = vmatmul.mubr.bf16.gmra.mxu0 %v2192
        %v2244 = vpop.f32.mrf.mxu0
        %v2245 = vadd.f32 0.0, %v2244
        %v2246 = vpop.f32.mrf.mxu0
        %v2247 = vadd.f32 0.0, %v2246
        %v2248 = vpop.f32.mrf.mxu0
        %v2249 = vadd.f32 0.0, %v2248
        %v2250 = vpop.f32.mrf.mxu0
        %v2251 = vadd.f32 0.0, %v2250
        %2252 = vmatprep.mubr.bf16.mxu0 0
        %2253 = vmatmul.mubr.bf16.gmra.mxu0 %v2195
        %v2254 = vpop.f32.mrf.mxu0
        %v2255 = vadd.f32 0.0, %v2254
        %v2256 = vpop.f32.mrf.mxu0
        %v2257 = vadd.f32 0.0, %v2256
        %v2258 = vpop.f32.mrf.mxu0
        %v2259 = vadd.f32 0.0, %v2258
        %v2260 = vpop.f32.mrf.mxu0
        %v2261 = vadd.f32 0.0, %v2260
        %2262 = vmatprep.mubr.bf16.mxu0 0
        %2263 = vmatmul.mubr.bf16.gmra.mxu0 %v2198
        %v2264 = vpop.f32.mrf.mxu0
        %v2265 = vadd.f32 0.0, %v2264
        %v2266 = vpop.f32.mrf.mxu0
        %v2267 = vadd.f32 0.0, %v2266
        %v2268 = vpop.f32.mrf.mxu0
        %v2269 = vadd.f32 0.0, %v2268
        %v2270 = vpop.f32.mrf.mxu0
        %v2271 = vadd.f32 0.0, %v2270
        %2272 = vdwg.mxu0
        %v2274 = vsel %vm1734, %v2095, 0
        %v2277 = vsel %vm1734, %v2096, 0
        %v2280 = vsel %vm1734, %v2097, 0
        %v2283 = vsel %vm1734, %v2098, 0
        %2285 = vmatprep.subr.bf16.mxu0 0
        %2286 = vmatpush1.bf16.msra.mxu0 0
        %2287 = vmatprep.subr.bf16.mxu0 0
        %2288 = vmatpush1.bf16.msra.mxu0 0
        %2289 = vmatprep.subr.bf16.mxu0 0
        %2290 = vmatpush1.bf16.msra.mxu0 0
        %2291 = vmatprep.subr.bf16.mxu0 0
        %2292 = vmatpush1.bf16.msra.mxu0 0
        %2293 = vmatprep.subr.bf16.mxu0 %v1381
        %2294 = vmatpush1.bf16.msra.mxu0 %v1380
        %2295 = vmatprep.subr.bf16.mxu0 %v1379
        %2296 = vmatpush1.bf16.msra.mxu0 %v1378
        %2297 = vmatprep.subr.bf16.mxu0 %v1377
        %2298 = vmatpush1.bf16.msra.mxu0 %v1376
        %2299 = vmatprep.subr.bf16.mxu0 %v1375
        %2300 = vmatpush1.bf16.msra.mxu0 %v1374
        %2301 = vmatprep.subr.bf16.mxu0 0
        %2302 = vmatpush2.bf16.msra.mxu0 0
        %2303 = vmatprep.subr.bf16.mxu0 0
        %2304 = vmatpush2.bf16.msra.mxu0 0
        %2305 = vmatprep.subr.bf16.mxu0 0
        %2306 = vmatpush2.bf16.msra.mxu0 0
        %2307 = vmatprep.subr.bf16.mxu0 0
        %2308 = vmatpush2.bf16.msra.mxu0 0
        %2309 = vmatprep.subr.bf16.mxu0 0
        %2310 = vmatpush2.bf16.msra.mxu0 0
        %2311 = vmatprep.subr.bf16.mxu0 0
        %2312 = vmatpush2.bf16.msra.mxu0 0
        %2313 = vmatprep.subr.bf16.mxu0 0
        %2314 = vmatpush2.bf16.msra.mxu0 0
        %2315 = vmatprep.subr.bf16.mxu0 0
        %2316 = vmatpush2.bf16.msra.mxu0 0
        %2317 = vmatprep.mubr.bf16.mxu0 0
        %2318 = vmatmul.mubr.bf16.gmra.mxu0 %v2274
        %v2319 = vpop.f32.mrf.mxu0
        %v2320 = vadd.f32 0.0, %v2319
        %v2321 = vpop.f32.mrf.mxu0
        %v2322 = vadd.f32 0.0, %v2321
        %v2323 = vpop.f32.mrf.mxu0
        %v2324 = vadd.f32 0.0, %v2323
        %v2325 = vpop.f32.mrf.mxu0
        %v2326 = vadd.f32 0.0, %v2325
        %2327 = vmatprep.mubr.bf16.mxu0 0
        %2328 = vmatmul.mubr.bf16.gmra.mxu0 %v2277
        %v2329 = vpop.f32.mrf.mxu0
        %v2330 = vadd.f32 0.0, %v2329
        %v2331 = vpop.f32.mrf.mxu0
        %v2332 = vadd.f32 0.0, %v2331
        %v2333 = vpop.f32.mrf.mxu0
        %v2334 = vadd.f32 0.0, %v2333
        %v2335 = vpop.f32.mrf.mxu0
        %v2336 = vadd.f32 0.0, %v2335
        %2337 = vmatprep.mubr.bf16.mxu0 0
        %2338 = vmatmul.mubr.bf16.gmra.mxu0 %v2280
        %v2339 = vpop.f32.mrf.mxu0
        %v2340 = vadd.f32 0.0, %v2339
        %v2341 = vpop.f32.mrf.mxu0
        %v2342 = vadd.f32 0.0, %v2341
        %v2343 = vpop.f32.mrf.mxu0
        %v2344 = vadd.f32 0.0, %v2343
        %v2345 = vpop.f32.mrf.mxu0
        %v2346 = vadd.f32 0.0, %v2345
        %2347 = vmatprep.mubr.bf16.mxu0 0
        %2348 = vmatmul.mubr.bf16.gmra.mxu0 %v2283
        %v2349 = vpop.f32.mrf.mxu0
        %v2350 = vadd.f32 0.0, %v2349
        %v2351 = vpop.f32.mrf.mxu0
        %v2352 = vadd.f32 0.0, %v2351
        %v2353 = vpop.f32.mrf.mxu0
        %v2354 = vadd.f32 0.0, %v2353
        %v2355 = vpop.f32.mrf.mxu0
        %v2356 = vadd.f32 0.0, %v2355
        %2357 = vdwg.mxu0
        %v2359 = vsel %vm1734, %v2099, 0
        %v2362 = vsel %vm1734, %v2100, 0
        %v2365 = vsel %vm1734, %v2101, 0
        %v2368 = vsel %vm1734, %v2102, 0
        %2370 = vmatprep.subr.bf16.mxu0 0
        %2371 = vmatpush1.bf16.msra.mxu0 0
        %2372 = vmatprep.subr.bf16.mxu0 0
        %2373 = vmatpush1.bf16.msra.mxu0 0
        %2374 = vmatprep.subr.bf16.mxu0 0
        %2375 = vmatpush1.bf16.msra.mxu0 0
        %2376 = vmatprep.subr.bf16.mxu0 0
        %2377 = vmatpush1.bf16.msra.mxu0 0
        %2378 = vmatprep.subr.bf16.mxu0 %v1389
        %2379 = vmatpush1.bf16.msra.mxu0 %v1388
        %2380 = vmatprep.subr.bf16.mxu0 %v1387
        %2381 = vmatpush1.bf16.msra.mxu0 %v1386
        %2382 = vmatprep.subr.bf16.mxu0 %v1385
        %2383 = vmatpush1.bf16.msra.mxu0 %v1384
        %2384 = vmatprep.subr.bf16.mxu0 %v1383
        %2385 = vmatpush1.bf16.msra.mxu0 %v1382
        %2386 = vmatprep.subr.bf16.mxu0 0
        %2387 = vmatpush2.bf16.msra.mxu0 0
        %2388 = vmatprep.subr.bf16.mxu0 0
        %2389 = vmatpush2.bf16.msra.mxu0 0
        %2390 = vmatprep.subr.bf16.mxu0 0
        %2391 = vmatpush2.bf16.msra.mxu0 0
        %2392 = vmatprep.subr.bf16.mxu0 0
        %2393 = vmatpush2.bf16.msra.mxu0 0
        %2394 = vmatprep.subr.bf16.mxu0 0
        %2395 = vmatpush2.bf16.msra.mxu0 0
        %2396 = vmatprep.subr.bf16.mxu0 0
        %2397 = vmatpush2.bf16.msra.mxu0 0
        %2398 = vmatprep.subr.bf16.mxu0 0
        %2399 = vmatpush2.bf16.msra.mxu0 0
        %2400 = vmatprep.subr.bf16.mxu0 0
        %2401 = vmatpush2.bf16.msra.mxu0 0
        %2402 = vmatprep.mubr.bf16.mxu0 0
        %2403 = vmatmul.mubr.bf16.gmra.mxu0 %v2359
        %v2404 = vpop.f32.mrf.mxu0
        %v2405 = vadd.f32 0.0, %v2404
        %v2406 = vpop.f32.mrf.mxu0
        %v2407 = vadd.f32 0.0, %v2406
        %v2408 = vpop.f32.mrf.mxu0
        %v2409 = vadd.f32 0.0, %v2408
        %v2410 = vpop.f32.mrf.mxu0
        %v2411 = vadd.f32 0.0, %v2410
        %2412 = vmatprep.mubr.bf16.mxu0 0
        %2413 = vmatmul.mubr.bf16.gmra.mxu0 %v2362
        %v2414 = vpop.f32.mrf.mxu0
        %v2415 = vadd.f32 0.0, %v2414
        %v2416 = vpop.f32.mrf.mxu0
        %v2417 = vadd.f32 0.0, %v2416
        %v2418 = vpop.f32.mrf.mxu0
        %v2419 = vadd.f32 0.0, %v2418
        %v2420 = vpop.f32.mrf.mxu0
        %v2421 = vadd.f32 0.0, %v2420
        %2422 = vmatprep.mubr.bf16.mxu0 0
        %2423 = vmatmul.mubr.bf16.gmra.mxu0 %v2365
        %v2424 = vpop.f32.mrf.mxu0
        %v2425 = vadd.f32 0.0, %v2424
        %v2426 = vpop.f32.mrf.mxu0
        %v2427 = vadd.f32 0.0, %v2426
        %v2428 = vpop.f32.mrf.mxu0
        %v2429 = vadd.f32 0.0, %v2428
        %v2430 = vpop.f32.mrf.mxu0
        %v2431 = vadd.f32 0.0, %v2430
        %2432 = vmatprep.mubr.bf16.mxu0 0
        %2433 = vmatmul.mubr.bf16.gmra.mxu0 %v2368
        %v2434 = vpop.f32.mrf.mxu0
        %v2435 = vadd.f32 0.0, %v2434
        %v2436 = vpop.f32.mrf.mxu0
        %v2437 = vadd.f32 0.0, %v2436
        %v2438 = vpop.f32.mrf.mxu0
        %v2439 = vadd.f32 0.0, %v2438
        %v2440 = vpop.f32.mrf.mxu0
        %v2441 = vadd.f32 0.0, %v2440
        %2442 = vdwg.mxu0
        %v2443 = vpack.c.bf16 %v2154, %v2150
        %v2444 = vpack.c.bf16 %v2156, %v2152
        %v2445 = vpack.c.bf16 %v2164, %v2160
        %v2446 = vpack.c.bf16 %v2166, %v2162
        %v2447 = vpack.c.bf16 %v2174, %v2170
        %v2448 = vpack.c.bf16 %v2176, %v2172
        %v2449 = vpack.c.bf16 %v2184, %v2180
        %v2450 = vpack.c.bf16 %v2186, %v2182
        %v2451 = vpack.c.bf16 %v2239, %v2235
        %v2452 = vpack.c.bf16 %v2241, %v2237
        %v2453 = vpack.c.bf16 %v2249, %v2245
        %v2454 = vpack.c.bf16 %v2251, %v2247
        %v2455 = vpack.c.bf16 %v2259, %v2255
        %v2456 = vpack.c.bf16 %v2261, %v2257
        %v2457 = vpack.c.bf16 %v2269, %v2265
        %v2458 = vpack.c.bf16 %v2271, %v2267
        %v2459 = vpack.c.bf16 %v2324, %v2320
        %v2460 = vpack.c.bf16 %v2326, %v2322
        %v2461 = vpack.c.bf16 %v2334, %v2330
        %v2462 = vpack.c.bf16 %v2336, %v2332
        %v2463 = vpack.c.bf16 %v2344, %v2340
        %v2464 = vpack.c.bf16 %v2346, %v2342
        %v2465 = vpack.c.bf16 %v2354, %v2350
        %v2466 = vpack.c.bf16 %v2356, %v2352
        %v2467 = vpack.c.bf16 %v2409, %v2405
        %v2468 = vpack.c.bf16 %v2411, %v2407
        %v2469 = vpack.c.bf16 %v2419, %v2415
        %v2470 = vpack.c.bf16 %v2421, %v2417
        %v2471 = vpack.c.bf16 %v2429, %v2425
        %v2472 = vpack.c.bf16 %v2431, %v2427
        %v2473 = vpack.c.bf16 %v2439, %v2435
        %v2474 = vpack.c.bf16 %v2441, %v2437
        %v2475 = vld [vmem:[#allocation8] sm:$0xff]
        %v2476 = vld [vmem:[#allocation8 + $0x8] sm:$0xff]
        %v2477 = vld [vmem:[#allocation8 + $0x10] sm:$0xff]
        %v2478 = vld [vmem:[#allocation8 + $0x18] sm:$0xff]
        %v2479 = vld [vmem:[#allocation8 + $0x20] sm:$0xff]
        %v2480 = vld [vmem:[#allocation8 + $0x28] sm:$0xff]
        %v2481 = vld [vmem:[#allocation8 + $0x30] sm:$0xff]
        %v2482 = vld [vmem:[#allocation8 + $0x38] sm:$0xff]
        %v2483 = vld [vmem:[#allocation8 + $0x40] sm:$0xff]
        %v2484 = vld [vmem:[#allocation8 + $0x48] sm:$0xff]
        %v2485 = vld [vmem:[#allocation8 + $0x50] sm:$0xff]
        %v2486 = vld [vmem:[#allocation8 + $0x58] sm:$0xff]
        %v2487 = vld [vmem:[#allocation8 + $0x60] sm:$0xff]
        %v2488 = vld [vmem:[#allocation8 + $0x68] sm:$0xff]
        %v2489 = vld [vmem:[#allocation8 + $0x70] sm:$0xff]
        %v2490 = vld [vmem:[#allocation8 + $0x78] sm:$0xff]
        %v2491 = vld [vmem:[#allocation8 + $0x80] sm:$0xff]
        %v2492 = vld [vmem:[#allocation8 + $0x88] sm:$0xff]
        %v2493 = vld [vmem:[#allocation8 + $0x90] sm:$0xff]
        %v2494 = vld [vmem:[#allocation8 + $0x98] sm:$0xff]
        %v2495 = vld [vmem:[#allocation8 + $0xa0] sm:$0xff]
        %v2496 = vld [vmem:[#allocation8 + $0xa8] sm:$0xff]
        %v2497 = vld [vmem:[#allocation8 + $0xb0] sm:$0xff]
        %v2498 = vld [vmem:[#allocation8 + $0xb8] sm:$0xff]
        %v2499 = vld [vmem:[#allocation8 + $0xc0] sm:$0xff]
        %v2500 = vld [vmem:[#allocation8 + $0xc8] sm:$0xff]
        %v2501 = vld [vmem:[#allocation8 + $0xd0] sm:$0xff]
        %v2502 = vld [vmem:[#allocation8 + $0xd8] sm:$0xff]
        %v2503 = vld [vmem:[#allocation8 + $0xe0] sm:$0xff]
        %v2504 = vld [vmem:[#allocation8 + $0xe8] sm:$0xff]
        %v2505 = vld [vmem:[#allocation8 + $0xf0] sm:$0xff]
        %v2506 = vld [vmem:[#allocation8 + $0xf8] sm:$0xff]
        %v2507 = vld [vmem:[%s5] sm:$0x3]
        %v2509 = vlaneseq
        %v2510 = vshrl.u32 %v2509, 7
        %v2511 = vsub.s32 0, %v2510
        %v2512 = vrot.slane %v2507, %v2511
        %v2513 = vlaneseq
        %v2514 = vshrl.u32 %v2513, 7
        %v2515 = vsub.s32 1, %v2514
        %v2516 = vrot.slane %v2507, %v2515
        %v2551 = vunpack.c.l.b16 %v2475
        %v2552 = vunpack.c.h.b16 %v2475
        %v2553 = vunpack.c.l.b16 %v2476
        %v2554 = vunpack.c.h.b16 %v2476
        %v2555 = vunpack.c.l.b16 %v2477
        %v2556 = vunpack.c.h.b16 %v2477
        %v2557 = vunpack.c.l.b16 %v2478
        %v2558 = vunpack.c.h.b16 %v2478
        %v2559 = vunpack.c.l.b16 %v2479
        %v2560 = vunpack.c.h.b16 %v2479
        %v2561 = vunpack.c.l.b16 %v2480
        %v2562 = vunpack.c.h.b16 %v2480
        %v2563 = vunpack.c.l.b16 %v2481
        %v2564 = vunpack.c.h.b16 %v2481
        %v2565 = vunpack.c.l.b16 %v2482
        %v2566 = vunpack.c.h.b16 %v2482
        %v2567 = vunpack.c.l.b16 %v2483
        %v2568 = vunpack.c.h.b16 %v2483
        %v2569 = vunpack.c.l.b16 %v2484
        %v2570 = vunpack.c.h.b16 %v2484
        %v2571 = vunpack.c.l.b16 %v2485
        %v2572 = vunpack.c.h.b16 %v2485
        %v2573 = vunpack.c.l.b16 %v2486
        %v2574 = vunpack.c.h.b16 %v2486
        %v2575 = vunpack.c.l.b16 %v2487
        %v2576 = vunpack.c.h.b16 %v2487
        %v2577 = vunpack.c.l.b16 %v2488
        %v2578 = vunpack.c.h.b16 %v2488
        %v2579 = vunpack.c.l.b16 %v2489
        %v2580 = vunpack.c.h.b16 %v2489
        %v2581 = vunpack.c.l.b16 %v2490
        %v2582 = vunpack.c.h.b16 %v2490
        %v2583 = vunpack.c.l.b16 %v2491
        %v2584 = vunpack.c.h.b16 %v2491
        %v2585 = vunpack.c.l.b16 %v2492
        %v2586 = vunpack.c.h.b16 %v2492
        %v2587 = vunpack.c.l.b16 %v2493
        %v2588 = vunpack.c.h.b16 %v2493
        %v2589 = vunpack.c.l.b16 %v2494
        %v2590 = vunpack.c.h.b16 %v2494
        %v2591 = vunpack.c.l.b16 %v2495
        %v2592 = vunpack.c.h.b16 %v2495
        %v2593 = vunpack.c.l.b16 %v2496
        %v2594 = vunpack.c.h.b16 %v2496
        %v2595 = vunpack.c.l.b16 %v2497
        %v2596 = vunpack.c.h.b16 %v2497
        %v2597 = vunpack.c.l.b16 %v2498
        %v2598 = vunpack.c.h.b16 %v2498
        %v2599 = vunpack.c.l.b16 %v2499
        %v2600 = vunpack.c.h.b16 %v2499
        %v2601 = vunpack.c.l.b16 %v2500
        %v2602 = vunpack.c.h.b16 %v2500
        %v2603 = vunpack.c.l.b16 %v2501
        %v2604 = vunpack.c.h.b16 %v2501
        %v2605 = vunpack.c.l.b16 %v2502
        %v2606 = vunpack.c.h.b16 %v2502
        %v2607 = vunpack.c.l.b16 %v2503
        %v2608 = vunpack.c.h.b16 %v2503
        %v2609 = vunpack.c.l.b16 %v2504
        %v2610 = vunpack.c.h.b16 %v2504
        %v2611 = vunpack.c.l.b16 %v2505
        %v2612 = vunpack.c.h.b16 %v2505
        %v2613 = vunpack.c.l.b16 %v2506
        %v2614 = vunpack.c.h.b16 %v2506
        %v2615 = vpack.c.b16 %v2553, %v2551
        %v2616 = vpack.c.b16 %v2554, %v2552
        %v2617 = vpack.c.b16 %v2557, %v2555
        %v2618 = vpack.c.b16 %v2558, %v2556
        %v2619 = vpack.c.b16 %v2561, %v2559
        %v2620 = vpack.c.b16 %v2562, %v2560
        %v2621 = vpack.c.b16 %v2565, %v2563
        %v2622 = vpack.c.b16 %v2566, %v2564
        %v2623 = vpack.c.b16 %v2569, %v2567
        %v2624 = vpack.c.b16 %v2570, %v2568
        %v2625 = vpack.c.b16 %v2573, %v2571
        %v2626 = vpack.c.b16 %v2574, %v2572
        %v2627 = vpack.c.b16 %v2577, %v2575
        %v2628 = vpack.c.b16 %v2578, %v2576
        %v2629 = vpack.c.b16 %v2581, %v2579
        %v2630 = vpack.c.b16 %v2582, %v2580
        %v2631 = vpack.c.b16 %v2585, %v2583
        %v2632 = vpack.c.b16 %v2586, %v2584
        %v2633 = vpack.c.b16 %v2589, %v2587
        %v2634 = vpack.c.b16 %v2590, %v2588
        %v2635 = vpack.c.b16 %v2593, %v2591
        %v2636 = vpack.c.b16 %v2594, %v2592
        %v2637 = vpack.c.b16 %v2597, %v2595
        %v2638 = vpack.c.b16 %v2598, %v2596
        %v2639 = vpack.c.b16 %v2601, %v2599
        %v2640 = vpack.c.b16 %v2602, %v2600
        %v2641 = vpack.c.b16 %v2605, %v2603
        %v2642 = vpack.c.b16 %v2606, %v2604
        %v2643 = vpack.c.b16 %v2609, %v2607
        %v2644 = vpack.c.b16 %v2610, %v2608
        %v2645 = vpack.c.b16 %v2613, %v2611
        %v2646 = vpack.c.b16 %v2614, %v2612
        %2679 = vmatprep.subr.bf16.mxu0 %v2630
        %2680 = vmatpush1.bf16.msra.mxu0 %v2629
        %2681 = vmatprep.subr.bf16.mxu0 %v2628
        %2682 = vmatpush1.bf16.msra.mxu0 %v2627
        %2683 = vmatprep.subr.bf16.mxu0 %v2626
        %2684 = vmatpush1.bf16.msra.mxu0 %v2625
        %2685 = vmatprep.subr.bf16.mxu0 %v2624
        %2686 = vmatpush1.bf16.msra.mxu0 %v2623
        %2687 = vmatprep.subr.bf16.mxu0 %v2622
        %2688 = vmatpush1.bf16.msra.mxu0 %v2621
        %2689 = vmatprep.subr.bf16.mxu0 %v2620
        %2690 = vmatpush1.bf16.msra.mxu0 %v2619
        %2691 = vmatprep.subr.bf16.mxu0 %v2618
        %2692 = vmatpush1.bf16.msra.mxu0 %v2617
        %2693 = vmatprep.subr.bf16.mxu0 %v2616
        %2694 = vmatpush1.bf16.msra.mxu0 %v2615
        %2695 = vmatprep.subr.bf16.mxu0 %v2646
        %2696 = vmatpush2.bf16.msra.mxu0 %v2645
        %2697 = vmatprep.subr.bf16.mxu0 %v2644
        %2698 = vmatpush2.bf16.msra.mxu0 %v2643
        %2699 = vmatprep.subr.bf16.mxu0 %v2642
        %2700 = vmatpush2.bf16.msra.mxu0 %v2641
        %2701 = vmatprep.subr.bf16.mxu0 %v2640
        %2702 = vmatpush2.bf16.msra.mxu0 %v2639
        %2703 = vmatprep.subr.bf16.mxu0 %v2638
        %2704 = vmatpush2.bf16.msra.mxu0 %v2637
        %2705 = vmatprep.subr.bf16.mxu0 %v2636
        %2706 = vmatpush2.bf16.msra.mxu0 %v2635
        %2707 = vmatprep.subr.bf16.mxu0 %v2634
        %2708 = vmatpush2.bf16.msra.mxu0 %v2633
        %2709 = vmatprep.subr.bf16.mxu0 %v2632
        %2710 = vmatpush2.bf16.msra.mxu0 %v2631
        %2711 = vmatprep.mubr.bf16.mxu0 %v2444
        %2712 = vmatmul.mubr.bf16.gmra.mxu0 %v2443
        %v2713 = vpop.f32.mrf.mxu0
        %v2714 = vadd.f32 %v2512, %v2713
        %v2715 = vpop.f32.mrf.mxu0
        %v2716 = vadd.f32 %v2516, %v2715
        %v2717 = vpop.f32.mrf.mxu0
        %v2718 = vadd.f32 %v2512, %v2717
        %v2719 = vpop.f32.mrf.mxu0
        %v2720 = vadd.f32 %v2516, %v2719
        %2721 = vmatprep.mubr.bf16.mxu0 %v2446
        %2722 = vmatmul.mubr.bf16.gmra.mxu0 %v2445
        %v2723 = vpop.f32.mrf.mxu0
        %v2724 = vadd.f32 %v2512, %v2723
        %v2725 = vpop.f32.mrf.mxu0
        %v2726 = vadd.f32 %v2516, %v2725
        %v2727 = vpop.f32.mrf.mxu0
        %v2728 = vadd.f32 %v2512, %v2727
        %v2729 = vpop.f32.mrf.mxu0
        %v2730 = vadd.f32 %v2516, %v2729
        %2731 = vmatprep.mubr.bf16.mxu0 %v2448
        %2732 = vmatmul.mubr.bf16.gmra.mxu0 %v2447
        %v2733 = vpop.f32.mrf.mxu0
        %v2734 = vadd.f32 %v2512, %v2733
        %v2735 = vpop.f32.mrf.mxu0
        %v2736 = vadd.f32 %v2516, %v2735
        %v2737 = vpop.f32.mrf.mxu0
        %v2738 = vadd.f32 %v2512, %v2737
        %v2739 = vpop.f32.mrf.mxu0
        %v2740 = vadd.f32 %v2516, %v2739
        %2741 = vmatprep.mubr.bf16.mxu0 %v2450
        %2742 = vmatmul.mubr.bf16.gmra.mxu0 %v2449
        %v2743 = vpop.f32.mrf.mxu0
        %v2744 = vadd.f32 %v2512, %v2743
        %v2745 = vpop.f32.mrf.mxu0
        %v2746 = vadd.f32 %v2516, %v2745
        %v2747 = vpop.f32.mrf.mxu0
        %v2748 = vadd.f32 %v2512, %v2747
        %v2749 = vpop.f32.mrf.mxu0
        %v2750 = vadd.f32 %v2516, %v2749
        %2751 = vmatprep.mubr.bf16.mxu0 %v2452
        %2752 = vmatmul.mubr.bf16.gmra.mxu0 %v2451
        %v2753 = vpop.f32.mrf.mxu0
        %v2754 = vadd.f32 %v2512, %v2753
        %v2755 = vpop.f32.mrf.mxu0
        %v2756 = vadd.f32 %v2516, %v2755
        %v2757 = vpop.f32.mrf.mxu0
        %v2758 = vadd.f32 %v2512, %v2757
        %v2759 = vpop.f32.mrf.mxu0
        %v2760 = vadd.f32 %v2516, %v2759
        %2761 = vmatprep.mubr.bf16.mxu0 %v2454
        %2762 = vmatmul.mubr.bf16.gmra.mxu0 %v2453
        %v2763 = vpop.f32.mrf.mxu0
        %v2764 = vadd.f32 %v2512, %v2763
        %v2765 = vpop.f32.mrf.mxu0
        %v2766 = vadd.f32 %v2516, %v2765
        %v2767 = vpop.f32.mrf.mxu0
        %v2768 = vadd.f32 %v2512, %v2767
        %v2769 = vpop.f32.mrf.mxu0
        %v2770 = vadd.f32 %v2516, %v2769
        %2771 = vmatprep.mubr.bf16.mxu0 %v2456
        %2772 = vmatmul.mubr.bf16.gmra.mxu0 %v2455
        %v2773 = vpop.f32.mrf.mxu0
        %v2774 = vadd.f32 %v2512, %v2773
        %v2775 = vpop.f32.mrf.mxu0
        %v2776 = vadd.f32 %v2516, %v2775
        %v2777 = vpop.f32.mrf.mxu0
        %v2778 = vadd.f32 %v2512, %v2777
        %v2779 = vpop.f32.mrf.mxu0
        %v2780 = vadd.f32 %v2516, %v2779
        %2781 = vmatprep.mubr.bf16.mxu0 %v2458
        %2782 = vmatmul.mubr.bf16.gmra.mxu0 %v2457
        %v2783 = vpop.f32.mrf.mxu0
        %v2784 = vadd.f32 %v2512, %v2783
        %v2785 = vpop.f32.mrf.mxu0
        %v2786 = vadd.f32 %v2516, %v2785
        %v2787 = vpop.f32.mrf.mxu0
        %v2788 = vadd.f32 %v2512, %v2787
        %v2789 = vpop.f32.mrf.mxu0
        %v2790 = vadd.f32 %v2516, %v2789
        %2791 = vmatprep.mubr.bf16.mxu0 %v2460
        %2792 = vmatmul.mubr.bf16.gmra.mxu0 %v2459
        %v2793 = vpop.f32.mrf.mxu0
        %v2794 = vadd.f32 %v2512, %v2793
        %v2795 = vpop.f32.mrf.mxu0
        %v2796 = vadd.f32 %v2516, %v2795
        %v2797 = vpop.f32.mrf.mxu0
        %v2798 = vadd.f32 %v2512, %v2797
        %v2799 = vpop.f32.mrf.mxu0
        %v2800 = vadd.f32 %v2516, %v2799
        %2801 = vmatprep.mubr.bf16.mxu0 %v2462
        %2802 = vmatmul.mubr.bf16.gmra.mxu0 %v2461
        %v2803 = vpop.f32.mrf.mxu0
        %v2804 = vadd.f32 %v2512, %v2803
        %v2805 = vpop.f32.mrf.mxu0
        %v2806 = vadd.f32 %v2516, %v2805
        %v2807 = vpop.f32.mrf.mxu0
        %v2808 = vadd.f32 %v2512, %v2807
        %v2809 = vpop.f32.mrf.mxu0
        %v2810 = vadd.f32 %v2516, %v2809
        %2811 = vmatprep.mubr.bf16.mxu0 %v2464
        %2812 = vmatmul.mubr.bf16.gmra.mxu0 %v2463
        %v2813 = vpop.f32.mrf.mxu0
        %v2814 = vadd.f32 %v2512, %v2813
        %v2815 = vpop.f32.mrf.mxu0
        %v2816 = vadd.f32 %v2516, %v2815
        %v2817 = vpop.f32.mrf.mxu0
        %v2818 = vadd.f32 %v2512, %v2817
        %v2819 = vpop.f32.mrf.mxu0
        %v2820 = vadd.f32 %v2516, %v2819
        %2821 = vmatprep.mubr.bf16.mxu0 %v2466
        %2822 = vmatmul.mubr.bf16.gmra.mxu0 %v2465
        %v2823 = vpop.f32.mrf.mxu0
        %v2824 = vadd.f32 %v2512, %v2823
        %v2825 = vpop.f32.mrf.mxu0
        %v2826 = vadd.f32 %v2516, %v2825
        %v2827 = vpop.f32.mrf.mxu0
        %v2828 = vadd.f32 %v2512, %v2827
        %v2829 = vpop.f32.mrf.mxu0
        %v2830 = vadd.f32 %v2516, %v2829
        %2831 = vmatprep.mubr.bf16.mxu0 %v2468
        %2832 = vmatmul.mubr.bf16.gmra.mxu0 %v2467
        %v2833 = vpop.f32.mrf.mxu0
        %v2834 = vadd.f32 %v2512, %v2833
        %v2835 = vpop.f32.mrf.mxu0
        %v2836 = vadd.f32 %v2516, %v2835
        %v2837 = vpop.f32.mrf.mxu0
        %v2838 = vadd.f32 %v2512, %v2837
        %v2839 = vpop.f32.mrf.mxu0
        %v2840 = vadd.f32 %v2516, %v2839
        %2841 = vmatprep.mubr.bf16.mxu0 %v2470
        %2842 = vmatmul.mubr.bf16.gmra.mxu0 %v2469
        %v2843 = vpop.f32.mrf.mxu0
        %v2844 = vadd.f32 %v2512, %v2843
        %v2845 = vpop.f32.mrf.mxu0
        %v2846 = vadd.f32 %v2516, %v2845
        %v2847 = vpop.f32.mrf.mxu0
        %v2848 = vadd.f32 %v2512, %v2847
        %v2849 = vpop.f32.mrf.mxu0
        %v2850 = vadd.f32 %v2516, %v2849
        %2851 = vmatprep.mubr.bf16.mxu0 %v2472
        %2852 = vmatmul.mubr.bf16.gmra.mxu0 %v2471
        %v2853 = vpop.f32.mrf.mxu0
        %v2854 = vadd.f32 %v2512, %v2853
        %v2855 = vpop.f32.mrf.mxu0
        %v2856 = vadd.f32 %v2516, %v2855
        %v2857 = vpop.f32.mrf.mxu0
        %v2858 = vadd.f32 %v2512, %v2857
        %v2859 = vpop.f32.mrf.mxu0
        %v2860 = vadd.f32 %v2516, %v2859
        %2861 = vmatprep.mubr.bf16.mxu0 %v2474
        %2862 = vmatmul.mubr.bf16.gmra.mxu0 %v2473
        %v2863 = vpop.f32.mrf.mxu0
        %v2864 = vadd.f32 %v2512, %v2863
        %v2865 = vpop.f32.mrf.mxu0
        %v2866 = vadd.f32 %v2516, %v2865
        %v2867 = vpop.f32.mrf.mxu0
        %v2868 = vadd.f32 %v2512, %v2867
        %v2869 = vpop.f32.mrf.mxu0
        %v2870 = vadd.f32 %v2516, %v2869
        %2871 = vdwg.mxu0
        %v2872 = vadd.f32 %v438, %v2714
        %v2873 = vadd.f32 %v439, %v2716
        %v2874 = vadd.f32 %v440, %v2718
        %v2875 = vadd.f32 %v441, %v2720
        %v2876 = vadd.f32 %v442, %v2724
        %v2877 = vadd.f32 %v443, %v2726
        %v2878 = vadd.f32 %v444, %v2728
        %v2879 = vadd.f32 %v445, %v2730
        %v2880 = vadd.f32 %v470, %v2734
        %v2881 = vadd.f32 %v471, %v2736
        %v2882 = vadd.f32 %v472, %v2738
        %v2883 = vadd.f32 %v473, %v2740
        %v2884 = vadd.f32 %v474, %v2744
        %v2885 = vadd.f32 %v475, %v2746
        %v2886 = vadd.f32 %v476, %v2748
        %v2887 = vadd.f32 %v477, %v2750
        %v2888 = vadd.f32 %v446, %v2754
        %v2889 = vadd.f32 %v447, %v2756
        %v2890 = vadd.f32 %v448, %v2758
        %v2891 = vadd.f32 %v449, %v2760
        %v2892 = vadd.f32 %v450, %v2764
        %v2893 = vadd.f32 %v451, %v2766
        %v2894 = vadd.f32 %v452, %v2768
        %v2895 = vadd.f32 %v453, %v2770
        %v2896 = vadd.f32 %v478, %v2774
        %v2897 = vadd.f32 %v479, %v2776
        %v2898 = vadd.f32 %v480, %v2778
        %v2899 = vadd.f32 %v481, %v2780
        %v2900 = vadd.f32 %v482, %v2784
        %v2901 = vadd.f32 %v483, %v2786
        %v2902 = vadd.f32 %v484, %v2788
        %v2903 = vadd.f32 %v485, %v2790
        %v2904 = vadd.f32 %v454, %v2794
        %v2905 = vadd.f32 %v455, %v2796
        %v2906 = vadd.f32 %v456, %v2798
        %v2907 = vadd.f32 %v457, %v2800
        %v2908 = vadd.f32 %v458, %v2804
        %v2909 = vadd.f32 %v459, %v2806
        %v2910 = vadd.f32 %v460, %v2808
        %v2911 = vadd.f32 %v461, %v2810
        %v2912 = vadd.f32 %v486, %v2814
        %v2913 = vadd.f32 %v487, %v2816
        %v2914 = vadd.f32 %v488, %v2818
        %v2915 = vadd.f32 %v489, %v2820
        %v2916 = vadd.f32 %v490, %v2824
        %v2917 = vadd.f32 %v491, %v2826
        %v2918 = vadd.f32 %v492, %v2828
        %v2919 = vadd.f32 %v493, %v2830
        %v2920 = vadd.f32 %v462, %v2834
        %v2921 = vadd.f32 %v463, %v2836
        %v2922 = vadd.f32 %v464, %v2838
        %v2923 = vadd.f32 %v465, %v2840
        %v2924 = vadd.f32 %v466, %v2844
        %v2925 = vadd.f32 %v467, %v2846
        %v2926 = vadd.f32 %v468, %v2848
        %v2927 = vadd.f32 %v469, %v2850
        %v2928 = vadd.f32 %v494, %v2854
        %v2929 = vadd.f32 %v495, %v2856
        %v2930 = vadd.f32 %v496, %v2858
        %v2931 = vadd.f32 %v497, %v2860
        %v2932 = vadd.f32 %v498, %v2864
        %v2933 = vadd.f32 %v499, %v2866
        %v2934 = vadd.f32 %v500, %v2868
        %v2935 = vadd.f32 %v501, %v2870
        %v2936 = vadd.f32 %v2872, %v2873
        %2937 = vadd.xlane.f32.xlu0 %v2936
        %v2938 = vpop.xlane.xlu0 %2937
        %v2939 = vadd.f32 %v2874, %v2875
        %2940 = vadd.xlane.f32.xlu0 %v2939
        %v2941 = vpop.xlane.xlu0 %2940
        %v2942 = vadd.f32 %v2876, %v2877
        %2943 = vadd.xlane.f32.xlu0 %v2942
        %v2944 = vpop.xlane.xlu0 %2943
        %v2945 = vadd.f32 %v2878, %v2879
        %2946 = vadd.xlane.f32.xlu0 %v2945
        %v2947 = vpop.xlane.xlu0 %2946
        %v2948 = vadd.f32 %v2880, %v2881
        %2949 = vadd.xlane.f32.xlu0 %v2948
        %v2950 = vpop.xlane.xlu0 %2949
        %v2951 = vadd.f32 %v2882, %v2883
        %2952 = vadd.xlane.f32.xlu0 %v2951
        %v2953 = vpop.xlane.xlu0 %2952
        %v2954 = vadd.f32 %v2884, %v2885
        %2955 = vadd.xlane.f32.xlu0 %v2954
        %v2956 = vpop.xlane.xlu0 %2955
        %v2957 = vadd.f32 %v2886, %v2887
        %2958 = vadd.xlane.f32.xlu0 %v2957
        %v2959 = vpop.xlane.xlu0 %2958
        %v2960 = vadd.f32 %v2888, %v2889
        %2961 = vadd.xlane.f32.xlu0 %v2960
        %v2962 = vpop.xlane.xlu0 %2961
        %v2963 = vadd.f32 %v2890, %v2891
        %2964 = vadd.xlane.f32.xlu0 %v2963
        %v2965 = vpop.xlane.xlu0 %2964
        %v2966 = vadd.f32 %v2892, %v2893
        %2967 = vadd.xlane.f32.xlu0 %v2966
        %v2968 = vpop.xlane.xlu0 %2967
        %v2969 = vadd.f32 %v2894, %v2895
        %2970 = vadd.xlane.f32.xlu0 %v2969
        %v2971 = vpop.xlane.xlu0 %2970
        %v2972 = vadd.f32 %v2896, %v2897
        %2973 = vadd.xlane.f32.xlu0 %v2972
        %v2974 = vpop.xlane.xlu0 %2973
        %v2975 = vadd.f32 %v2898, %v2899
        %2976 = vadd.xlane.f32.xlu0 %v2975
        %v2977 = vpop.xlane.xlu0 %2976
        %v2978 = vadd.f32 %v2900, %v2901
        %2979 = vadd.xlane.f32.xlu0 %v2978
        %v2980 = vpop.xlane.xlu0 %2979
        %v2981 = vadd.f32 %v2902, %v2903
        %2982 = vadd.xlane.f32.xlu0 %v2981
        %v2983 = vpop.xlane.xlu0 %2982
        %v2984 = vadd.f32 %v2904, %v2905
        %2985 = vadd.xlane.f32.xlu0 %v2984
        %v2986 = vpop.xlane.xlu0 %2985
        %v2987 = vadd.f32 %v2906, %v2907
        %2988 = vadd.xlane.f32.xlu0 %v2987
        %v2989 = vpop.xlane.xlu0 %2988
        %v2990 = vadd.f32 %v2908, %v2909
        %2991 = vadd.xlane.f32.xlu0 %v2990
        %v2992 = vpop.xlane.xlu0 %2991
        %v2993 = vadd.f32 %v2910, %v2911
        %2994 = vadd.xlane.f32.xlu0 %v2993
        %v2995 = vpop.xlane.xlu0 %2994
        %v2996 = vadd.f32 %v2912, %v2913
        %2997 = vadd.xlane.f32.xlu0 %v2996
        %v2998 = vpop.xlane.xlu0 %2997
        %v2999 = vadd.f32 %v2914, %v2915
        %3000 = vadd.xlane.f32.xlu0 %v2999
        %v3001 = vpop.xlane.xlu0 %3000
        %v3002 = vadd.f32 %v2916, %v2917
        %3003 = vadd.xlane.f32.xlu0 %v3002
        %v3004 = vpop.xlane.xlu0 %3003
        %v3005 = vadd.f32 %v2918, %v2919
        %3006 = vadd.xlane.f32.xlu0 %v3005
        %v3007 = vpop.xlane.xlu0 %3006
        %v3008 = vadd.f32 %v2920, %v2921
        %3009 = vadd.xlane.f32.xlu0 %v3008
        %v3010 = vpop.xlane.xlu0 %3009
        %v3011 = vadd.f32 %v2922, %v2923
        %3012 = vadd.xlane.f32.xlu0 %v3011
        %v3013 = vpop.xlane.xlu0 %3012
        %v3014 = vadd.f32 %v2924, %v2925
        %3015 = vadd.xlane.f32.xlu0 %v3014
        %v3016 = vpop.xlane.xlu0 %3015
        %v3017 = vadd.f32 %v2926, %v2927
        %3018 = vadd.xlane.f32.xlu0 %v3017
        %v3019 = vpop.xlane.xlu0 %3018
        %v3020 = vadd.f32 %v2928, %v2929
        %3021 = vadd.xlane.f32.xlu0 %v3020
        %v3022 = vpop.xlane.xlu0 %3021
        %v3023 = vadd.f32 %v2930, %v2931
        %3024 = vadd.xlane.f32.xlu0 %v3023
        %v3025 = vpop.xlane.xlu0 %3024
        %v3026 = vadd.f32 %v2932, %v2933
        %3027 = vadd.xlane.f32.xlu0 %v3026
        %v3028 = vpop.xlane.xlu0 %3027
        %v3029 = vadd.f32 %v2934, %v2935
        %3030 = vadd.xlane.f32.xlu0 %v3029
        %v3031 = vpop.xlane.xlu0 %3030
        %v3032 = vrcp.pop 256.0
        %v3033 = vmul.f32 %v2938, %v3032
        %v3034 = vmul.f32 %v2941, %v3032
        %v3035 = vmul.f32 %v2944, %v3032
        %v3036 = vmul.f32 %v2947, %v3032
        %v3037 = vmul.f32 %v2950, %v3032
        %v3038 = vmul.f32 %v2953, %v3032
        %v3039 = vmul.f32 %v2956, %v3032
        %v3040 = vmul.f32 %v2959, %v3032
        %v3041 = vmul.f32 %v2962, %v3032
        %v3042 = vmul.f32 %v2965, %v3032
        %v3043 = vmul.f32 %v2968, %v3032
        %v3044 = vmul.f32 %v2971, %v3032
        %v3045 = vmul.f32 %v2974, %v3032
        %v3046 = vmul.f32 %v2977, %v3032
        %v3047 = vmul.f32 %v2980, %v3032
        %v3048 = vmul.f32 %v2983, %v3032
        %v3049 = vmul.f32 %v2986, %v3032
        %v3050 = vmul.f32 %v2989, %v3032
        %v3051 = vmul.f32 %v2992, %v3032
        %v3052 = vmul.f32 %v2995, %v3032
        %v3053 = vmul.f32 %v2998, %v3032
        %v3054 = vmul.f32 %v3001, %v3032
        %v3055 = vmul.f32 %v3004, %v3032
        %v3056 = vmul.f32 %v3007, %v3032
        %v3057 = vmul.f32 %v3010, %v3032
        %v3058 = vmul.f32 %v3013, %v3032
        %v3059 = vmul.f32 %v3016, %v3032
        %v3060 = vmul.f32 %v3019, %v3032
        %v3061 = vmul.f32 %v3022, %v3032
        %v3062 = vmul.f32 %v3025, %v3032
        %v3063 = vmul.f32 %v3028, %v3032
        %v3064 = vmul.f32 %v3031, %v3032
        %v3065 = vsub.f32 %v2872, %v3033
        %v3066 = vsub.f32 %v2873, %v3033
        %v3067 = vsub.f32 %v2874, %v3034
        %v3068 = vsub.f32 %v2875, %v3034
        %v3069 = vsub.f32 %v2876, %v3035
        %v3070 = vsub.f32 %v2877, %v3035
        %v3071 = vsub.f32 %v2878, %v3036
        %v3072 = vsub.f32 %v2879, %v3036
        %v3073 = vsub.f32 %v2880, %v3037
        %v3074 = vsub.f32 %v2881, %v3037
        %v3075 = vsub.f32 %v2882, %v3038
        %v3076 = vsub.f32 %v2883, %v3038
        %v3077 = vsub.f32 %v2884, %v3039
        %v3078 = vsub.f32 %v2885, %v3039
        %v3079 = vsub.f32 %v2886, %v3040
        %v3080 = vsub.f32 %v2887, %v3040
        %v3081 = vsub.f32 %v2888, %v3041
        %v3082 = vsub.f32 %v2889, %v3041
        %v3083 = vsub.f32 %v2890, %v3042
        %v3084 = vsub.f32 %v2891, %v3042
        %v3085 = vsub.f32 %v2892, %v3043
        %v3086 = vsub.f32 %v2893, %v3043
        %v3087 = vsub.f32 %v2894, %v3044
        %v3088 = vsub.f32 %v2895, %v3044
        %v3089 = vsub.f32 %v2896, %v3045
        %v3090 = vsub.f32 %v2897, %v3045
        %v3091 = vsub.f32 %v2898, %v3046
        %v3092 = vsub.f32 %v2899, %v3046
        %v3093 = vsub.f32 %v2900, %v3047
        %v3094 = vsub.f32 %v2901, %v3047
        %v3095 = vsub.f32 %v2902, %v3048
        %v3096 = vsub.f32 %v2903, %v3048
        %v3097 = vsub.f32 %v2904, %v3049
        %v3098 = vsub.f32 %v2905, %v3049
        %v3099 = vsub.f32 %v2906, %v3050
        %v3100 = vsub.f32 %v2907, %v3050
        %v3101 = vsub.f32 %v2908, %v3051
        %v3102 = vsub.f32 %v2909, %v3051
        %v3103 = vsub.f32 %v2910, %v3052
        %v3104 = vsub.f32 %v2911, %v3052
        %v3105 = vsub.f32 %v2912, %v3053
        %v3106 = vsub.f32 %v2913, %v3053
        %v3107 = vsub.f32 %v2914, %v3054
        %v3108 = vsub.f32 %v2915, %v3054
        %v3109 = vsub.f32 %v2916, %v3055
        %v3110 = vsub.f32 %v2917, %v3055
        %v3111 = vsub.f32 %v2918, %v3056
        %v3112 = vsub.f32 %v2919, %v3056
        %v3113 = vsub.f32 %v2920, %v3057
        %v3114 = vsub.f32 %v2921, %v3057
        %v3115 = vsub.f32 %v2922, %v3058
        %v3116 = vsub.f32 %v2923, %v3058
        %v3117 = vsub.f32 %v2924, %v3059
        %v3118 = vsub.f32 %v2925, %v3059
        %v3119 = vsub.f32 %v2926, %v3060
        %v3120 = vsub.f32 %v2927, %v3060
        %v3121 = vsub.f32 %v2928, %v3061
        %v3122 = vsub.f32 %v2929, %v3061
        %v3123 = vsub.f32 %v2930, %v3062
        %v3124 = vsub.f32 %v2931, %v3062
        %v3125 = vsub.f32 %v2932, %v3063
        %v3126 = vsub.f32 %v2933, %v3063
        %v3127 = vsub.f32 %v2934, %v3064
        %v3128 = vsub.f32 %v2935, %v3064
        %v3129 = vmul.f32 %v3065, %v3065
        %v3130 = vmul.f32 %v3066, %v3066
        %v3131 = vmul.f32 %v3067, %v3067
        %v3132 = vmul.f32 %v3068, %v3068
        %v3133 = vmul.f32 %v3069, %v3069
        %v3134 = vmul.f32 %v3070, %v3070
        %v3135 = vmul.f32 %v3071, %v3071
        %v3136 = vmul.f32 %v3072, %v3072
        %v3137 = vmul.f32 %v3073, %v3073
        %v3138 = vmul.f32 %v3074, %v3074
        %v3139 = vmul.f32 %v3075, %v3075
        %v3140 = vmul.f32 %v3076, %v3076
        %v3141 = vmul.f32 %v3077, %v3077
        %v3142 = vmul.f32 %v3078, %v3078
        %v3143 = vmul.f32 %v3079, %v3079
        %v3144 = vmul.f32 %v3080, %v3080
        %v3145 = vmul.f32 %v3081, %v3081
        %v3146 = vmul.f32 %v3082, %v3082
        %v3147 = vmul.f32 %v3083, %v3083
        %v3148 = vmul.f32 %v3084, %v3084
        %v3149 = vmul.f32 %v3085, %v3085
        %v3150 = vmul.f32 %v3086, %v3086
        %v3151 = vmul.f32 %v3087, %v3087
        %v3152 = vmul.f32 %v3088, %v3088
        %v3153 = vmul.f32 %v3089, %v3089
        %v3154 = vmul.f32 %v3090, %v3090
        %v3155 = vmul.f32 %v3091, %v3091
        %v3156 = vmul.f32 %v3092, %v3092
        %v3157 = vmul.f32 %v3093, %v3093
        %v3158 = vmul.f32 %v3094, %v3094
        %v3159 = vmul.f32 %v3095, %v3095
        %v3160 = vmul.f32 %v3096, %v3096
        %v3161 = vmul.f32 %v3097, %v3097
        %v3162 = vmul.f32 %v3098, %v3098
        %v3163 = vmul.f32 %v3099, %v3099
        %v3164 = vmul.f32 %v3100, %v3100
        %v3165 = vmul.f32 %v3101, %v3101
        %v3166 = vmul.f32 %v3102, %v3102
        %v3167 = vmul.f32 %v3103, %v3103
        %v3168 = vmul.f32 %v3104, %v3104
        %v3169 = vmul.f32 %v3105, %v3105
        %v3170 = vmul.f32 %v3106, %v3106
        %v3171 = vmul.f32 %v3107, %v3107
        %v3172 = vmul.f32 %v3108, %v3108
        %v3173 = vmul.f32 %v3109, %v3109
        %v3174 = vmul.f32 %v3110, %v3110
        %v3175 = vmul.f32 %v3111, %v3111
        %v3176 = vmul.f32 %v3112, %v3112
        %v3177 = vmul.f32 %v3113, %v3113
        %v3178 = vmul.f32 %v3114, %v3114
        %v3179 = vmul.f32 %v3115, %v3115
        %v3180 = vmul.f32 %v3116, %v3116
        %v3181 = vmul.f32 %v3117, %v3117
        %v3182 = vmul.f32 %v3118, %v3118
        %v3183 = vmul.f32 %v3119, %v3119
        %v3184 = vmul.f32 %v3120, %v3120
        %v3185 = vmul.f32 %v3121, %v3121
        %v3186 = vmul.f32 %v3122, %v3122
        %v3187 = vmul.f32 %v3123, %v3123
        %v3188 = vmul.f32 %v3124, %v3124
        %v3189 = vmul.f32 %v3125, %v3125
        %v3190 = vmul.f32 %v3126, %v3126
        %v3191 = vmul.f32 %v3127, %v3127
        %v3192 = vmul.f32 %v3128, %v3128
        %v3193 = vadd.f32 %v3129, %v3130
        %3194 = vadd.xlane.f32.xlu0 %v3193
        %v3195 = vpop.xlane.xlu0 %3194
        %v3196 = vadd.f32 %v3131, %v3132
        %3197 = vadd.xlane.f32.xlu0 %v3196
        %v3198 = vpop.xlane.xlu0 %3197
        %v3199 = vadd.f32 %v3133, %v3134
        %3200 = vadd.xlane.f32.xlu0 %v3199
        %v3201 = vpop.xlane.xlu0 %3200
        %v3202 = vadd.f32 %v3135, %v3136
        %3203 = vadd.xlane.f32.xlu0 %v3202
        %v3204 = vpop.xlane.xlu0 %3203
        %v3205 = vadd.f32 %v3137, %v3138
        %3206 = vadd.xlane.f32.xlu0 %v3205
        %v3207 = vpop.xlane.xlu0 %3206
        %v3208 = vadd.f32 %v3139, %v3140
        %3209 = vadd.xlane.f32.xlu0 %v3208
        %v3210 = vpop.xlane.xlu0 %3209
        %v3211 = vadd.f32 %v3141, %v3142
        %3212 = vadd.xlane.f32.xlu0 %v3211
        %v3213 = vpop.xlane.xlu0 %3212
        %v3214 = vadd.f32 %v3143, %v3144
        %3215 = vadd.xlane.f32.xlu0 %v3214
        %v3216 = vpop.xlane.xlu0 %3215
        %v3217 = vadd.f32 %v3145, %v3146
        %3218 = vadd.xlane.f32.xlu0 %v3217
        %v3219 = vpop.xlane.xlu0 %3218
        %v3220 = vadd.f32 %v3147, %v3148
        %3221 = vadd.xlane.f32.xlu0 %v3220
        %v3222 = vpop.xlane.xlu0 %3221
        %v3223 = vadd.f32 %v3149, %v3150
        %3224 = vadd.xlane.f32.xlu0 %v3223
        %v3225 = vpop.xlane.xlu0 %3224
        %v3226 = vadd.f32 %v3151, %v3152
        %3227 = vadd.xlane.f32.xlu0 %v3226
        %v3228 = vpop.xlane.xlu0 %3227
        %v3229 = vadd.f32 %v3153, %v3154
        %3230 = vadd.xlane.f32.xlu0 %v3229
        %v3231 = vpop.xlane.xlu0 %3230
        %v3232 = vadd.f32 %v3155, %v3156
        %3233 = vadd.xlane.f32.xlu0 %v3232
        %v3234 = vpop.xlane.xlu0 %3233
        %v3235 = vadd.f32 %v3157, %v3158
        %3236 = vadd.xlane.f32.xlu0 %v3235
        %v3237 = vpop.xlane.xlu0 %3236
        %v3238 = vadd.f32 %v3159, %v3160
        %3239 = vadd.xlane.f32.xlu0 %v3238
        %v3240 = vpop.xlane.xlu0 %3239
        %v3241 = vadd.f32 %v3161, %v3162
        %3242 = vadd.xlane.f32.xlu0 %v3241
        %v3243 = vpop.xlane.xlu0 %3242
        %v3244 = vadd.f32 %v3163, %v3164
        %3245 = vadd.xlane.f32.xlu0 %v3244
        %v3246 = vpop.xlane.xlu0 %3245
        %v3247 = vadd.f32 %v3165, %v3166
        %3248 = vadd.xlane.f32.xlu0 %v3247
        %v3249 = vpop.xlane.xlu0 %3248
        %v3250 = vadd.f32 %v3167, %v3168
        %3251 = vadd.xlane.f32.xlu0 %v3250
        %v3252 = vpop.xlane.xlu0 %3251
        %v3253 = vadd.f32 %v3169, %v3170
        %3254 = vadd.xlane.f32.xlu0 %v3253
        %v3255 = vpop.xlane.xlu0 %3254
        %v3256 = vadd.f32 %v3171, %v3172
        %3257 = vadd.xlane.f32.xlu0 %v3256
        %v3258 = vpop.xlane.xlu0 %3257
        %v3259 = vadd.f32 %v3173, %v3174
        %3260 = vadd.xlane.f32.xlu0 %v3259
        %v3261 = vpop.xlane.xlu0 %3260
        %v3262 = vadd.f32 %v3175, %v3176
        %3263 = vadd.xlane.f32.xlu0 %v3262
        %v3264 = vpop.xlane.xlu0 %3263
        %v3265 = vadd.f32 %v3177, %v3178
        %3266 = vadd.xlane.f32.xlu0 %v3265
        %v3267 = vpop.xlane.xlu0 %3266
        %v3268 = vadd.f32 %v3179, %v3180
        %3269 = vadd.xlane.f32.xlu0 %v3268
        %v3270 = vpop.xlane.xlu0 %3269
        %v3271 = vadd.f32 %v3181, %v3182
        %3272 = vadd.xlane.f32.xlu0 %v3271
        %v3273 = vpop.xlane.xlu0 %3272
        %v3274 = vadd.f32 %v3183, %v3184
        %3275 = vadd.xlane.f32.xlu0 %v3274
        %v3276 = vpop.xlane.xlu0 %3275
        %v3277 = vadd.f32 %v3185, %v3186
        %3278 = vadd.xlane.f32.xlu0 %v3277
        %v3279 = vpop.xlane.xlu0 %3278
        %v3280 = vadd.f32 %v3187, %v3188
        %3281 = vadd.xlane.f32.xlu0 %v3280
        %v3282 = vpop.xlane.xlu0 %3281
        %v3283 = vadd.f32 %v3189, %v3190
        %3284 = vadd.xlane.f32.xlu0 %v3283
        %v3285 = vpop.xlane.xlu0 %3284
        %v3286 = vadd.f32 %v3191, %v3192
        %3287 = vadd.xlane.f32.xlu0 %v3286
        %v3288 = vpop.xlane.xlu0 %3287
        %v3289 = vmul.f32 %v3195, %v3032
        %v3290 = vmul.f32 %v3198, %v3032
        %v3291 = vmul.f32 %v3201, %v3032
        %v3292 = vmul.f32 %v3204, %v3032
        %v3293 = vmul.f32 %v3207, %v3032
        %v3294 = vmul.f32 %v3210, %v3032
        %v3295 = vmul.f32 %v3213, %v3032
        %v3296 = vmul.f32 %v3216, %v3032
        %v3297 = vmul.f32 %v3219, %v3032
        %v3298 = vmul.f32 %v3222, %v3032
        %v3299 = vmul.f32 %v3225, %v3032
        %v3300 = vmul.f32 %v3228, %v3032
        %v3301 = vmul.f32 %v3231, %v3032
        %v3302 = vmul.f32 %v3234, %v3032
        %v3303 = vmul.f32 %v3237, %v3032
        %v3304 = vmul.f32 %v3240, %v3032
        %v3305 = vmul.f32 %v3243, %v3032
        %v3306 = vmul.f32 %v3246, %v3032
        %v3307 = vmul.f32 %v3249, %v3032
        %v3308 = vmul.f32 %v3252, %v3032
        %v3309 = vmul.f32 %v3255, %v3032
        %v3310 = vmul.f32 %v3258, %v3032
        %v3311 = vmul.f32 %v3261, %v3032
        %v3312 = vmul.f32 %v3264, %v3032
        %v3313 = vmul.f32 %v3267, %v3032
        %v3314 = vmul.f32 %v3270, %v3032
        %v3315 = vmul.f32 %v3273, %v3032
        %v3316 = vmul.f32 %v3276, %v3032
        %v3317 = vmul.f32 %v3279, %v3032
        %v3318 = vmul.f32 %v3282, %v3032
        %v3319 = vmul.f32 %v3285, %v3032
        %v3320 = vmul.f32 %v3288, %v3032
        %v3321 = vadd.f32 %v3289, 1e-05
        %v3322 = vadd.f32 %v3290, 1e-05
        %v3323 = vadd.f32 %v3291, 1e-05
        %v3324 = vadd.f32 %v3292, 1e-05
        %v3325 = vadd.f32 %v3293, 1e-05
        %v3326 = vadd.f32 %v3294, 1e-05
        %v3327 = vadd.f32 %v3295, 1e-05
        %v3328 = vadd.f32 %v3296, 1e-05
        %v3329 = vadd.f32 %v3297, 1e-05
        %v3330 = vadd.f32 %v3298, 1e-05
        %v3331 = vadd.f32 %v3299, 1e-05
        %v3332 = vadd.f32 %v3300, 1e-05
        %v3333 = vadd.f32 %v3301, 1e-05
        %v3334 = vadd.f32 %v3302, 1e-05
        %v3335 = vadd.f32 %v3303, 1e-05
        %v3336 = vadd.f32 %v3304, 1e-05
        %v3337 = vadd.f32 %v3305, 1e-05
        %v3338 = vadd.f32 %v3306, 1e-05
        %v3339 = vadd.f32 %v3307, 1e-05
        %v3340 = vadd.f32 %v3308, 1e-05
        %v3341 = vadd.f32 %v3309, 1e-05
        %v3342 = vadd.f32 %v3310, 1e-05
        %v3343 = vadd.f32 %v3311, 1e-05
        %v3344 = vadd.f32 %v3312, 1e-05
        %v3345 = vadd.f32 %v3313, 1e-05
        %v3346 = vadd.f32 %v3314, 1e-05
        %v3347 = vadd.f32 %v3315, 1e-05
        %v3348 = vadd.f32 %v3316, 1e-05
        %v3349 = vadd.f32 %v3317, 1e-05
        %v3350 = vadd.f32 %v3318, 1e-05
        %v3351 = vadd.f32 %v3319, 1e-05
        %v3352 = vadd.f32 %v3320, 1e-05
        %v3353 = vrsqrt.pop %v3321
        %v3354 = vrsqrt.pop %v3322
        %v3355 = vrsqrt.pop %v3323
        %v3356 = vrsqrt.pop %v3324
        %v3357 = vrsqrt.pop %v3325
        %v3358 = vrsqrt.pop %v3326
        %v3359 = vrsqrt.pop %v3327
        %v3360 = vrsqrt.pop %v3328
        %v3361 = vrsqrt.pop %v3329
        %v3362 = vrsqrt.pop %v3330
        %v3363 = vrsqrt.pop %v3331
        %v3364 = vrsqrt.pop %v3332
        %v3365 = vrsqrt.pop %v3333
        %v3366 = vrsqrt.pop %v3334
        %v3367 = vrsqrt.pop %v3335
        %v3368 = vrsqrt.pop %v3336
        %v3369 = vrsqrt.pop %v3337
        %v3370 = vrsqrt.pop %v3338
        %v3371 = vrsqrt.pop %v3339
        %v3372 = vrsqrt.pop %v3340
        %v3373 = vrsqrt.pop %v3341
        %v3374 = vrsqrt.pop %v3342
        %v3375 = vrsqrt.pop %v3343
        %v3376 = vrsqrt.pop %v3344
        %v3377 = vrsqrt.pop %v3345
        %v3378 = vrsqrt.pop %v3346
        %v3379 = vrsqrt.pop %v3347
        %v3380 = vrsqrt.pop %v3348
        %v3381 = vrsqrt.pop %v3349
        %v3382 = vrsqrt.pop %v3350
        %v3383 = vrsqrt.pop %v3351
        %v3384 = vrsqrt.pop %v3352
        %v3385 = vmul.f32 %v3065, %v3353
        %v3386 = vmul.f32 %v3066, %v3353
        %v3387 = vmul.f32 %v3067, %v3354
        %v3388 = vmul.f32 %v3068, %v3354
        %v3389 = vmul.f32 %v3069, %v3355
        %v3390 = vmul.f32 %v3070, %v3355
        %v3391 = vmul.f32 %v3071, %v3356
        %v3392 = vmul.f32 %v3072, %v3356
        %v3393 = vmul.f32 %v3073, %v3357
        %v3394 = vmul.f32 %v3074, %v3357
        %v3395 = vmul.f32 %v3075, %v3358
        %v3396 = vmul.f32 %v3076, %v3358
        %v3397 = vmul.f32 %v3077, %v3359
        %v3398 = vmul.f32 %v3078, %v3359
        %v3399 = vmul.f32 %v3079, %v3360
        %v3400 = vmul.f32 %v3080, %v3360
        %v3401 = vmul.f32 %v3081, %v3361
        %v3402 = vmul.f32 %v3082, %v3361
        %v3403 = vmul.f32 %v3083, %v3362
        %v3404 = vmul.f32 %v3084, %v3362
        %v3405 = vmul.f32 %v3085, %v3363
        %v3406 = vmul.f32 %v3086, %v3363
        %v3407 = vmul.f32 %v3087, %v3364
        %v3408 = vmul.f32 %v3088, %v3364
        %v3409 = vmul.f32 %v3089, %v3365
        %v3410 = vmul.f32 %v3090, %v3365
        %v3411 = vmul.f32 %v3091, %v3366
        %v3412 = vmul.f32 %v3092, %v3366
        %v3413 = vmul.f32 %v3093, %v3367
        %v3414 = vmul.f32 %v3094, %v3367
        %v3415 = vmul.f32 %v3095, %v3368
        %v3416 = vmul.f32 %v3096, %v3368
        %v3417 = vmul.f32 %v3097, %v3369
        %v3418 = vmul.f32 %v3098, %v3369
        %v3419 = vmul.f32 %v3099, %v3370
        %v3420 = vmul.f32 %v3100, %v3370
        %v3421 = vmul.f32 %v3101, %v3371
        %v3422 = vmul.f32 %v3102, %v3371
        %v3423 = vmul.f32 %v3103, %v3372
        %v3424 = vmul.f32 %v3104, %v3372
        %v3425 = vmul.f32 %v3105, %v3373
        %v3426 = vmul.f32 %v3106, %v3373
        %v3427 = vmul.f32 %v3107, %v3374
        %v3428 = vmul.f32 %v3108, %v3374
        %v3429 = vmul.f32 %v3109, %v3375
        %v3430 = vmul.f32 %v3110, %v3375
        %v3431 = vmul.f32 %v3111, %v3376
        %v3432 = vmul.f32 %v3112, %v3376
        %v3433 = vmul.f32 %v3113, %v3377
        %v3434 = vmul.f32 %v3114, %v3377
        %v3435 = vmul.f32 %v3115, %v3378
        %v3436 = vmul.f32 %v3116, %v3378
        %v3437 = vmul.f32 %v3117, %v3379
        %v3438 = vmul.f32 %v3118, %v3379
        %v3439 = vmul.f32 %v3119, %v3380
        %v3440 = vmul.f32 %v3120, %v3380
        %v3441 = vmul.f32 %v3121, %v3381
        %v3442 = vmul.f32 %v3122, %v3381
        %v3443 = vmul.f32 %v3123, %v3382
        %v3444 = vmul.f32 %v3124, %v3382
        %v3445 = vmul.f32 %v3125, %v3383
        %v3446 = vmul.f32 %v3126, %v3383
        %v3447 = vmul.f32 %v3127, %v3384
        %v3448 = vmul.f32 %v3128, %v3384
        %v3449 = vld [vmem:[%s6] sm:$0x3]
        %v3451 = vlaneseq
        %v3452 = vshrl.u32 %v3451, 7
        %v3453 = vsub.s32 0, %v3452
        %v3454 = vrot.slane %v3449, %v3453
        %v3455 = vlaneseq
        %v3456 = vshrl.u32 %v3455, 7
        %v3457 = vsub.s32 1, %v3456
        %v3458 = vrot.slane %v3449, %v3457
        %v3461 = vmul.f32 %v3385, %v3454
        %v3462 = vmul.f32 %v3386, %v3458
        %v3463 = vmul.f32 %v3387, %v3454
        %v3464 = vmul.f32 %v3388, %v3458
        %v3465 = vmul.f32 %v3389, %v3454
        %v3466 = vmul.f32 %v3390, %v3458
        %v3467 = vmul.f32 %v3391, %v3454
        %v3468 = vmul.f32 %v3392, %v3458
        %v3469 = vmul.f32 %v3393, %v3454
        %v3470 = vmul.f32 %v3394, %v3458
        %v3471 = vmul.f32 %v3395, %v3454
        %v3472 = vmul.f32 %v3396, %v3458
        %v3473 = vmul.f32 %v3397, %v3454
        %v3474 = vmul.f32 %v3398, %v3458
        %v3475 = vmul.f32 %v3399, %v3454
        %v3476 = vmul.f32 %v3400, %v3458
        %v3477 = vmul.f32 %v3401, %v3454
        %v3478 = vmul.f32 %v3402, %v3458
        %v3479 = vmul.f32 %v3403, %v3454
        %v3480 = vmul.f32 %v3404, %v3458
        %v3481 = vmul.f32 %v3405, %v3454
        %v3482 = vmul.f32 %v3406, %v3458
        %v3483 = vmul.f32 %v3407, %v3454
        %v3484 = vmul.f32 %v3408, %v3458
        %v3485 = vmul.f32 %v3409, %v3454
        %v3486 = vmul.f32 %v3410, %v3458
        %v3487 = vmul.f32 %v3411, %v3454
        %v3488 = vmul.f32 %v3412, %v3458
        %v3489 = vmul.f32 %v3413, %v3454
        %v3490 = vmul.f32 %v3414, %v3458
        %v3491 = vmul.f32 %v3415, %v3454
        %v3492 = vmul.f32 %v3416, %v3458
        %v3493 = vmul.f32 %v3417, %v3454
        %v3494 = vmul.f32 %v3418, %v3458
        %v3495 = vmul.f32 %v3419, %v3454
        %v3496 = vmul.f32 %v3420, %v3458
        %v3497 = vmul.f32 %v3421, %v3454
        %v3498 = vmul.f32 %v3422, %v3458
        %v3499 = vmul.f32 %v3423, %v3454
        %v3500 = vmul.f32 %v3424, %v3458
        %v3501 = vmul.f32 %v3425, %v3454
        %v3502 = vmul.f32 %v3426, %v3458
        %v3503 = vmul.f32 %v3427, %v3454
        %v3504 = vmul.f32 %v3428, %v3458
        %v3505 = vmul.f32 %v3429, %v3454
        %v3506 = vmul.f32 %v3430, %v3458
        %v3507 = vmul.f32 %v3431, %v3454
        %v3508 = vmul.f32 %v3432, %v3458
        %v3509 = vmul.f32 %v3433, %v3454
        %v3510 = vmul.f32 %v3434, %v3458
        %v3511 = vmul.f32 %v3435, %v3454
        %v3512 = vmul.f32 %v3436, %v3458
        %v3513 = vmul.f32 %v3437, %v3454
        %v3514 = vmul.f32 %v3438, %v3458
        %v3515 = vmul.f32 %v3439, %v3454
        %v3516 = vmul.f32 %v3440, %v3458
        %v3517 = vmul.f32 %v3441, %v3454
        %v3518 = vmul.f32 %v3442, %v3458
        %v3519 = vmul.f32 %v3443, %v3454
        %v3520 = vmul.f32 %v3444, %v3458
        %v3521 = vmul.f32 %v3445, %v3454
        %v3522 = vmul.f32 %v3446, %v3458
        %v3523 = vmul.f32 %v3447, %v3454
        %v3524 = vmul.f32 %v3448, %v3458
        %v3525 = vld [vmem:[%s7] sm:$0x3]
        %v3527 = vlaneseq
        %v3528 = vshrl.u32 %v3527, 7
        %v3529 = vsub.s32 0, %v3528
        %v3530 = vrot.slane %v3525, %v3529
        %v3531 = vlaneseq
        %v3532 = vshrl.u32 %v3531, 7
        %v3533 = vsub.s32 1, %v3532
        %v3534 = vrot.slane %v3525, %v3533
        %v3537 = vadd.f32 %v3461, %v3530
        %v3538 = vadd.f32 %v3462, %v3534
        %v3539 = vadd.f32 %v3463, %v3530
        %v3540 = vadd.f32 %v3464, %v3534
        %v3541 = vadd.f32 %v3465, %v3530
        %v3542 = vadd.f32 %v3466, %v3534
        %v3543 = vadd.f32 %v3467, %v3530
        %v3544 = vadd.f32 %v3468, %v3534
        %v3545 = vadd.f32 %v3469, %v3530
        %v3546 = vadd.f32 %v3470, %v3534
        %v3547 = vadd.f32 %v3471, %v3530
        %v3548 = vadd.f32 %v3472, %v3534
        %v3549 = vadd.f32 %v3473, %v3530
        %v3550 = vadd.f32 %v3474, %v3534
        %v3551 = vadd.f32 %v3475, %v3530
        %v3552 = vadd.f32 %v3476, %v3534
        %v3553 = vadd.f32 %v3477, %v3530
        %v3554 = vadd.f32 %v3478, %v3534
        %v3555 = vadd.f32 %v3479, %v3530
        %v3556 = vadd.f32 %v3480, %v3534
        %v3557 = vadd.f32 %v3481, %v3530
        %v3558 = vadd.f32 %v3482, %v3534
        %v3559 = vadd.f32 %v3483, %v3530
        %v3560 = vadd.f32 %v3484, %v3534
        %v3561 = vadd.f32 %v3485, %v3530
        %v3562 = vadd.f32 %v3486, %v3534
        %v3563 = vadd.f32 %v3487, %v3530
        %v3564 = vadd.f32 %v3488, %v3534
        %v3565 = vadd.f32 %v3489, %v3530
        %v3566 = vadd.f32 %v3490, %v3534
        %v3567 = vadd.f32 %v3491, %v3530
        %v3568 = vadd.f32 %v3492, %v3534
        %v3569 = vadd.f32 %v3493, %v3530
        %v3570 = vadd.f32 %v3494, %v3534
        %v3571 = vadd.f32 %v3495, %v3530
        %v3572 = vadd.f32 %v3496, %v3534
        %v3573 = vadd.f32 %v3497, %v3530
        %v3574 = vadd.f32 %v3498, %v3534
        %v3575 = vadd.f32 %v3499, %v3530
        %v3576 = vadd.f32 %v3500, %v3534
        %v3577 = vadd.f32 %v3501, %v3530
        %v3578 = vadd.f32 %v3502, %v3534
        %v3579 = vadd.f32 %v3503, %v3530
        %v3580 = vadd.f32 %v3504, %v3534
        %v3581 = vadd.f32 %v3505, %v3530
        %v3582 = vadd.f32 %v3506, %v3534
        %v3583 = vadd.f32 %v3507, %v3530
        %v3584 = vadd.f32 %v3508, %v3534
        %v3585 = vadd.f32 %v3509, %v3530
        %v3586 = vadd.f32 %v3510, %v3534
        %v3587 = vadd.f32 %v3511, %v3530
        %v3588 = vadd.f32 %v3512, %v3534
        %v3589 = vadd.f32 %v3513, %v3530
        %v3590 = vadd.f32 %v3514, %v3534
        %v3591 = vadd.f32 %v3515, %v3530
        %v3592 = vadd.f32 %v3516, %v3534
        %v3593 = vadd.f32 %v3517, %v3530
        %v3594 = vadd.f32 %v3518, %v3534
        %v3595 = vadd.f32 %v3519, %v3530
        %v3596 = vadd.f32 %v3520, %v3534
        %v3597 = vadd.f32 %v3521, %v3530
        %v3598 = vadd.f32 %v3522, %v3534
        %v3599 = vadd.f32 %v3523, %v3530
        %v3600 = vadd.f32 %v3524, %v3534
        %3601 = vst [vmem:[%s425] sm:$0xff] %v3537
        %3602 = vst [vmem:[%s425 + $0x8] sm:$0xff] %v3538
        %3603 = vst [vmem:[%s425 + $0x10] sm:$0xff] %v3539
        %3604 = vst [vmem:[%s425 + $0x18] sm:$0xff] %v3540
        %3605 = vst [vmem:[%s425 + $0x20] sm:$0xff] %v3541
        %3606 = vst [vmem:[%s425 + $0x28] sm:$0xff] %v3542
        %3607 = vst [vmem:[%s425 + $0x30] sm:$0xff] %v3543
        %3608 = vst [vmem:[%s425 + $0x38] sm:$0xff] %v3544
        %3609 = vst [vmem:[%s425 + $0x40] sm:$0xff] %v3553
        %3610 = vst [vmem:[%s425 + $0x48] sm:$0xff] %v3554
        %3611 = vst [vmem:[%s425 + $0x50] sm:$0xff] %v3555
        %3612 = vst [vmem:[%s425 + $0x58] sm:$0xff] %v3556
        %3613 = vst [vmem:[%s425 + $0x60] sm:$0xff] %v3557
        %3614 = vst [vmem:[%s425 + $0x68] sm:$0xff] %v3558
        %3615 = vst [vmem:[%s425 + $0x70] sm:$0xff] %v3559
        %3616 = vst [vmem:[%s425 + $0x78] sm:$0xff] %v3560
        %3617 = vst [vmem:[%s425 + $0x80] sm:$0xff] %v3569
        %3618 = vst [vmem:[%s425 + $0x88] sm:$0xff] %v3570
        %3619 = vst [vmem:[%s425 + $0x90] sm:$0xff] %v3571
        %3620 = vst [vmem:[%s425 + $0x98] sm:$0xff] %v3572
        %3621 = vst [vmem:[%s425 + $0xa0] sm:$0xff] %v3573
        %3622 = vst [vmem:[%s425 + $0xa8] sm:$0xff] %v3574
        %3623 = vst [vmem:[%s425 + $0xb0] sm:$0xff] %v3575
        %3624 = vst [vmem:[%s425 + $0xb8] sm:$0xff] %v3576
        %3625 = vst [vmem:[%s425 + $0xc0] sm:$0xff] %v3585
        %3626 = vst [vmem:[%s425 + $0xc8] sm:$0xff] %v3586
        %3627 = vst [vmem:[%s425 + $0xd0] sm:$0xff] %v3587
        %3628 = vst [vmem:[%s425 + $0xd8] sm:$0xff] %v3588
        %3629 = vst [vmem:[%s425 + $0xe0] sm:$0xff] %v3589
        %3630 = vst [vmem:[%s425 + $0xe8] sm:$0xff] %v3590
        %3631 = vst [vmem:[%s425 + $0xf0] sm:$0xff] %v3591
        %3632 = vst [vmem:[%s425 + $0xf8] sm:$0xff] %v3592
        %3633 = vst [vmem:[%s432] sm:$0xff] %v3545
        %3634 = vst [vmem:[%s432 + $0x8] sm:$0xff] %v3546
        %3635 = vst [vmem:[%s432 + $0x10] sm:$0xff] %v3547
        %3636 = vst [vmem:[%s432 + $0x18] sm:$0xff] %v3548
        %3637 = vst [vmem:[%s432 + $0x20] sm:$0xff] %v3549
        %3638 = vst [vmem:[%s432 + $0x28] sm:$0xff] %v3550
        %3639 = vst [vmem:[%s432 + $0x30] sm:$0xff] %v3551
        %3640 = vst [vmem:[%s432 + $0x38] sm:$0xff] %v3552
        %3641 = vst [vmem:[%s432 + $0x40] sm:$0xff] %v3561
        %3642 = vst [vmem:[%s432 + $0x48] sm:$0xff] %v3562
        %3643 = vst [vmem:[%s432 + $0x50] sm:$0xff] %v3563
        %3644 = vst [vmem:[%s432 + $0x58] sm:$0xff] %v3564
        %3645 = vst [vmem:[%s432 + $0x60] sm:$0xff] %v3565
        %3646 = vst [vmem:[%s432 + $0x68] sm:$0xff] %v3566
        %3647 = vst [vmem:[%s432 + $0x70] sm:$0xff] %v3567
        %3648 = vst [vmem:[%s432 + $0x78] sm:$0xff] %v3568
        %3649 = vst [vmem:[%s432 + $0x80] sm:$0xff] %v3577
        %3650 = vst [vmem:[%s432 + $0x88] sm:$0xff] %v3578
        %3651 = vst [vmem:[%s432 + $0x90] sm:$0xff] %v3579
        %3652 = vst [vmem:[%s432 + $0x98] sm:$0xff] %v3580
        %3653 = vst [vmem:[%s432 + $0xa0] sm:$0xff] %v3581
        %3654 = vst [vmem:[%s432 + $0xa8] sm:$0xff] %v3582
        %3655 = vst [vmem:[%s432 + $0xb0] sm:$0xff] %v3583
        %3656 = vst [vmem:[%s432 + $0xb8] sm:$0xff] %v3584
        %3657 = vst [vmem:[%s432 + $0xc0] sm:$0xff] %v3593
        %3658 = vst [vmem:[%s432 + $0xc8] sm:$0xff] %v3594
        %3659 = vst [vmem:[%s432 + $0xd0] sm:$0xff] %v3595
        %3660 = vst [vmem:[%s432 + $0xd8] sm:$0xff] %v3596
        %3661 = vst [vmem:[%s432 + $0xe0] sm:$0xff] %v3597
        %3662 = vst [vmem:[%s432 + $0xe8] sm:$0xff] %v3598
        %3663 = vst [vmem:[%s432 + $0xf0] sm:$0xff] %v3599
        %3664 = vst [vmem:[%s432 + $0xf8] sm:$0xff] %v3600
        %s3665 = sand.u32 %s220, 1
        %s3666 = scalar_lea.sflag [#allocation4], %s3665
        %s3667 = sand.u32 %s220, 1
        %s3668 = smul.addr %s3667, 256
        %s3669 = scalar_lea.vmem [#allocation10], %s3668
        %s3670 = sand.u32 %s246, 1
        %s3671 = scalar_lea.sflag [#allocation12], %s3670
        %s3672 = sand.u32 %s246, 1
        %s3673 = smul.addr %s3672, 256
        %s3674 = scalar_lea.vmem [#allocation11], %s3673
        // Predicated region
        $region69: #{tpu_custom_call.1} parent=51 // pred_check
          %p3675 = pneg %p230
        $region70: #{tpu_custom_call.1} parent=51 // pred_check_branch
          %3677 = sbr.rel (%p3675) target = $region72
        $region71: #{tpu_custom_call.1} parent=51 // pred_region
          %s3678 = smul.u32 4, %s34
          %s3680 = ssub.s32 4096, 4096
          %3681 = vsyncadd %s3666, %s3680
          %s3682 = smul.addr %s3678, 8
          %s3683 = smul.addr %s3682, 128
          %s3684 = scalar_lea.hbm %s8, %s3683
          %s3685 = sshll.u32 %s3669, 4
          %s3686 = int_to_ptr.vmem [resolvable:$true] %s3685
          %3691 = dma.vmem_to_hbm [thread:$0]  %s3686, 4096, %s3684, %s3666, 256, 256, 16
        $region72: #{tpu_custom_call.1} parent=51 // pred_fallthru
          _
        // Predicated region
        $region73: #{tpu_custom_call.1} parent=51 // pred_check
          %p3692 = pneg %p256
        $region74: #{tpu_custom_call.1} parent=51 // pred_check_branch
          %3694 = sbr.rel (%p3692) target = $region76
        $region75: #{tpu_custom_call.1} parent=51 // pred_region
          %s3695 = smul.u32 4, %s34
          %s3697 = ssub.s32 4096, 4096
          %3698 = vsyncadd %s3671, %s3697
          %s3699 = smul.addr %s3695, 8
          %s3700 = smul.addr %s3699, 128
          %s3701 = scalar_lea.hbm %s9, %s3700
          %s3702 = sshll.u32 %s3674, 4
          %s3703 = int_to_ptr.vmem [resolvable:$true] %s3702
          %3708 = dma.vmem_to_hbm [thread:$0]  %s3703, 4096, %s3701, %s3671, 256, 256, 16
        $region76: #{tpu_custom_call.1} parent=51 // pred_fallthru
          _
      $region52: #{tpu_custom_call.1} parent=5 // pred_fallthru
        _
      %p3709 = scmp.le.s32.totalorder 2, %s29
      // Predicated region
      $region77: #{tpu_custom_call.1} parent=5 // pred_check
        %p3710 = pneg %p3709
      $region78: #{tpu_custom_call.1} parent=5 // pred_check_branch
        %3712 = sbr.rel (%p3710) target = $region80
      $region79: #{tpu_custom_call.1} parent=5 // pred_region
        %s3713 = ssub.s32 %s29, 2
        // Predicated region
        $region81: #{tpu_custom_call.1} parent=79 // pred_check
          %p3714 = pneg %p236
        $region82: #{tpu_custom_call.1} parent=79 // pred_check_branch
          %3716 = sbr.rel (%p3714) target = $region84
        $region83: #{tpu_custom_call.1} parent=79 // pred_region
          %s3717 = sand.u32 %s221, 1
          %s3718 = scalar_lea.sflag [#allocation4], %s3717
          %s3719 = sand.u32 %s221, 1
          %s3720 = smul.addr %s3719, 256
          %s3721 = scalar_lea.vmem [#allocation10], %s3720
          %3722 = dma.done %s3718, 4096
        $region84: #{tpu_custom_call.1} parent=79 // pred_fallthru
          _
        // Predicated region
        $region85: #{tpu_custom_call.1} parent=79 // pred_check
          %p3723 = pneg %p262
        $region86: #{tpu_custom_call.1} parent=79 // pred_check_branch
          %3725 = sbr.rel (%p3723) target = $region88
        $region87: #{tpu_custom_call.1} parent=79 // pred_region
          %s3726 = sand.u32 %s247, 1
          %s3727 = scalar_lea.sflag [#allocation12], %s3726
          %s3728 = sand.u32 %s247, 1
          %s3729 = smul.addr %s3728, 256
          %s3730 = scalar_lea.vmem [#allocation11], %s3729
          %3731 = dma.done %s3727, 4096
        $region88: #{tpu_custom_call.1} parent=79 // pred_fallthru
          _
      $region80: #{tpu_custom_call.1} parent=5 // pred_fallthru
        _
    $region6: #{tpu_custom_call.1} parent=1 // loop_footer
      %s33 = sadd.s32 1, %s29
    $region7: #{tpu_custom_call.1} parent=1 // loop_footer_branch
      %28 = sbr.rel target = $region3
    $region8: #{tpu_custom_call.1} parent=1 // loop_exit
      _
    %3732 = vsyncpa [#allocation3], 1
    %s3733 = scalar_lea.sflag [#allocation3], 1
    %3734 = vsyncpa %s3733, 1
    %3735 = vsyncpa [#allocation6], 1
    %s3736 = scalar_lea.sflag [#allocation6], 1
    %3737 = vsyncpa %s3736, 1
    %3738 = vsyncpa [#allocation9], 1
    %3739 = vsyncpa [#allocation4], 1
    %s3740 = scalar_lea.sflag [#allocation4], 1
    %3741 = vsyncpa %s3740, 1
    %3742 = vsyncpa [#allocation12], 1
    %s3743 = scalar_lea.sflag [#allocation12], 1
    %3744 = vsyncpa %s3743, 1

</llo_original>
